<compile_context>
chip_gen: v7x
topology: tpu7x:2x2x1
jax: 0.10.0
libtpu: 0.0.40
codegen_flags: <defaults>
</compile_context>

<pallas_src>
import functools

import jax
import jax.numpy as jnp
from jax.experimental import pallas as pl
from jax.experimental.pallas import tpu as pltpu

# ----------------------------------------------------------------------------
# hparams / model configuration (synthetic, small)
HPARAMS = dict(
    phoneme_in_channels=8,
    emotional_prosodic_in_channels=8,
    mgc_units=6,
    bap_units=2,
    lf0_units=1,
    uv_units=1,
)
PH_IN = HPARAMS['phoneme_in_channels']
EM_IN = HPARAMS['emotional_prosodic_in_channels']
IN_TOT = PH_IN + EM_IN

UNITS = 128                      # GRU input_size == units; highway stack emits 128
BANK_WIDTHS = [1, 2]
KMAX = max(BANK_WIDTHS)
NBANK = len(BANK_WIDTHS)
CB = NBANK * UNITS               # per-stream bank channels (256)
MAX_POOL_W = 2
PROJ_K = 3
DURATION_HIGHWAY_LAYERS = 2
GRU_LAYERS = 1
MGC_H, BAP_H, LF0_H = 8, 4, 4
GRU_H = MGC_H + BAP_H + LF0_H    # 16
MGC_OUT = HPARAMS['mgc_units'] + HPARAMS['bap_units'] + HPARAMS['lf0_units']
UV_OUT = HPARAMS['uv_units']
HEAD_W = 128                     # lane-dense fused-head output width (>= MGC_OUT+UV_OUT)
BN_EPS = 1e-5


def _vmem():
    # Whole-array blocks resident in VMEM (all shapes here are tiny).
    return pl.BlockSpec(memory_space=pltpu.MemorySpace.VMEM)


# ----------------------------------------------------------------------------
# The single fused forward kernel.  All row-dimension slabs are [B*T, ...] in
# (time, batch) row order.
def _emphasis_fwd_kernel(x_ref,                        # [B*T, IN_TOT]
                         wb_ref, bb_ref,               # bank: [2*IN_TOT, 2*CB] bf16, [1, 2*CB]
                         wpp_ref, wpc_ref, wpn_ref,    # proj taps: [2*CB, 2*UNITS] bf16 each
                         bp_ref,                       # [1, 2*UNITS] (BN folded)
                         whl_ref, bhl_ref,             # highway_linear [2*UNITS, 128] bf16
                         whwh_ref, bhwh_ref,           # highway H branch [128,128] bf16
                         whwt_ref, bhwt_ref,           # highway T branch [128,128] bf16
                         wih_ref, bih_ref,             # GRU in-proj [UNITS, 6H] bf16 (fwd|bwd)
                         whh_ref, bhh_ref,             # GRU hidden [2H, 6H] f32 block-diag
                         wmgc_ref, wuv_ref, bhead_ref, # heads [2H,HEAD_W], [UNITS,HEAD_W], [1,HEAD_W]
                         o_ref,                        # [B*T, HEAD_W]
                         *, B, T):
    f32, bf16 = jnp.float32, jnp.bfloat16
    H = GRU_H
    n = B * T

    # Rows are (time, batch): a shift by j time steps is a shift by j*B rows,
    # and the zero rows appended/prepended by the concat are exactly the
    # per-batch out-of-range time steps -> no boundary masks needed.
    def tshift_up(y, j=1):      # y[(t, b)] <- y[(t + j, b)];  zero for t >= T - j
        return jnp.concatenate(
            [y[j * B:, :], jnp.zeros((j * B, y.shape[1]), y.dtype)], axis=0)

    def tshift_down(y, j=1):    # y[(t, b)] <- y[(t - j, b)];  zero for t < j
        return jnp.concatenate(
            [jnp.zeros((j * B, y.shape[1]), y.dtype), y[:n - j * B, :]], axis=0)

    # ---- conv banks (widths 1 & 2, right zero-pad) for both streams:
    #      one batched im2col slab -> ONE matmul + ReLU.
    x2 = x_ref[...]                                               # [n, IN_TOT]
    x_cat = jnp.concatenate([x2, tshift_up(x2)], axis=1)          # [n, 2*IN_TOT]
    bank = jnp.maximum(
        jnp.dot(x_cat.astype(bf16), wb_ref[...],
                preferred_element_type=f32) + bb_ref[...], 0.0)   # [n, 2*CB]

    # ---- MaxPool1d(width, stride 1, right zero-pad); zero pad valid (bank >= 0)
    pooled = bank
    for j in range(1, MAX_POOL_W):
        pooled = jnp.maximum(pooled, tshift_up(bank, j))

    # ---- conv_projection (k=3, padding=1) + folded eval BatchNorm + ReLU.
    #      Both streams share the conv weights; one block-diagonal weight per
    #      tap maps [ph|em] (512 lanes) -> [ph_proj|em_proj] (256 lanes), and
    #      the tap time-shifts are applied to the matmul OUTPUTS.
    pooled_bf = pooled.astype(bf16)
    y_prev = jnp.dot(pooled_bf, wpp_ref[...], preferred_element_type=f32)
    y_curr = jnp.dot(pooled_bf, wpc_ref[...], preferred_element_type=f32)
    y_next = jnp.dot(pooled_bf, wpn_ref[...], preferred_element_type=f32)
    proj2 = jnp.maximum(
        tshift_down(y_prev) + y_curr + tshift_up(y_next) + bp_ref[...], 0.0)

    # ---- highway_linear + duration_highway_layers x (shared) HighwayNet
    hid = (jnp.dot(proj2.astype(bf16), whl_ref[...],
                   preferred_element_type=f32) + bhl_ref[...])    # [n, 128]
    whwh, bhwh = whwh_ref[...], bhwh_ref[...]
    whwt, bhwt = whwt_ref[...], bhwt_ref[...]
    for _ in range(DURATION_HIGHWAY_LAYERS):
        hid_bf = hid.astype(bf16)
        hcand = jnp.maximum(
            jnp.dot(hid_bf, whwh, preferred_element_type=f32) + bhwh, 0.0)
        tgate = jax.nn.sigmoid(
            jnp.dot(hid_bf, whwt, preferred_element_type=f32) + bhwt)
        hid = hcand * tgate + hid * (1.0 - tgate)                 # [n,128] == rnn_input

    # ---- bidirectional GRU (gate order r, z, n); input projection for BOTH
    #      directions hoisted out of the recurrence; rows are time-major so the
    #      per-step reads below are contiguous static slices.
    gi = (jnp.dot(hid.astype(bf16), wih_ref[...],
                  preferred_element_type=f32) + bih_ref[...])     # [n, 6H]

    whh2, bhh2 = whh_ref[...], bhh_ref[...]                       # [2H, 6H], [1, 6H]

    def gru_gates(gx, gh, h):     # one direction; gx/gh/h are [B, 3H]/[B,3H]/[B,H]
        r = jax.nn.sigmoid(gx[:, 0:H] + gh[:, 0:H])
        z = jax.nn.sigmoid(gx[:, H:2 * H] + gh[:, H:2 * H])
        m = jnp.tanh(gx[:, 2 * H:3 * H] + r * gh[:, 2 * H:3 * H])
        return (1.0 - z) * m + z * h

    hf = jnp.zeros((B, H), f32)
    hb = jnp.zeros((B, H), f32)
    hf_steps = [None] * T
    hb_steps = [None] * T
    for i in range(T):            # fused fwd+bwd recurrence: ONE matmul per step
        tb = T - 1 - i
        h2 = jnp.concatenate([hf, hb], axis=1)                    # [B, 2H]
        gh = jnp.dot(h2, whh2, preferred_element_type=f32) + bhh2 # [B, 6H]
        hf = gru_gates(gi[i * B:(i + 1) * B, 0:3 * H], gh[:, 0:3 * H], hf)
        hb = gru_gates(gi[tb * B:(tb + 1) * B, 3 * H:6 * H], gh[:, 3 * H:6 * H], hb)
        hf_steps[i] = hf
        hb_steps[tb] = hb

    # per-step states never touch a (lane-sparse) scratch; assemble [n, 2H]
    # with plain 2-D concats (rows already in (t, b) order).
    gru_cat = jnp.concatenate(
        [jnp.concatenate([hf_steps[t], hb_steps[t]], axis=1) for t in range(T)],
        axis=0)                                                   # [n, 2H]

    # ---- fused mgc + uv heads: two matmuls, one unmasked lane-dense store
    o_ref[...] = (jnp.dot(gru_cat, wmgc_ref[...], preferred_element_type=f32)
                  + jnp.dot(hid, wuv_ref[...], preferred_element_type=f32)
                  + bhead_ref[...])


# ----------------------------------------------------------------------------
# Parameter initialization (deterministic, PyTorch-style uniform(-1/sqrt(fan), ..))
def init_params(key):
    ks = iter(jax.random.split(key, 64))

    def uni(shape, fan_in):
        bnd = 1.0 / (float(fan_in) ** 0.5)
        return jax.random.uniform(next(ks), shape, jnp.float32, -bnd, bnd)

    p = {}

    def bank(cin):
        layers = []
        for k in BANK_WIDTHS:
            layers.append((uni((k, cin, UNITS), cin * k),   # conv weight [K, Cin, Cout]
                           uni((UNITS,), cin * k)))         # conv bias
        return layers

    p['ph_bank'] = bank(PH_IN)
    p['em_bank'] = bank(EM_IN)

    # conv_projection (k=3, padding=1) + BatchNorm (eval, default running stats)
    p['proj'] = (uni((PROJ_K, CB, UNITS), CB * PROJ_K), uni((UNITS,), CB * PROJ_K))
    p['bn'] = (jnp.ones((UNITS,), jnp.float32),    # gamma
               jnp.zeros((UNITS,), jnp.float32),   # beta
               jnp.zeros((UNITS,), jnp.float32),   # running mean
               jnp.ones((UNITS,), jnp.float32))    # running var

    p['highway_linear'] = (uni((2 * UNITS, 128), 2 * UNITS), uni((1, 128), 2 * UNITS))
    # a single HighwayNet instance is re-applied duration_highway_layers times
    p['highway_h'] = (uni((128, 128), 128), uni((1, 128), 128))
    p['highway_t'] = (uni((128, 128), 128), uni((1, 128), 128))

    def gru_dir():
        return (uni((UNITS, 3 * GRU_H), GRU_H),    # W_ih^T [In, 3H]
                uni((GRU_H, 3 * GRU_H), GRU_H),    # W_hh^T [H, 3H]
                uni((1, 3 * GRU_H), GRU_H),        # b_ih
                uni((1, 3 * GRU_H), GRU_H))        # b_hh
    p['gru_f'] = gru_dir()
    p['gru_b'] = gru_dir()

    p['mgc_linear'] = (uni((2 * GRU_H, MGC_OUT), 2 * GRU_H), uni((MGC_OUT,), 2 * GRU_H))
    p['uv_linear'] = (uni((UNITS, UV_OUT), UNITS), uni((UV_OUT,), UNITS))
    return p


# ----------------------------------------------------------------------------
# Pack / fold parameters into the fused-kernel layouts (done once, outside jit).
def pack_params(p):
    f32, bf16 = jnp.float32, jnp.bfloat16

    # --- conv banks: block-diagonal im2col weight over [x_t | x_{t+1}] rows,
    #     output columns [ph_k1 | ph_k2 | em_k1 | em_k2]
    w_bank = jnp.zeros((KMAX * IN_TOT, 2 * CB), f32)
    b_parts = []
    for s, (bank, c0) in enumerate(((p['ph_bank'], 0), (p['em_bank'], PH_IN))):
        for i, (w, b) in enumerate(bank):
            cin = w.shape[1]
            col = s * CB + i * UNITS
            for tap in range(w.shape[0]):
                r0 = tap * IN_TOT + c0
                w_bank = w_bank.at[r0:r0 + cin, col:col + UNITS].set(w[tap])
            b_parts.append(b.reshape(UNITS))
    b_bank = jnp.concatenate(b_parts).reshape(1, 2 * CB)

    # --- projection conv: per-tap block-diagonal (two streams, shared weights)
    #     with eval-mode BN folded in.  Tap 0 = prev, 1 = curr, 2 = next.
    wp, bp = p['proj']
    gamma, beta, mean, var = p['bn']
    scale = gamma / jnp.sqrt(var + BN_EPS)                        # [UNITS]
    folded_b = (bp - mean) * scale + beta

    def proj_tap(t):
        ws = wp[t] * scale[None, :]                               # [CB, UNITS]
        w = jnp.zeros((2 * CB, 2 * UNITS), f32)
        w = w.at[0:CB, 0:UNITS].set(ws)                           # ph block
        w = w.at[CB:2 * CB, UNITS:2 * UNITS].set(ws)              # em block
        return w.astype(bf16)

    w_proj_p, w_proj_c, w_proj_n = proj_tap(0), proj_tap(1), proj_tap(2)
    b_proj = jnp.concatenate([folded_b, folded_b]).reshape(1, 2 * UNITS)

    w_hl, b_hl = p['highway_linear']
    w_hwh, b_hwh = p['highway_h']
    w_hwt, b_hwt = p['highway_t']

    # --- GRU: pack both directions' input projections into one matmul and the
    #     hidden projections into one block-diagonal [2H, 6H] weight.
    wih_f, whh_f, bih_f, bhh_f = p['gru_f']
    wih_b, whh_b, bih_b, bhh_b = p['gru_b']
    w_ih = jnp.concatenate([wih_f, wih_b], axis=1).astype(bf16)   # [UNITS, 6H]
    b_ih = jnp.concatenate([bih_f, bih_b], axis=1)                # [1, 6H]
    w_hh = jnp.zeros((2 * GRU_H, 6 * GRU_H), f32)
    w_hh = w_hh.at[0:GRU_H, 0:3 * GRU_H].set(whh_f)
    w_hh = w_hh.at[GRU_H:2 * GRU_H, 3 * GRU_H:6 * GRU_H].set(whh_b)
    b_hh = jnp.concatenate([bhh_f, bhh_b], axis=1)                # [1, 6H]

    # --- heads: out = gru_cat @ w_mgc_pad + hid @ w_uv_pad + b  -> [mgc|uv|0...]
    w_mgc, b_mgc = p['mgc_linear']
    w_uv, b_uv = p['uv_linear']
    w_mgc_pad = jnp.zeros((2 * GRU_H, HEAD_W), f32).at[:, 0:MGC_OUT].set(w_mgc)
    w_uv_pad = jnp.zeros((UNITS, HEAD_W), f32).at[:, MGC_OUT:MGC_OUT + UV_OUT].set(w_uv)
    b_head = jnp.zeros((1, HEAD_W), f32)
    b_head = b_head.at[0, 0:MGC_OUT].set(b_mgc.reshape(MGC_OUT))
    b_head = b_head.at[0, MGC_OUT:MGC_OUT + UV_OUT].set(b_uv.reshape(UV_OUT))

    return dict(w_bank=w_bank.astype(bf16), b_bank=b_bank,
                w_proj_p=w_proj_p, w_proj_c=w_proj_c, w_proj_n=w_proj_n,
                b_proj=b_proj,
                w_hl=w_hl.astype(bf16), b_hl=b_hl,
                w_hwh=w_hwh.astype(bf16), b_hwh=b_hwh,
                w_hwt=w_hwt.astype(bf16), b_hwt=b_hwt,
                w_ih=w_ih, b_ih=b_ih,
                w_hh=w_hh, b_hh=b_hh,
                w_mgc=w_mgc_pad, w_uv=w_uv_pad, b_head=b_head)


# ----------------------------------------------------------------------------
# Forward pass: one fused pallas_call; wrapper only reorders rows to (t, b).
@jax.jit
def forward(x, pk):
    B, T, _ = x.shape
    n = B * T
    # (time, batch) row order: contiguous per-step GRU reads and mask-free
    # time shifts inside the kernel (also removes the old wrapper jnp.pad).
    x_tb = jnp.transpose(x, (1, 0, 2)).reshape(n, IN_TOT)

    out = pl.pallas_call(
        functools.partial(_emphasis_fwd_kernel, B=B, T=T),
        out_shape=jax.ShapeDtypeStruct((n, HEAD_W), jnp.float32),
        in_specs=[_vmem()] * 20,
        out_specs=_vmem(),
    )(x_tb,
      pk['w_bank'], pk['b_bank'],
      pk['w_proj_p'], pk['w_proj_c'], pk['w_proj_n'], pk['b_proj'],
      pk['w_hl'], pk['b_hl'],
      pk['w_hwh'], pk['b_hwh'], pk['w_hwt'], pk['b_hwt'],
      pk['w_ih'], pk['b_ih'],
      pk['w_hh'], pk['b_hh'],
      pk['w_mgc'], pk['w_uv'], pk['b_head'])

    o3 = out.reshape(T, B, HEAD_W).transpose(1, 0, 2)             # [B, T, HEAD_W]
    mgc = o3[:, :, :MGC_OUT]
    uv = o3[:, :, MGC_OUT:MGC_OUT + UV_OUT]
    return mgc, uv


# ----------------------------------------------------------------------------
if __name__ == "__main__":
    key = jax.random.PRNGKey(0)
    k_in, k_par = jax.random.split(key)

    B, T = 2, 8
    x = jax.random.normal(k_in, (B, T, IN_TOT), jnp.float32)
    params = init_params(k_par)
    packed = pack_params(params)

    mgc_out, uv_out = forward(x, packed)
    jax.block_until_ready((mgc_out, uv_out))

    assert mgc_out.shape == (B, T, MGC_OUT), mgc_out.shape
    assert uv_out.shape == (B, T, UV_OUT), uv_out.shape
    assert bool(jnp.all(jnp.isfinite(mgc_out))) and bool(jnp.all(jnp.isfinite(uv_out)))
    print("KERNEL_OK")
</pallas_src>

<mosaic_0001>
module attributes {stable_mosaic.version = 11 : i64} {
  func.func @_emphasis_fwd_kernel(%arg0: memref<16x16xf32, #tpu.memory_space<vmem>>, %arg1: memref<32x512xbf16, #tpu.memory_space<vmem>>, %arg2: memref<1x512xf32, #tpu.memory_space<vmem>>, %arg3: memref<512x256xbf16, #tpu.memory_space<vmem>>, %arg4: memref<512x256xbf16, #tpu.memory_space<vmem>>, %arg5: memref<512x256xbf16, #tpu.memory_space<vmem>>, %arg6: memref<1x256xf32, #tpu.memory_space<vmem>>, %arg7: memref<256x128xbf16, #tpu.memory_space<vmem>>, %arg8: memref<1x128xf32, #tpu.memory_space<vmem>>, %arg9: memref<128x128xbf16, #tpu.memory_space<vmem>>, %arg10: memref<1x128xf32, #tpu.memory_space<vmem>>, %arg11: memref<128x128xbf16, #tpu.memory_space<vmem>>, %arg12: memref<1x128xf32, #tpu.memory_space<vmem>>, %arg13: memref<128x96xbf16, #tpu.memory_space<vmem>>, %arg14: memref<1x96xf32, #tpu.memory_space<vmem>>, %arg15: memref<32x96xf32, #tpu.memory_space<vmem>>, %arg16: memref<1x96xf32, #tpu.memory_space<vmem>>, %arg17: memref<32x128xf32, #tpu.memory_space<vmem>>, %arg18: memref<128x128xf32, #tpu.memory_space<vmem>>, %arg19: memref<1x128xf32, #tpu.memory_space<vmem>>, %arg20: memref<16x128xf32, #tpu.memory_space<vmem>>) attributes {dimension_semantics = [], scalar_prefetch = 0 : i64, scratch_operands = 0 : i64, tpu.core_type = #tpu.core_type<tc>} {
    %c0 = arith.constant 0 : index
    %c0_0 = arith.constant 0 : index
    %0 = vector.load %arg0[%c0, %c0_0] : memref<16x16xf32, #tpu.memory_space<vmem>>, vector<16x16xf32>
    %1 = vector.extract_strided_slice %0 {offsets = [2, 0], sizes = [14, 16], strides = [1, 1]} : vector<16x16xf32> to vector<14x16xf32>
    %cst = arith.constant 0.000000e+00 : f32
    %2 = vector.broadcast %cst : f32 to vector<2x16xf32>
    %3 = tpu.concatenate %1, %2 in 0 : vector<14x16xf32>, vector<2x16xf32> -> vector<16x16xf32>
    %4 = tpu.concatenate %0, %3 in 1 : vector<16x16xf32>, vector<16x16xf32> -> vector<16x32xf32>
    %5 = arith.truncf %4 : vector<16x32xf32> to vector<16x32xbf16>
    %c0_1 = arith.constant 0 : index
    %c0_2 = arith.constant 0 : index
    %6 = vector.load %arg1[%c0_1, %c0_2] : memref<32x512xbf16, #tpu.memory_space<vmem>>, vector<32x512xbf16>
    %cst_3 = arith.constant dense<0.000000e+00> : vector<16x512xf32>
    %7 = tpu.matmul %5, %6, %cst_3 {dimension_numbers = #tpu.dot_dimension_numbers<[1], [0], [0], [1], [0, 0, 1, 1], [], []>} : vector<16x32xbf16>, vector<32x512xbf16>, vector<16x512xf32> -> vector<16x512xf32>
    %c0_4 = arith.constant 0 : index
    %c0_5 = arith.constant 0 : index
    %8 = vector.load %arg2[%c0_4, %c0_5] : memref<1x512xf32, #tpu.memory_space<vmem>>, vector<1x512xf32>
    %9 = vector.broadcast %8 : vector<1x512xf32> to vector<16x512xf32>
    %10 = arith.addf %7, %9 : vector<16x512xf32>
    %cst_6 = arith.constant 0.000000e+00 : f32
    %11 = vector.broadcast %cst_6 : f32 to vector<16x512xf32>
    %12 = arith.maximumf %10, %11 : vector<16x512xf32>
    %13 = vector.extract_strided_slice %12 {offsets = [2, 0], sizes = [14, 512], strides = [1, 1]} : vector<16x512xf32> to vector<14x512xf32>
    %cst_7 = arith.constant 0.000000e+00 : f32
    %14 = vector.broadcast %cst_7 : f32 to vector<2x512xf32>
    %15 = tpu.concatenate %13, %14 in 0 : vector<14x512xf32>, vector<2x512xf32> -> vector<16x512xf32>
    %16 = arith.maximumf %12, %15 : vector<16x512xf32>
    %17 = arith.truncf %16 : vector<16x512xf32> to vector<16x512xbf16>
    %c0_8 = arith.constant 0 : index
    %c0_9 = arith.constant 0 : index
    %18 = vector.load %arg3[%c0_8, %c0_9] : memref<512x256xbf16, #tpu.memory_space<vmem>>, vector<512x256xbf16>
    %cst_10 = arith.constant dense<0.000000e+00> : vector<16x256xf32>
    %19 = tpu.matmul %17, %18, %cst_10 {dimension_numbers = #tpu.dot_dimension_numbers<[1], [0], [0], [1], [0, 0, 1, 1], [], []>} : vector<16x512xbf16>, vector<512x256xbf16>, vector<16x256xf32> -> vector<16x256xf32>
    %c0_11 = arith.constant 0 : index
    %c0_12 = arith.constant 0 : index
    %20 = vector.load %arg4[%c0_11, %c0_12] : memref<512x256xbf16, #tpu.memory_space<vmem>>, vector<512x256xbf16>
    %cst_13 = arith.constant dense<0.000000e+00> : vector<16x256xf32>
    %21 = tpu.matmul %17, %20, %cst_13 {dimension_numbers = #tpu.dot_dimension_numbers<[1], [0], [0], [1], [0, 0, 1, 1], [], []>} : vector<16x512xbf16>, vector<512x256xbf16>, vector<16x256xf32> -> vector<16x256xf32>
    %c0_14 = arith.constant 0 : index
    %c0_15 = arith.constant 0 : index
    %22 = vector.load %arg5[%c0_14, %c0_15] : memref<512x256xbf16, #tpu.memory_space<vmem>>, vector<512x256xbf16>
    %cst_16 = arith.constant dense<0.000000e+00> : vector<16x256xf32>
    %23 = tpu.matmul %17, %22, %cst_16 {dimension_numbers = #tpu.dot_dimension_numbers<[1], [0], [0], [1], [0, 0, 1, 1], [], []>} : vector<16x512xbf16>, vector<512x256xbf16>, vector<16x256xf32> -> vector<16x256xf32>
    %cst_17 = arith.constant 0.000000e+00 : f32
    %24 = vector.broadcast %cst_17 : f32 to vector<2x256xf32>
    %25 = vector.extract_strided_slice %19 {offsets = [0, 0], sizes = [14, 256], strides = [1, 1]} : vector<16x256xf32> to vector<14x256xf32>
    %26 = tpu.concatenate %24, %25 in 0 : vector<2x256xf32>, vector<14x256xf32> -> vector<16x256xf32>
    %27 = arith.addf %26, %21 : vector<16x256xf32>
    %28 = vector.extract_strided_slice %23 {offsets = [2, 0], sizes = [14, 256], strides = [1, 1]} : vector<16x256xf32> to vector<14x256xf32>
    %cst_18 = arith.constant 0.000000e+00 : f32
    %29 = vector.broadcast %cst_18 : f32 to vector<2x256xf32>
    %30 = tpu.concatenate %28, %29 in 0 : vector<14x256xf32>, vector<2x256xf32> -> vector<16x256xf32>
    %31 = arith.addf %27, %30 : vector<16x256xf32>
    %c0_19 = arith.constant 0 : index
    %c0_20 = arith.constant 0 : index
    %32 = vector.load %arg6[%c0_19, %c0_20] : memref<1x256xf32, #tpu.memory_space<vmem>>, vector<1x256xf32>
    %33 = vector.broadcast %32 : vector<1x256xf32> to vector<16x256xf32>
    %34 = arith.addf %31, %33 : vector<16x256xf32>
    %cst_21 = arith.constant 0.000000e+00 : f32
    %35 = vector.broadcast %cst_21 : f32 to vector<16x256xf32>
    %36 = arith.maximumf %34, %35 : vector<16x256xf32>
    %37 = arith.truncf %36 : vector<16x256xf32> to vector<16x256xbf16>
    %c0_22 = arith.constant 0 : index
    %c0_23 = arith.constant 0 : index
    %38 = vector.load %arg7[%c0_22, %c0_23] : memref<256x128xbf16, #tpu.memory_space<vmem>>, vector<256x128xbf16>
    %cst_24 = arith.constant dense<0.000000e+00> : vector<16x128xf32>
    %39 = tpu.matmul %37, %38, %cst_24 {dimension_numbers = #tpu.dot_dimension_numbers<[1], [0], [0], [1], [0, 0, 1, 1], [], []>} : vector<16x256xbf16>, vector<256x128xbf16>, vector<16x128xf32> -> vector<16x128xf32>
    %c0_25 = arith.constant 0 : index
    %c0_26 = arith.constant 0 : index
    %40 = vector.load %arg8[%c0_25, %c0_26] : memref<1x128xf32, #tpu.memory_space<vmem>>, vector<1x128xf32>
    %41 = vector.broadcast %40 : vector<1x128xf32> to vector<16x128xf32>
    %42 = arith.addf %39, %41 : vector<16x128xf32>
    %c0_27 = arith.constant 0 : index
    %c0_28 = arith.constant 0 : index
    %43 = vector.load %arg9[%c0_27, %c0_28] : memref<128x128xbf16, #tpu.memory_space<vmem>>, vector<128x128xbf16>
    %c0_29 = arith.constant 0 : index
    %c0_30 = arith.constant 0 : index
    %44 = vector.load %arg10[%c0_29, %c0_30] : memref<1x128xf32, #tpu.memory_space<vmem>>, vector<1x128xf32>
    %c0_31 = arith.constant 0 : index
    %c0_32 = arith.constant 0 : index
    %45 = vector.load %arg11[%c0_31, %c0_32] : memref<128x128xbf16, #tpu.memory_space<vmem>>, vector<128x128xbf16>
    %c0_33 = arith.constant 0 : index
    %c0_34 = arith.constant 0 : index
    %46 = vector.load %arg12[%c0_33, %c0_34] : memref<1x128xf32, #tpu.memory_space<vmem>>, vector<1x128xf32>
    %47 = arith.truncf %42 : vector<16x128xf32> to vector<16x128xbf16>
    %cst_35 = arith.constant dense<0.000000e+00> : vector<16x128xf32>
    %48 = tpu.matmul %47, %43, %cst_35 {dimension_numbers = #tpu.dot_dimension_numbers<[1], [0], [0], [1], [0, 0, 1, 1], [], []>} : vector<16x128xbf16>, vector<128x128xbf16>, vector<16x128xf32> -> vector<16x128xf32>
    %49 = vector.broadcast %44 : vector<1x128xf32> to vector<16x128xf32>
    %50 = arith.addf %48, %49 : vector<16x128xf32>
    %cst_36 = arith.constant 0.000000e+00 : f32
    %51 = vector.broadcast %cst_36 : f32 to vector<16x128xf32>
    %52 = arith.maximumf %50, %51 : vector<16x128xf32>
    %cst_37 = arith.constant dense<0.000000e+00> : vector<16x128xf32>
    %53 = tpu.matmul %47, %45, %cst_37 {dimension_numbers = #tpu.dot_dimension_numbers<[1], [0], [0], [1], [0, 0, 1, 1], [], []>} : vector<16x128xbf16>, vector<128x128xbf16>, vector<16x128xf32> -> vector<16x128xf32>
    %54 = vector.broadcast %46 : vector<1x128xf32> to vector<16x128xf32>
    %55 = arith.addf %53, %54 : vector<16x128xf32>
    %56 = arith.negf %55 : vector<16x128xf32>
    %57 = math.exp %56 : vector<16x128xf32>
    %cst_38 = arith.constant 1.000000e+00 : f32
    %58 = vector.broadcast %cst_38 : f32 to vector<16x128xf32>
    %59 = arith.addf %58, %57 : vector<16x128xf32>
    %60 = arith.divf %58, %59 : vector<16x128xf32>
    %61 = arith.mulf %52, %60 : vector<16x128xf32>
    %cst_39 = arith.constant 1.000000e+00 : f32
    %62 = vector.broadcast %cst_39 : f32 to vector<16x128xf32>
    %63 = arith.subf %62, %60 : vector<16x128xf32>
    %64 = arith.mulf %42, %63 : vector<16x128xf32>
    %65 = arith.addf %61, %64 : vector<16x128xf32>
    %66 = arith.truncf %65 : vector<16x128xf32> to vector<16x128xbf16>
    %cst_40 = arith.constant dense<0.000000e+00> : vector<16x128xf32>
    %67 = tpu.matmul %66, %43, %cst_40 {dimension_numbers = #tpu.dot_dimension_numbers<[1], [0], [0], [1], [0, 0, 1, 1], [], []>} : vector<16x128xbf16>, vector<128x128xbf16>, vector<16x128xf32> -> vector<16x128xf32>
    %68 = vector.broadcast %44 : vector<1x128xf32> to vector<16x128xf32>
    %69 = arith.addf %67, %68 : vector<16x128xf32>
    %cst_41 = arith.constant 0.000000e+00 : f32
    %70 = vector.broadcast %cst_41 : f32 to vector<16x128xf32>
    %71 = arith.maximumf %69, %70 : vector<16x128xf32>
    %cst_42 = arith.constant dense<0.000000e+00> : vector<16x128xf32>
    %72 = tpu.matmul %66, %45, %cst_42 {dimension_numbers = #tpu.dot_dimension_numbers<[1], [0], [0], [1], [0, 0, 1, 1], [], []>} : vector<16x128xbf16>, vector<128x128xbf16>, vector<16x128xf32> -> vector<16x128xf32>
    %73 = vector.broadcast %46 : vector<1x128xf32> to vector<16x128xf32>
    %74 = arith.addf %72, %73 : vector<16x128xf32>
    %75 = arith.negf %74 : vector<16x128xf32>
    %76 = math.exp %75 : vector<16x128xf32>
    %cst_43 = arith.constant 1.000000e+00 : f32
    %77 = vector.broadcast %cst_43 : f32 to vector<16x128xf32>
    %78 = arith.addf %77, %76 : vector<16x128xf32>
    %79 = arith.divf %77, %78 : vector<16x128xf32>
    %80 = arith.mulf %71, %79 : vector<16x128xf32>
    %cst_44 = arith.constant 1.000000e+00 : f32
    %81 = vector.broadcast %cst_44 : f32 to vector<16x128xf32>
    %82 = arith.subf %81, %79 : vector<16x128xf32>
    %83 = arith.mulf %65, %82 : vector<16x128xf32>
    %84 = arith.addf %80, %83 : vector<16x128xf32>
    %85 = arith.truncf %84 : vector<16x128xf32> to vector<16x128xbf16>
    %c0_45 = arith.constant 0 : index
    %c0_46 = arith.constant 0 : index
    %86 = vector.load %arg13[%c0_45, %c0_46] : memref<128x96xbf16, #tpu.memory_space<vmem>>, vector<128x96xbf16>
    %cst_47 = arith.constant dense<0.000000e+00> : vector<16x96xf32>
    %87 = tpu.matmul %85, %86, %cst_47 {dimension_numbers = #tpu.dot_dimension_numbers<[1], [0], [0], [1], [0, 0, 1, 1], [], []>} : vector<16x128xbf16>, vector<128x96xbf16>, vector<16x96xf32> -> vector<16x96xf32>
    %c0_48 = arith.constant 0 : index
    %c0_49 = arith.constant 0 : index
    %88 = vector.load %arg14[%c0_48, %c0_49] : memref<1x96xf32, #tpu.memory_space<vmem>>, vector<1x96xf32>
    %89 = vector.broadcast %88 : vector<1x96xf32> to vector<16x96xf32>
    %90 = arith.addf %87, %89 : vector<16x96xf32>
    %c0_50 = arith.constant 0 : index
    %c0_51 = arith.constant 0 : index
    %91 = vector.load %arg15[%c0_50, %c0_51] : memref<32x96xf32, #tpu.memory_space<vmem>>, vector<32x96xf32>
    %c0_52 = arith.constant 0 : index
    %c0_53 = arith.constant 0 : index
    %92 = vector.load %arg16[%c0_52, %c0_53] : memref<1x96xf32, #tpu.memory_space<vmem>>, vector<1x96xf32>
    %cst_54 = arith.constant 0.000000e+00 : f32
    %93 = vector.broadcast %cst_54 : f32 to vector<2x16xf32>
    %cst_55 = arith.constant 0.000000e+00 : f32
    %94 = vector.broadcast %cst_55 : f32 to vector<2x16xf32>
    %95 = tpu.concatenate %93, %94 in 1 : vector<2x16xf32>, vector<2x16xf32> -> vector<2x32xf32>
    %cst_56 = arith.constant dense<0.000000e+00> : vector<2x96xf32>
    %96 = tpu.matmul %95, %91, %cst_56 {dimension_numbers = #tpu.dot_dimension_numbers<[1], [0], [0], [1], [0, 0, 1, 1], [], []>} : vector<2x32xf32>, vector<32x96xf32>, vector<2x96xf32> -> vector<2x96xf32>
    %97 = vector.broadcast %92 : vector<1x96xf32> to vector<2x96xf32>
    %98 = arith.addf %96, %97 : vector<2x96xf32>
    %99 = vector.extract_strided_slice %90 {offsets = [0, 0], sizes = [2, 48], strides = [1, 1]} : vector<16x96xf32> to vector<2x48xf32>
    %100 = vector.extract_strided_slice %98 {offsets = [0, 0], sizes = [2, 48], strides = [1, 1]} : vector<2x96xf32> to vector<2x48xf32>
    %101 = vector.extract_strided_slice %99 {offsets = [0, 0], sizes = [2, 16], strides = [1, 1]} : vector<2x48xf32> to vector<2x16xf32>
    %102 = vector.extract_strided_slice %100 {offsets = [0, 0], sizes = [2, 16], strides = [1, 1]} : vector<2x48xf32> to vector<2x16xf32>
    %103 = arith.addf %101, %102 : vector<2x16xf32>
    %104 = arith.negf %103 : vector<2x16xf32>
    %105 = math.exp %104 : vector<2x16xf32>
    %cst_57 = arith.constant 1.000000e+00 : f32
    %106 = vector.broadcast %cst_57 : f32 to vector<2x16xf32>
    %107 = arith.addf %106, %105 : vector<2x16xf32>
    %108 = arith.divf %106, %107 : vector<2x16xf32>
    %109 = vector.extract_strided_slice %99 {offsets = [0, 16], sizes = [2, 16], strides = [1, 1]} : vector<2x48xf32> to vector<2x16xf32>
    %110 = vector.extract_strided_slice %100 {offsets = [0, 16], sizes = [2, 16], strides = [1, 1]} : vector<2x48xf32> to vector<2x16xf32>
    %111 = arith.addf %109, %110 : vector<2x16xf32>
    %112 = arith.negf %111 : vector<2x16xf32>
    %113 = math.exp %112 : vector<2x16xf32>
    %cst_58 = arith.constant 1.000000e+00 : f32
    %114 = vector.broadcast %cst_58 : f32 to vector<2x16xf32>
    %115 = arith.addf %114, %113 : vector<2x16xf32>
    %116 = arith.divf %114, %115 : vector<2x16xf32>
    %117 = vector.extract_strided_slice %99 {offsets = [0, 32], sizes = [2, 16], strides = [1, 1]} : vector<2x48xf32> to vector<2x16xf32>
    %118 = vector.extract_strided_slice %100 {offsets = [0, 32], sizes = [2, 16], strides = [1, 1]} : vector<2x48xf32> to vector<2x16xf32>
    %119 = arith.mulf %108, %118 : vector<2x16xf32>
    %120 = arith.addf %117, %119 : vector<2x16xf32>
    %121 = math.tanh %120 : vector<2x16xf32>
    %cst_59 = arith.constant 1.000000e+00 : f32
    %122 = vector.broadcast %cst_59 : f32 to vector<2x16xf32>
    %123 = arith.subf %122, %116 : vector<2x16xf32>
    %124 = arith.mulf %123, %121 : vector<2x16xf32>
    %125 = arith.mulf %116, %93 : vector<2x16xf32>
    %126 = arith.addf %124, %125 : vector<2x16xf32>
    %127 = vector.extract_strided_slice %90 {offsets = [14, 48], sizes = [2, 48], strides = [1, 1]} : vector<16x96xf32> to vector<2x48xf32>
    %128 = vector.extract_strided_slice %98 {offsets = [0, 48], sizes = [2, 48], strides = [1, 1]} : vector<2x96xf32> to vector<2x48xf32>
    %129 = vector.extract_strided_slice %127 {offsets = [0, 0], sizes = [2, 16], strides = [1, 1]} : vector<2x48xf32> to vector<2x16xf32>
    %130 = vector.extract_strided_slice %128 {offsets = [0, 0], sizes = [2, 16], strides = [1, 1]} : vector<2x48xf32> to vector<2x16xf32>
    %131 = arith.addf %129, %130 : vector<2x16xf32>
    %132 = arith.negf %131 : vector<2x16xf32>
    %133 = math.exp %132 : vector<2x16xf32>
    %cst_60 = arith.constant 1.000000e+00 : f32
    %134 = vector.broadcast %cst_60 : f32 to vector<2x16xf32>
    %135 = arith.addf %134, %133 : vector<2x16xf32>
    %136 = arith.divf %134, %135 : vector<2x16xf32>
    %137 = vector.extract_strided_slice %127 {offsets = [0, 16], sizes = [2, 16], strides = [1, 1]} : vector<2x48xf32> to vector<2x16xf32>
    %138 = vector.extract_strided_slice %128 {offsets = [0, 16], sizes = [2, 16], strides = [1, 1]} : vector<2x48xf32> to vector<2x16xf32>
    %139 = arith.addf %137, %138 : vector<2x16xf32>
    %140 = arith.negf %139 : vector<2x16xf32>
    %141 = math.exp %140 : vector<2x16xf32>
    %cst_61 = arith.constant 1.000000e+00 : f32
    %142 = vector.broadcast %cst_61 : f32 to vector<2x16xf32>
    %143 = arith.addf %142, %141 : vector<2x16xf32>
    %144 = arith.divf %142, %143 : vector<2x16xf32>
    %145 = vector.extract_strided_slice %127 {offsets = [0, 32], sizes = [2, 16], strides = [1, 1]} : vector<2x48xf32> to vector<2x16xf32>
    %146 = vector.extract_strided_slice %128 {offsets = [0, 32], sizes = [2, 16], strides = [1, 1]} : vector<2x48xf32> to vector<2x16xf32>
    %147 = arith.mulf %136, %146 : vector<2x16xf32>
    %148 = arith.addf %145, %147 : vector<2x16xf32>
    %149 = math.tanh %148 : vector<2x16xf32>
    %cst_62 = arith.constant 1.000000e+00 : f32
    %150 = vector.broadcast %cst_62 : f32 to vector<2x16xf32>
    %151 = arith.subf %150, %144 : vector<2x16xf32>
    %152 = arith.mulf %151, %149 : vector<2x16xf32>
    %153 = arith.mulf %144, %94 : vector<2x16xf32>
    %154 = arith.addf %152, %153 : vector<2x16xf32>
    %155 = tpu.concatenate %126, %154 in 1 : vector<2x16xf32>, vector<2x16xf32> -> vector<2x32xf32>
    %cst_63 = arith.constant dense<0.000000e+00> : vector<2x96xf32>
    %156 = tpu.matmul %155, %91, %cst_63 {dimension_numbers = #tpu.dot_dimension_numbers<[1], [0], [0], [1], [0, 0, 1, 1], [], []>} : vector<2x32xf32>, vector<32x96xf32>, vector<2x96xf32> -> vector<2x96xf32>
    %157 = vector.broadcast %92 : vector<1x96xf32> to vector<2x96xf32>
    %158 = arith.addf %156, %157 : vector<2x96xf32>
    %159 = vector.extract_strided_slice %90 {offsets = [2, 0], sizes = [2, 48], strides = [1, 1]} : vector<16x96xf32> to vector<2x48xf32>
    %160 = vector.extract_strided_slice %158 {offsets = [0, 0], sizes = [2, 48], strides = [1, 1]} : vector<2x96xf32> to vector<2x48xf32>
    %161 = vector.extract_strided_slice %159 {offsets = [0, 0], sizes = [2, 16], strides = [1, 1]} : vector<2x48xf32> to vector<2x16xf32>
    %162 = vector.extract_strided_slice %160 {offsets = [0, 0], sizes = [2, 16], strides = [1, 1]} : vector<2x48xf32> to vector<2x16xf32>
    %163 = arith.addf %161, %162 : vector<2x16xf32>
    %164 = arith.negf %163 : vector<2x16xf32>
    %165 = math.exp %164 : vector<2x16xf32>
    %cst_64 = arith.constant 1.000000e+00 : f32
    %166 = vector.broadcast %cst_64 : f32 to vector<2x16xf32>
    %167 = arith.addf %166, %165 : vector<2x16xf32>
    %168 = arith.divf %166, %167 : vector<2x16xf32>
    %169 = vector.extract_strided_slice %159 {offsets = [0, 16], sizes = [2, 16], strides = [1, 1]} : vector<2x48xf32> to vector<2x16xf32>
    %170 = vector.extract_strided_slice %160 {offsets = [0, 16], sizes = [2, 16], strides = [1, 1]} : vector<2x48xf32> to vector<2x16xf32>
    %171 = arith.addf %169, %170 : vector<2x16xf32>
    %172 = arith.negf %171 : vector<2x16xf32>
    %173 = math.exp %172 : vector<2x16xf32>
    %cst_65 = arith.constant 1.000000e+00 : f32
    %174 = vector.broadcast %cst_65 : f32 to vector<2x16xf32>
    %175 = arith.addf %174, %173 : vector<2x16xf32>
    %176 = arith.divf %174, %175 : vector<2x16xf32>
    %177 = vector.extract_strided_slice %159 {offsets = [0, 32], sizes = [2, 16], strides = [1, 1]} : vector<2x48xf32> to vector<2x16xf32>
    %178 = vector.extract_strided_slice %160 {offsets = [0, 32], sizes = [2, 16], strides = [1, 1]} : vector<2x48xf32> to vector<2x16xf32>
    %179 = arith.mulf %168, %178 : vector<2x16xf32>
    %180 = arith.addf %177, %179 : vector<2x16xf32>
    %181 = math.tanh %180 : vector<2x16xf32>
    %cst_66 = arith.constant 1.000000e+00 : f32
    %182 = vector.broadcast %cst_66 : f32 to vector<2x16xf32>
    %183 = arith.subf %182, %176 : vector<2x16xf32>
    %184 = arith.mulf %183, %181 : vector<2x16xf32>
    %185 = arith.mulf %176, %126 : vector<2x16xf32>
    %186 = arith.addf %184, %185 : vector<2x16xf32>
    %187 = vector.extract_strided_slice %90 {offsets = [12, 48], sizes = [2, 48], strides = [1, 1]} : vector<16x96xf32> to vector<2x48xf32>
    %188 = vector.extract_strided_slice %158 {offsets = [0, 48], sizes = [2, 48], strides = [1, 1]} : vector<2x96xf32> to vector<2x48xf32>
    %189 = vector.extract_strided_slice %187 {offsets = [0, 0], sizes = [2, 16], strides = [1, 1]} : vector<2x48xf32> to vector<2x16xf32>
    %190 = vector.extract_strided_slice %188 {offsets = [0, 0], sizes = [2, 16], strides = [1, 1]} : vector<2x48xf32> to vector<2x16xf32>
    %191 = arith.addf %189, %190 : vector<2x16xf32>
    %192 = arith.negf %191 : vector<2x16xf32>
    %193 = math.exp %192 : vector<2x16xf32>
    %cst_67 = arith.constant 1.000000e+00 : f32
    %194 = vector.broadcast %cst_67 : f32 to vector<2x16xf32>
    %195 = arith.addf %194, %193 : vector<2x16xf32>
    %196 = arith.divf %194, %195 : vector<2x16xf32>
    %197 = vector.extract_strided_slice %187 {offsets = [0, 16], sizes = [2, 16], strides = [1, 1]} : vector<2x48xf32> to vector<2x16xf32>
    %198 = vector.extract_strided_slice %188 {offsets = [0, 16], sizes = [2, 16], strides = [1, 1]} : vector<2x48xf32> to vector<2x16xf32>
    %199 = arith.addf %197, %198 : vector<2x16xf32>
    %200 = arith.negf %199 : vector<2x16xf32>
    %201 = math.exp %200 : vector<2x16xf32>
    %cst_68 = arith.constant 1.000000e+00 : f32
    %202 = vector.broadcast %cst_68 : f32 to vector<2x16xf32>
    %203 = arith.addf %202, %201 : vector<2x16xf32>
    %204 = arith.divf %202, %203 : vector<2x16xf32>
    %205 = vector.extract_strided_slice %187 {offsets = [0, 32], sizes = [2, 16], strides = [1, 1]} : vector<2x48xf32> to vector<2x16xf32>
    %206 = vector.extract_strided_slice %188 {offsets = [0, 32], sizes = [2, 16], strides = [1, 1]} : vector<2x48xf32> to vector<2x16xf32>
    %207 = arith.mulf %196, %206 : vector<2x16xf32>
    %208 = arith.addf %205, %207 : vector<2x16xf32>
    %209 = math.tanh %208 : vector<2x16xf32>
    %cst_69 = arith.constant 1.000000e+00 : f32
    %210 = vector.broadcast %cst_69 : f32 to vector<2x16xf32>
    %211 = arith.subf %210, %204 : vector<2x16xf32>
    %212 = arith.mulf %211, %209 : vector<2x16xf32>
    %213 = arith.mulf %204, %154 : vector<2x16xf32>
    %214 = arith.addf %212, %213 : vector<2x16xf32>
    %215 = tpu.concatenate %186, %214 in 1 : vector<2x16xf32>, vector<2x16xf32> -> vector<2x32xf32>
    %cst_70 = arith.constant dense<0.000000e+00> : vector<2x96xf32>
    %216 = tpu.matmul %215, %91, %cst_70 {dimension_numbers = #tpu.dot_dimension_numbers<[1], [0], [0], [1], [0, 0, 1, 1], [], []>} : vector<2x32xf32>, vector<32x96xf32>, vector<2x96xf32> -> vector<2x96xf32>
    %217 = vector.broadcast %92 : vector<1x96xf32> to vector<2x96xf32>
    %218 = arith.addf %216, %217 : vector<2x96xf32>
    %219 = vector.extract_strided_slice %90 {offsets = [4, 0], sizes = [2, 48], strides = [1, 1]} : vector<16x96xf32> to vector<2x48xf32>
    %220 = vector.extract_strided_slice %218 {offsets = [0, 0], sizes = [2, 48], strides = [1, 1]} : vector<2x96xf32> to vector<2x48xf32>
    %221 = vector.extract_strided_slice %219 {offsets = [0, 0], sizes = [2, 16], strides = [1, 1]} : vector<2x48xf32> to vector<2x16xf32>
    %222 = vector.extract_strided_slice %220 {offsets = [0, 0], sizes = [2, 16], strides = [1, 1]} : vector<2x48xf32> to vector<2x16xf32>
    %223 = arith.addf %221, %222 : vector<2x16xf32>
    %224 = arith.negf %223 : vector<2x16xf32>
    %225 = math.exp %224 : vector<2x16xf32>
    %cst_71 = arith.constant 1.000000e+00 : f32
    %226 = vector.broadcast %cst_71 : f32 to vector<2x16xf32>
    %227 = arith.addf %226, %225 : vector<2x16xf32>
    %228 = arith.divf %226, %227 : vector<2x16xf32>
    %229 = vector.extract_strided_slice %219 {offsets = [0, 16], sizes = [2, 16], strides = [1, 1]} : vector<2x48xf32> to vector<2x16xf32>
    %230 = vector.extract_strided_slice %220 {offsets = [0, 16], sizes = [2, 16], strides = [1, 1]} : vector<2x48xf32> to vector<2x16xf32>
    %231 = arith.addf %229, %230 : vector<2x16xf32>
    %232 = arith.negf %231 : vector<2x16xf32>
    %233 = math.exp %232 : vector<2x16xf32>
    %cst_72 = arith.constant 1.000000e+00 : f32
    %234 = vector.broadcast %cst_72 : f32 to vector<2x16xf32>
    %235 = arith.addf %234, %233 : vector<2x16xf32>
    %236 = arith.divf %234, %235 : vector<2x16xf32>
    %237 = vector.extract_strided_slice %219 {offsets = [0, 32], sizes = [2, 16], strides = [1, 1]} : vector<2x48xf32> to vector<2x16xf32>
    %238 = vector.extract_strided_slice %220 {offsets = [0, 32], sizes = [2, 16], strides = [1, 1]} : vector<2x48xf32> to vector<2x16xf32>
    %239 = arith.mulf %228, %238 : vector<2x16xf32>
    %240 = arith.addf %237, %239 : vector<2x16xf32>
    %241 = math.tanh %240 : vector<2x16xf32>
    %cst_73 = arith.constant 1.000000e+00 : f32
    %242 = vector.broadcast %cst_73 : f32 to vector<2x16xf32>
    %243 = arith.subf %242, %236 : vector<2x16xf32>
    %244 = arith.mulf %243, %241 : vector<2x16xf32>
    %245 = arith.mulf %236, %186 : vector<2x16xf32>
    %246 = arith.addf %244, %245 : vector<2x16xf32>
    %247 = vector.extract_strided_slice %90 {offsets = [10, 48], sizes = [2, 48], strides = [1, 1]} : vector<16x96xf32> to vector<2x48xf32>
    %248 = vector.extract_strided_slice %218 {offsets = [0, 48], sizes = [2, 48], strides = [1, 1]} : vector<2x96xf32> to vector<2x48xf32>
    %249 = vector.extract_strided_slice %247 {offsets = [0, 0], sizes = [2, 16], strides = [1, 1]} : vector<2x48xf32> to vector<2x16xf32>
    %250 = vector.extract_strided_slice %248 {offsets = [0, 0], sizes = [2, 16], strides = [1, 1]} : vector<2x48xf32> to vector<2x16xf32>
    %251 = arith.addf %249, %250 : vector<2x16xf32>
    %252 = arith.negf %251 : vector<2x16xf32>
    %253 = math.exp %252 : vector<2x16xf32>
    %cst_74 = arith.constant 1.000000e+00 : f32
    %254 = vector.broadcast %cst_74 : f32 to vector<2x16xf32>
    %255 = arith.addf %254, %253 : vector<2x16xf32>
    %256 = arith.divf %254, %255 : vector<2x16xf32>
    %257 = vector.extract_strided_slice %247 {offsets = [0, 16], sizes = [2, 16], strides = [1, 1]} : vector<2x48xf32> to vector<2x16xf32>
    %258 = vector.extract_strided_slice %248 {offsets = [0, 16], sizes = [2, 16], strides = [1, 1]} : vector<2x48xf32> to vector<2x16xf32>
    %259 = arith.addf %257, %258 : vector<2x16xf32>
    %260 = arith.negf %259 : vector<2x16xf32>
    %261 = math.exp %260 : vector<2x16xf32>
    %cst_75 = arith.constant 1.000000e+00 : f32
    %262 = vector.broadcast %cst_75 : f32 to vector<2x16xf32>
    %263 = arith.addf %262, %261 : vector<2x16xf32>
    %264 = arith.divf %262, %263 : vector<2x16xf32>
    %265 = vector.extract_strided_slice %247 {offsets = [0, 32], sizes = [2, 16], strides = [1, 1]} : vector<2x48xf32> to vector<2x16xf32>
    %266 = vector.extract_strided_slice %248 {offsets = [0, 32], sizes = [2, 16], strides = [1, 1]} : vector<2x48xf32> to vector<2x16xf32>
    %267 = arith.mulf %256, %266 : vector<2x16xf32>
    %268 = arith.addf %265, %267 : vector<2x16xf32>
    %269 = math.tanh %268 : vector<2x16xf32>
    %cst_76 = arith.constant 1.000000e+00 : f32
    %270 = vector.broadcast %cst_76 : f32 to vector<2x16xf32>
    %271 = arith.subf %270, %264 : vector<2x16xf32>
    %272 = arith.mulf %271, %269 : vector<2x16xf32>
    %273 = arith.mulf %264, %214 : vector<2x16xf32>
    %274 = arith.addf %272, %273 : vector<2x16xf32>
    %275 = tpu.concatenate %246, %274 in 1 : vector<2x16xf32>, vector<2x16xf32> -> vector<2x32xf32>
    %cst_77 = arith.constant dense<0.000000e+00> : vector<2x96xf32>
    %276 = tpu.matmul %275, %91, %cst_77 {dimension_numbers = #tpu.dot_dimension_numbers<[1], [0], [0], [1], [0, 0, 1, 1], [], []>} : vector<2x32xf32>, vector<32x96xf32>, vector<2x96xf32> -> vector<2x96xf32>
    %277 = vector.broadcast %92 : vector<1x96xf32> to vector<2x96xf32>
    %278 = arith.addf %276, %277 : vector<2x96xf32>
    %279 = vector.extract_strided_slice %90 {offsets = [6, 0], sizes = [2, 48], strides = [1, 1]} : vector<16x96xf32> to vector<2x48xf32>
    %280 = vector.extract_strided_slice %278 {offsets = [0, 0], sizes = [2, 48], strides = [1, 1]} : vector<2x96xf32> to vector<2x48xf32>
    %281 = vector.extract_strided_slice %279 {offsets = [0, 0], sizes = [2, 16], strides = [1, 1]} : vector<2x48xf32> to vector<2x16xf32>
    %282 = vector.extract_strided_slice %280 {offsets = [0, 0], sizes = [2, 16], strides = [1, 1]} : vector<2x48xf32> to vector<2x16xf32>
    %283 = arith.addf %281, %282 : vector<2x16xf32>
    %284 = arith.negf %283 : vector<2x16xf32>
    %285 = math.exp %284 : vector<2x16xf32>
    %cst_78 = arith.constant 1.000000e+00 : f32
    %286 = vector.broadcast %cst_78 : f32 to vector<2x16xf32>
    %287 = arith.addf %286, %285 : vector<2x16xf32>
    %288 = arith.divf %286, %287 : vector<2x16xf32>
    %289 = vector.extract_strided_slice %279 {offsets = [0, 16], sizes = [2, 16], strides = [1, 1]} : vector<2x48xf32> to vector<2x16xf32>
    %290 = vector.extract_strided_slice %280 {offsets = [0, 16], sizes = [2, 16], strides = [1, 1]} : vector<2x48xf32> to vector<2x16xf32>
    %291 = arith.addf %289, %290 : vector<2x16xf32>
    %292 = arith.negf %291 : vector<2x16xf32>
    %293 = math.exp %292 : vector<2x16xf32>
    %cst_79 = arith.constant 1.000000e+00 : f32
    %294 = vector.broadcast %cst_79 : f32 to vector<2x16xf32>
    %295 = arith.addf %294, %293 : vector<2x16xf32>
    %296 = arith.divf %294, %295 : vector<2x16xf32>
    %297 = vector.extract_strided_slice %279 {offsets = [0, 32], sizes = [2, 16], strides = [1, 1]} : vector<2x48xf32> to vector<2x16xf32>
    %298 = vector.extract_strided_slice %280 {offsets = [0, 32], sizes = [2, 16], strides = [1, 1]} : vector<2x48xf32> to vector<2x16xf32>
    %299 = arith.mulf %288, %298 : vector<2x16xf32>
    %300 = arith.addf %297, %299 : vector<2x16xf32>
    %301 = math.tanh %300 : vector<2x16xf32>
    %cst_80 = arith.constant 1.000000e+00 : f32
    %302 = vector.broadcast %cst_80 : f32 to vector<2x16xf32>
    %303 = arith.subf %302, %296 : vector<2x16xf32>
    %304 = arith.mulf %303, %301 : vector<2x16xf32>
    %305 = arith.mulf %296, %246 : vector<2x16xf32>
    %306 = arith.addf %304, %305 : vector<2x16xf32>
    %307 = vector.extract_strided_slice %90 {offsets = [8, 48], sizes = [2, 48], strides = [1, 1]} : vector<16x96xf32> to vector<2x48xf32>
    %308 = vector.extract_strided_slice %278 {offsets = [0, 48], sizes = [2, 48], strides = [1, 1]} : vector<2x96xf32> to vector<2x48xf32>
    %309 = vector.extract_strided_slice %307 {offsets = [0, 0], sizes = [2, 16], strides = [1, 1]} : vector<2x48xf32> to vector<2x16xf32>
    %310 = vector.extract_strided_slice %308 {offsets = [0, 0], sizes = [2, 16], strides = [1, 1]} : vector<2x48xf32> to vector<2x16xf32>
    %311 = arith.addf %309, %310 : vector<2x16xf32>
    %312 = arith.negf %311 : vector<2x16xf32>
    %313 = math.exp %312 : vector<2x16xf32>
    %cst_81 = arith.constant 1.000000e+00 : f32
    %314 = vector.broadcast %cst_81 : f32 to vector<2x16xf32>
    %315 = arith.addf %314, %313 : vector<2x16xf32>
    %316 = arith.divf %314, %315 : vector<2x16xf32>
    %317 = vector.extract_strided_slice %307 {offsets = [0, 16], sizes = [2, 16], strides = [1, 1]} : vector<2x48xf32> to vector<2x16xf32>
    %318 = vector.extract_strided_slice %308 {offsets = [0, 16], sizes = [2, 16], strides = [1, 1]} : vector<2x48xf32> to vector<2x16xf32>
    %319 = arith.addf %317, %318 : vector<2x16xf32>
    %320 = arith.negf %319 : vector<2x16xf32>
    %321 = math.exp %320 : vector<2x16xf32>
    %cst_82 = arith.constant 1.000000e+00 : f32
    %322 = vector.broadcast %cst_82 : f32 to vector<2x16xf32>
    %323 = arith.addf %322, %321 : vector<2x16xf32>
    %324 = arith.divf %322, %323 : vector<2x16xf32>
    %325 = vector.extract_strided_slice %307 {offsets = [0, 32], sizes = [2, 16], strides = [1, 1]} : vector<2x48xf32> to vector<2x16xf32>
    %326 = vector.extract_strided_slice %308 {offsets = [0, 32], sizes = [2, 16], strides = [1, 1]} : vector<2x48xf32> to vector<2x16xf32>
    %327 = arith.mulf %316, %326 : vector<2x16xf32>
    %328 = arith.addf %325, %327 : vector<2x16xf32>
    %329 = math.tanh %328 : vector<2x16xf32>
    %cst_83 = arith.constant 1.000000e+00 : f32
    %330 = vector.broadcast %cst_83 : f32 to vector<2x16xf32>
    %331 = arith.subf %330, %324 : vector<2x16xf32>
    %332 = arith.mulf %331, %329 : vector<2x16xf32>
    %333 = arith.mulf %324, %274 : vector<2x16xf32>
    %334 = arith.addf %332, %333 : vector<2x16xf32>
    %335 = tpu.concatenate %306, %334 in 1 : vector<2x16xf32>, vector<2x16xf32> -> vector<2x32xf32>
    %cst_84 = arith.constant dense<0.000000e+00> : vector<2x96xf32>
    %336 = tpu.matmul %335, %91, %cst_84 {dimension_numbers = #tpu.dot_dimension_numbers<[1], [0], [0], [1], [0, 0, 1, 1], [], []>} : vector<2x32xf32>, vector<32x96xf32>, vector<2x96xf32> -> vector<2x96xf32>
    %337 = vector.broadcast %92 : vector<1x96xf32> to vector<2x96xf32>
    %338 = arith.addf %336, %337 : vector<2x96xf32>
    %339 = vector.extract_strided_slice %90 {offsets = [8, 0], sizes = [2, 48], strides = [1, 1]} : vector<16x96xf32> to vector<2x48xf32>
    %340 = vector.extract_strided_slice %338 {offsets = [0, 0], sizes = [2, 48], strides = [1, 1]} : vector<2x96xf32> to vector<2x48xf32>
    %341 = vector.extract_strided_slice %339 {offsets = [0, 0], sizes = [2, 16], strides = [1, 1]} : vector<2x48xf32> to vector<2x16xf32>
    %342 = vector.extract_strided_slice %340 {offsets = [0, 0], sizes = [2, 16], strides = [1, 1]} : vector<2x48xf32> to vector<2x16xf32>
    %343 = arith.addf %341, %342 : vector<2x16xf32>
    %344 = arith.negf %343 : vector<2x16xf32>
    %345 = math.exp %344 : vector<2x16xf32>
    %cst_85 = arith.constant 1.000000e+00 : f32
    %346 = vector.broadcast %cst_85 : f32 to vector<2x16xf32>
    %347 = arith.addf %346, %345 : vector<2x16xf32>
    %348 = arith.divf %346, %347 : vector<2x16xf32>
    %349 = vector.extract_strided_slice %339 {offsets = [0, 16], sizes = [2, 16], strides = [1, 1]} : vector<2x48xf32> to vector<2x16xf32>
    %350 = vector.extract_strided_slice %340 {offsets = [0, 16], sizes = [2, 16], strides = [1, 1]} : vector<2x48xf32> to vector<2x16xf32>
    %351 = arith.addf %349, %350 : vector<2x16xf32>
    %352 = arith.negf %351 : vector<2x16xf32>
    %353 = math.exp %352 : vector<2x16xf32>
    %cst_86 = arith.constant 1.000000e+00 : f32
    %354 = vector.broadcast %cst_86 : f32 to vector<2x16xf32>
    %355 = arith.addf %354, %353 : vector<2x16xf32>
    %356 = arith.divf %354, %355 : vector<2x16xf32>
    %357 = vector.extract_strided_slice %339 {offsets = [0, 32], sizes = [2, 16], strides = [1, 1]} : vector<2x48xf32> to vector<2x16xf32>
    %358 = vector.extract_strided_slice %340 {offsets = [0, 32], sizes = [2, 16], strides = [1, 1]} : vector<2x48xf32> to vector<2x16xf32>
    %359 = arith.mulf %348, %358 : vector<2x16xf32>
    %360 = arith.addf %357, %359 : vector<2x16xf32>
    %361 = math.tanh %360 : vector<2x16xf32>
    %cst_87 = arith.constant 1.000000e+00 : f32
    %362 = vector.broadcast %cst_87 : f32 to vector<2x16xf32>
    %363 = arith.subf %362, %356 : vector<2x16xf32>
    %364 = arith.mulf %363, %361 : vector<2x16xf32>
    %365 = arith.mulf %356, %306 : vector<2x16xf32>
    %366 = arith.addf %364, %365 : vector<2x16xf32>
    %367 = vector.extract_strided_slice %90 {offsets = [6, 48], sizes = [2, 48], strides = [1, 1]} : vector<16x96xf32> to vector<2x48xf32>
    %368 = vector.extract_strided_slice %338 {offsets = [0, 48], sizes = [2, 48], strides = [1, 1]} : vector<2x96xf32> to vector<2x48xf32>
    %369 = vector.extract_strided_slice %367 {offsets = [0, 0], sizes = [2, 16], strides = [1, 1]} : vector<2x48xf32> to vector<2x16xf32>
    %370 = vector.extract_strided_slice %368 {offsets = [0, 0], sizes = [2, 16], strides = [1, 1]} : vector<2x48xf32> to vector<2x16xf32>
    %371 = arith.addf %369, %370 : vector<2x16xf32>
    %372 = arith.negf %371 : vector<2x16xf32>
    %373 = math.exp %372 : vector<2x16xf32>
    %cst_88 = arith.constant 1.000000e+00 : f32
    %374 = vector.broadcast %cst_88 : f32 to vector<2x16xf32>
    %375 = arith.addf %374, %373 : vector<2x16xf32>
    %376 = arith.divf %374, %375 : vector<2x16xf32>
    %377 = vector.extract_strided_slice %367 {offsets = [0, 16], sizes = [2, 16], strides = [1, 1]} : vector<2x48xf32> to vector<2x16xf32>
    %378 = vector.extract_strided_slice %368 {offsets = [0, 16], sizes = [2, 16], strides = [1, 1]} : vector<2x48xf32> to vector<2x16xf32>
    %379 = arith.addf %377, %378 : vector<2x16xf32>
    %380 = arith.negf %379 : vector<2x16xf32>
    %381 = math.exp %380 : vector<2x16xf32>
    %cst_89 = arith.constant 1.000000e+00 : f32
    %382 = vector.broadcast %cst_89 : f32 to vector<2x16xf32>
    %383 = arith.addf %382, %381 : vector<2x16xf32>
    %384 = arith.divf %382, %383 : vector<2x16xf32>
    %385 = vector.extract_strided_slice %367 {offsets = [0, 32], sizes = [2, 16], strides = [1, 1]} : vector<2x48xf32> to vector<2x16xf32>
    %386 = vector.extract_strided_slice %368 {offsets = [0, 32], sizes = [2, 16], strides = [1, 1]} : vector<2x48xf32> to vector<2x16xf32>
    %387 = arith.mulf %376, %386 : vector<2x16xf32>
    %388 = arith.addf %385, %387 : vector<2x16xf32>
    %389 = math.tanh %388 : vector<2x16xf32>
    %cst_90 = arith.constant 1.000000e+00 : f32
    %390 = vector.broadcast %cst_90 : f32 to vector<2x16xf32>
    %391 = arith.subf %390, %384 : vector<2x16xf32>
    %392 = arith.mulf %391, %389 : vector<2x16xf32>
    %393 = arith.mulf %384, %334 : vector<2x16xf32>
    %394 = arith.addf %392, %393 : vector<2x16xf32>
    %395 = tpu.concatenate %366, %394 in 1 : vector<2x16xf32>, vector<2x16xf32> -> vector<2x32xf32>
    %cst_91 = arith.constant dense<0.000000e+00> : vector<2x96xf32>
    %396 = tpu.matmul %395, %91, %cst_91 {dimension_numbers = #tpu.dot_dimension_numbers<[1], [0], [0], [1], [0, 0, 1, 1], [], []>} : vector<2x32xf32>, vector<32x96xf32>, vector<2x96xf32> -> vector<2x96xf32>
    %397 = vector.broadcast %92 : vector<1x96xf32> to vector<2x96xf32>
    %398 = arith.addf %396, %397 : vector<2x96xf32>
    %399 = vector.extract_strided_slice %90 {offsets = [10, 0], sizes = [2, 48], strides = [1, 1]} : vector<16x96xf32> to vector<2x48xf32>
    %400 = vector.extract_strided_slice %398 {offsets = [0, 0], sizes = [2, 48], strides = [1, 1]} : vector<2x96xf32> to vector<2x48xf32>
    %401 = vector.extract_strided_slice %399 {offsets = [0, 0], sizes = [2, 16], strides = [1, 1]} : vector<2x48xf32> to vector<2x16xf32>
    %402 = vector.extract_strided_slice %400 {offsets = [0, 0], sizes = [2, 16], strides = [1, 1]} : vector<2x48xf32> to vector<2x16xf32>
    %403 = arith.addf %401, %402 : vector<2x16xf32>
    %404 = arith.negf %403 : vector<2x16xf32>
    %405 = math.exp %404 : vector<2x16xf32>
    %cst_92 = arith.constant 1.000000e+00 : f32
    %406 = vector.broadcast %cst_92 : f32 to vector<2x16xf32>
    %407 = arith.addf %406, %405 : vector<2x16xf32>
    %408 = arith.divf %406, %407 : vector<2x16xf32>
    %409 = vector.extract_strided_slice %399 {offsets = [0, 16], sizes = [2, 16], strides = [1, 1]} : vector<2x48xf32> to vector<2x16xf32>
    %410 = vector.extract_strided_slice %400 {offsets = [0, 16], sizes = [2, 16], strides = [1, 1]} : vector<2x48xf32> to vector<2x16xf32>
    %411 = arith.addf %409, %410 : vector<2x16xf32>
    %412 = arith.negf %411 : vector<2x16xf32>
    %413 = math.exp %412 : vector<2x16xf32>
    %cst_93 = arith.constant 1.000000e+00 : f32
    %414 = vector.broadcast %cst_93 : f32 to vector<2x16xf32>
    %415 = arith.addf %414, %413 : vector<2x16xf32>
    %416 = arith.divf %414, %415 : vector<2x16xf32>
    %417 = vector.extract_strided_slice %399 {offsets = [0, 32], sizes = [2, 16], strides = [1, 1]} : vector<2x48xf32> to vector<2x16xf32>
    %418 = vector.extract_strided_slice %400 {offsets = [0, 32], sizes = [2, 16], strides = [1, 1]} : vector<2x48xf32> to vector<2x16xf32>
    %419 = arith.mulf %408, %418 : vector<2x16xf32>
    %420 = arith.addf %417, %419 : vector<2x16xf32>
    %421 = math.tanh %420 : vector<2x16xf32>
    %cst_94 = arith.constant 1.000000e+00 : f32
    %422 = vector.broadcast %cst_94 : f32 to vector<2x16xf32>
    %423 = arith.subf %422, %416 : vector<2x16xf32>
    %424 = arith.mulf %423, %421 : vector<2x16xf32>
    %425 = arith.mulf %416, %366 : vector<2x16xf32>
    %426 = arith.addf %424, %425 : vector<2x16xf32>
    %427 = vector.extract_strided_slice %90 {offsets = [4, 48], sizes = [2, 48], strides = [1, 1]} : vector<16x96xf32> to vector<2x48xf32>
    %428 = vector.extract_strided_slice %398 {offsets = [0, 48], sizes = [2, 48], strides = [1, 1]} : vector<2x96xf32> to vector<2x48xf32>
    %429 = vector.extract_strided_slice %427 {offsets = [0, 0], sizes = [2, 16], strides = [1, 1]} : vector<2x48xf32> to vector<2x16xf32>
    %430 = vector.extract_strided_slice %428 {offsets = [0, 0], sizes = [2, 16], strides = [1, 1]} : vector<2x48xf32> to vector<2x16xf32>
    %431 = arith.addf %429, %430 : vector<2x16xf32>
    %432 = arith.negf %431 : vector<2x16xf32>
    %433 = math.exp %432 : vector<2x16xf32>
    %cst_95 = arith.constant 1.000000e+00 : f32
    %434 = vector.broadcast %cst_95 : f32 to vector<2x16xf32>
    %435 = arith.addf %434, %433 : vector<2x16xf32>
    %436 = arith.divf %434, %435 : vector<2x16xf32>
    %437 = vector.extract_strided_slice %427 {offsets = [0, 16], sizes = [2, 16], strides = [1, 1]} : vector<2x48xf32> to vector<2x16xf32>
    %438 = vector.extract_strided_slice %428 {offsets = [0, 16], sizes = [2, 16], strides = [1, 1]} : vector<2x48xf32> to vector<2x16xf32>
    %439 = arith.addf %437, %438 : vector<2x16xf32>
    %440 = arith.negf %439 : vector<2x16xf32>
    %441 = math.exp %440 : vector<2x16xf32>
    %cst_96 = arith.constant 1.000000e+00 : f32
    %442 = vector.broadcast %cst_96 : f32 to vector<2x16xf32>
    %443 = arith.addf %442, %441 : vector<2x16xf32>
    %444 = arith.divf %442, %443 : vector<2x16xf32>
    %445 = vector.extract_strided_slice %427 {offsets = [0, 32], sizes = [2, 16], strides = [1, 1]} : vector<2x48xf32> to vector<2x16xf32>
    %446 = vector.extract_strided_slice %428 {offsets = [0, 32], sizes = [2, 16], strides = [1, 1]} : vector<2x48xf32> to vector<2x16xf32>
    %447 = arith.mulf %436, %446 : vector<2x16xf32>
    %448 = arith.addf %445, %447 : vector<2x16xf32>
    %449 = math.tanh %448 : vector<2x16xf32>
    %cst_97 = arith.constant 1.000000e+00 : f32
    %450 = vector.broadcast %cst_97 : f32 to vector<2x16xf32>
    %451 = arith.subf %450, %444 : vector<2x16xf32>
    %452 = arith.mulf %451, %449 : vector<2x16xf32>
    %453 = arith.mulf %444, %394 : vector<2x16xf32>
    %454 = arith.addf %452, %453 : vector<2x16xf32>
    %455 = tpu.concatenate %426, %454 in 1 : vector<2x16xf32>, vector<2x16xf32> -> vector<2x32xf32>
    %cst_98 = arith.constant dense<0.000000e+00> : vector<2x96xf32>
    %456 = tpu.matmul %455, %91, %cst_98 {dimension_numbers = #tpu.dot_dimension_numbers<[1], [0], [0], [1], [0, 0, 1, 1], [], []>} : vector<2x32xf32>, vector<32x96xf32>, vector<2x96xf32> -> vector<2x96xf32>
    %457 = vector.broadcast %92 : vector<1x96xf32> to vector<2x96xf32>
    %458 = arith.addf %456, %457 : vector<2x96xf32>
    %459 = vector.extract_strided_slice %90 {offsets = [12, 0], sizes = [2, 48], strides = [1, 1]} : vector<16x96xf32> to vector<2x48xf32>
    %460 = vector.extract_strided_slice %458 {offsets = [0, 0], sizes = [2, 48], strides = [1, 1]} : vector<2x96xf32> to vector<2x48xf32>
    %461 = vector.extract_strided_slice %459 {offsets = [0, 0], sizes = [2, 16], strides = [1, 1]} : vector<2x48xf32> to vector<2x16xf32>
    %462 = vector.extract_strided_slice %460 {offsets = [0, 0], sizes = [2, 16], strides = [1, 1]} : vector<2x48xf32> to vector<2x16xf32>
    %463 = arith.addf %461, %462 : vector<2x16xf32>
    %464 = arith.negf %463 : vector<2x16xf32>
    %465 = math.exp %464 : vector<2x16xf32>
    %cst_99 = arith.constant 1.000000e+00 : f32
    %466 = vector.broadcast %cst_99 : f32 to vector<2x16xf32>
    %467 = arith.addf %466, %465 : vector<2x16xf32>
    %468 = arith.divf %466, %467 : vector<2x16xf32>
    %469 = vector.extract_strided_slice %459 {offsets = [0, 16], sizes = [2, 16], strides = [1, 1]} : vector<2x48xf32> to vector<2x16xf32>
    %470 = vector.extract_strided_slice %460 {offsets = [0, 16], sizes = [2, 16], strides = [1, 1]} : vector<2x48xf32> to vector<2x16xf32>
    %471 = arith.addf %469, %470 : vector<2x16xf32>
    %472 = arith.negf %471 : vector<2x16xf32>
    %473 = math.exp %472 : vector<2x16xf32>
    %cst_100 = arith.constant 1.000000e+00 : f32
    %474 = vector.broadcast %cst_100 : f32 to vector<2x16xf32>
    %475 = arith.addf %474, %473 : vector<2x16xf32>
    %476 = arith.divf %474, %475 : vector<2x16xf32>
    %477 = vector.extract_strided_slice %459 {offsets = [0, 32], sizes = [2, 16], strides = [1, 1]} : vector<2x48xf32> to vector<2x16xf32>
    %478 = vector.extract_strided_slice %460 {offsets = [0, 32], sizes = [2, 16], strides = [1, 1]} : vector<2x48xf32> to vector<2x16xf32>
    %479 = arith.mulf %468, %478 : vector<2x16xf32>
    %480 = arith.addf %477, %479 : vector<2x16xf32>
    %481 = math.tanh %480 : vector<2x16xf32>
    %cst_101 = arith.constant 1.000000e+00 : f32
    %482 = vector.broadcast %cst_101 : f32 to vector<2x16xf32>
    %483 = arith.subf %482, %476 : vector<2x16xf32>
    %484 = arith.mulf %483, %481 : vector<2x16xf32>
    %485 = arith.mulf %476, %426 : vector<2x16xf32>
    %486 = arith.addf %484, %485 : vector<2x16xf32>
    %487 = vector.extract_strided_slice %90 {offsets = [2, 48], sizes = [2, 48], strides = [1, 1]} : vector<16x96xf32> to vector<2x48xf32>
    %488 = vector.extract_strided_slice %458 {offsets = [0, 48], sizes = [2, 48], strides = [1, 1]} : vector<2x96xf32> to vector<2x48xf32>
    %489 = vector.extract_strided_slice %487 {offsets = [0, 0], sizes = [2, 16], strides = [1, 1]} : vector<2x48xf32> to vector<2x16xf32>
    %490 = vector.extract_strided_slice %488 {offsets = [0, 0], sizes = [2, 16], strides = [1, 1]} : vector<2x48xf32> to vector<2x16xf32>
    %491 = arith.addf %489, %490 : vector<2x16xf32>
    %492 = arith.negf %491 : vector<2x16xf32>
    %493 = math.exp %492 : vector<2x16xf32>
    %cst_102 = arith.constant 1.000000e+00 : f32
    %494 = vector.broadcast %cst_102 : f32 to vector<2x16xf32>
    %495 = arith.addf %494, %493 : vector<2x16xf32>
    %496 = arith.divf %494, %495 : vector<2x16xf32>
    %497 = vector.extract_strided_slice %487 {offsets = [0, 16], sizes = [2, 16], strides = [1, 1]} : vector<2x48xf32> to vector<2x16xf32>
    %498 = vector.extract_strided_slice %488 {offsets = [0, 16], sizes = [2, 16], strides = [1, 1]} : vector<2x48xf32> to vector<2x16xf32>
    %499 = arith.addf %497, %498 : vector<2x16xf32>
    %500 = arith.negf %499 : vector<2x16xf32>
    %501 = math.exp %500 : vector<2x16xf32>
    %cst_103 = arith.constant 1.000000e+00 : f32
    %502 = vector.broadcast %cst_103 : f32 to vector<2x16xf32>
    %503 = arith.addf %502, %501 : vector<2x16xf32>
    %504 = arith.divf %502, %503 : vector<2x16xf32>
    %505 = vector.extract_strided_slice %487 {offsets = [0, 32], sizes = [2, 16], strides = [1, 1]} : vector<2x48xf32> to vector<2x16xf32>
    %506 = vector.extract_strided_slice %488 {offsets = [0, 32], sizes = [2, 16], strides = [1, 1]} : vector<2x48xf32> to vector<2x16xf32>
    %507 = arith.mulf %496, %506 : vector<2x16xf32>
    %508 = arith.addf %505, %507 : vector<2x16xf32>
    %509 = math.tanh %508 : vector<2x16xf32>
    %cst_104 = arith.constant 1.000000e+00 : f32
    %510 = vector.broadcast %cst_104 : f32 to vector<2x16xf32>
    %511 = arith.subf %510, %504 : vector<2x16xf32>
    %512 = arith.mulf %511, %509 : vector<2x16xf32>
    %513 = arith.mulf %504, %454 : vector<2x16xf32>
    %514 = arith.addf %512, %513 : vector<2x16xf32>
    %515 = tpu.concatenate %486, %514 in 1 : vector<2x16xf32>, vector<2x16xf32> -> vector<2x32xf32>
    %cst_105 = arith.constant dense<0.000000e+00> : vector<2x96xf32>
    %516 = tpu.matmul %515, %91, %cst_105 {dimension_numbers = #tpu.dot_dimension_numbers<[1], [0], [0], [1], [0, 0, 1, 1], [], []>} : vector<2x32xf32>, vector<32x96xf32>, vector<2x96xf32> -> vector<2x96xf32>
    %517 = vector.broadcast %92 : vector<1x96xf32> to vector<2x96xf32>
    %518 = arith.addf %516, %517 : vector<2x96xf32>
    %519 = vector.extract_strided_slice %90 {offsets = [14, 0], sizes = [2, 48], strides = [1, 1]} : vector<16x96xf32> to vector<2x48xf32>
    %520 = vector.extract_strided_slice %518 {offsets = [0, 0], sizes = [2, 48], strides = [1, 1]} : vector<2x96xf32> to vector<2x48xf32>
    %521 = vector.extract_strided_slice %519 {offsets = [0, 0], sizes = [2, 16], strides = [1, 1]} : vector<2x48xf32> to vector<2x16xf32>
    %522 = vector.extract_strided_slice %520 {offsets = [0, 0], sizes = [2, 16], strides = [1, 1]} : vector<2x48xf32> to vector<2x16xf32>
    %523 = arith.addf %521, %522 : vector<2x16xf32>
    %524 = arith.negf %523 : vector<2x16xf32>
    %525 = math.exp %524 : vector<2x16xf32>
    %cst_106 = arith.constant 1.000000e+00 : f32
    %526 = vector.broadcast %cst_106 : f32 to vector<2x16xf32>
    %527 = arith.addf %526, %525 : vector<2x16xf32>
    %528 = arith.divf %526, %527 : vector<2x16xf32>
    %529 = vector.extract_strided_slice %519 {offsets = [0, 16], sizes = [2, 16], strides = [1, 1]} : vector<2x48xf32> to vector<2x16xf32>
    %530 = vector.extract_strided_slice %520 {offsets = [0, 16], sizes = [2, 16], strides = [1, 1]} : vector<2x48xf32> to vector<2x16xf32>
    %531 = arith.addf %529, %530 : vector<2x16xf32>
    %532 = arith.negf %531 : vector<2x16xf32>
    %533 = math.exp %532 : vector<2x16xf32>
    %cst_107 = arith.constant 1.000000e+00 : f32
    %534 = vector.broadcast %cst_107 : f32 to vector<2x16xf32>
    %535 = arith.addf %534, %533 : vector<2x16xf32>
    %536 = arith.divf %534, %535 : vector<2x16xf32>
    %537 = vector.extract_strided_slice %519 {offsets = [0, 32], sizes = [2, 16], strides = [1, 1]} : vector<2x48xf32> to vector<2x16xf32>
    %538 = vector.extract_strided_slice %520 {offsets = [0, 32], sizes = [2, 16], strides = [1, 1]} : vector<2x48xf32> to vector<2x16xf32>
    %539 = arith.mulf %528, %538 : vector<2x16xf32>
    %540 = arith.addf %537, %539 : vector<2x16xf32>
    %541 = math.tanh %540 : vector<2x16xf32>
    %cst_108 = arith.constant 1.000000e+00 : f32
    %542 = vector.broadcast %cst_108 : f32 to vector<2x16xf32>
    %543 = arith.subf %542, %536 : vector<2x16xf32>
    %544 = arith.mulf %543, %541 : vector<2x16xf32>
    %545 = arith.mulf %536, %486 : vector<2x16xf32>
    %546 = arith.addf %544, %545 : vector<2x16xf32>
    %547 = vector.extract_strided_slice %90 {offsets = [0, 48], sizes = [2, 48], strides = [1, 1]} : vector<16x96xf32> to vector<2x48xf32>
    %548 = vector.extract_strided_slice %518 {offsets = [0, 48], sizes = [2, 48], strides = [1, 1]} : vector<2x96xf32> to vector<2x48xf32>
    %549 = vector.extract_strided_slice %547 {offsets = [0, 0], sizes = [2, 16], strides = [1, 1]} : vector<2x48xf32> to vector<2x16xf32>
    %550 = vector.extract_strided_slice %548 {offsets = [0, 0], sizes = [2, 16], strides = [1, 1]} : vector<2x48xf32> to vector<2x16xf32>
    %551 = arith.addf %549, %550 : vector<2x16xf32>
    %552 = arith.negf %551 : vector<2x16xf32>
    %553 = math.exp %552 : vector<2x16xf32>
    %cst_109 = arith.constant 1.000000e+00 : f32
    %554 = vector.broadcast %cst_109 : f32 to vector<2x16xf32>
    %555 = arith.addf %554, %553 : vector<2x16xf32>
    %556 = arith.divf %554, %555 : vector<2x16xf32>
    %557 = vector.extract_strided_slice %547 {offsets = [0, 16], sizes = [2, 16], strides = [1, 1]} : vector<2x48xf32> to vector<2x16xf32>
    %558 = vector.extract_strided_slice %548 {offsets = [0, 16], sizes = [2, 16], strides = [1, 1]} : vector<2x48xf32> to vector<2x16xf32>
    %559 = arith.addf %557, %558 : vector<2x16xf32>
    %560 = arith.negf %559 : vector<2x16xf32>
    %561 = math.exp %560 : vector<2x16xf32>
    %cst_110 = arith.constant 1.000000e+00 : f32
    %562 = vector.broadcast %cst_110 : f32 to vector<2x16xf32>
    %563 = arith.addf %562, %561 : vector<2x16xf32>
    %564 = arith.divf %562, %563 : vector<2x16xf32>
    %565 = vector.extract_strided_slice %547 {offsets = [0, 32], sizes = [2, 16], strides = [1, 1]} : vector<2x48xf32> to vector<2x16xf32>
    %566 = vector.extract_strided_slice %548 {offsets = [0, 32], sizes = [2, 16], strides = [1, 1]} : vector<2x48xf32> to vector<2x16xf32>
    %567 = arith.mulf %556, %566 : vector<2x16xf32>
    %568 = arith.addf %565, %567 : vector<2x16xf32>
    %569 = math.tanh %568 : vector<2x16xf32>
    %cst_111 = arith.constant 1.000000e+00 : f32
    %570 = vector.broadcast %cst_111 : f32 to vector<2x16xf32>
    %571 = arith.subf %570, %564 : vector<2x16xf32>
    %572 = arith.mulf %571, %569 : vector<2x16xf32>
    %573 = arith.mulf %564, %514 : vector<2x16xf32>
    %574 = arith.addf %572, %573 : vector<2x16xf32>
    %575 = tpu.concatenate %126, %574 in 1 : vector<2x16xf32>, vector<2x16xf32> -> vector<2x32xf32>
    %576 = tpu.concatenate %186, %514 in 1 : vector<2x16xf32>, vector<2x16xf32> -> vector<2x32xf32>
    %577 = tpu.concatenate %246, %454 in 1 : vector<2x16xf32>, vector<2x16xf32> -> vector<2x32xf32>
    %578 = tpu.concatenate %306, %394 in 1 : vector<2x16xf32>, vector<2x16xf32> -> vector<2x32xf32>
    %579 = tpu.concatenate %366, %334 in 1 : vector<2x16xf32>, vector<2x16xf32> -> vector<2x32xf32>
    %580 = tpu.concatenate %426, %274 in 1 : vector<2x16xf32>, vector<2x16xf32> -> vector<2x32xf32>
    %581 = tpu.concatenate %486, %214 in 1 : vector<2x16xf32>, vector<2x16xf32> -> vector<2x32xf32>
    %582 = tpu.concatenate %546, %154 in 1 : vector<2x16xf32>, vector<2x16xf32> -> vector<2x32xf32>
    %583 = tpu.concatenate %575, %576, %577, %578, %579, %580, %581, %582 in 0 : vector<2x32xf32>, vector<2x32xf32>, vector<2x32xf32>, vector<2x32xf32>, vector<2x32xf32>, vector<2x32xf32>, vector<2x32xf32>, vector<2x32xf32> -> vector<16x32xf32>
    %c0_112 = arith.constant 0 : index
    %c0_113 = arith.constant 0 : index
    %584 = vector.load %arg17[%c0_112, %c0_113] : memref<32x128xf32, #tpu.memory_space<vmem>>, vector<32x128xf32>
    %cst_114 = arith.constant dense<0.000000e+00> : vector<16x128xf32>
    %585 = tpu.matmul %583, %584, %cst_114 {dimension_numbers = #tpu.dot_dimension_numbers<[1], [0], [0], [1], [0, 0, 1, 1], [], []>} : vector<16x32xf32>, vector<32x128xf32>, vector<16x128xf32> -> vector<16x128xf32>
    %c0_115 = arith.constant 0 : index
    %c0_116 = arith.constant 0 : index
    %586 = vector.load %arg18[%c0_115, %c0_116] : memref<128x128xf32, #tpu.memory_space<vmem>>, vector<128x128xf32>
    %cst_117 = arith.constant dense<0.000000e+00> : vector<16x128xf32>
    %587 = tpu.matmul %84, %586, %cst_117 {dimension_numbers = #tpu.dot_dimension_numbers<[1], [0], [0], [1], [0, 0, 1, 1], [], []>} : vector<16x128xf32>, vector<128x128xf32>, vector<16x128xf32> -> vector<16x128xf32>
    %588 = arith.addf %585, %587 : vector<16x128xf32>
    %c0_118 = arith.constant 0 : index
    %c0_119 = arith.constant 0 : index
    %589 = vector.load %arg19[%c0_118, %c0_119] : memref<1x128xf32, #tpu.memory_space<vmem>>, vector<1x128xf32>
    %590 = vector.broadcast %589 : vector<1x128xf32> to vector<16x128xf32>
    %591 = arith.addf %588, %590 : vector<16x128xf32>
    %c0_120 = arith.constant 0 : index
    %c0_121 = arith.constant 0 : index
    %592 = vector.load %arg20[%c0_120, %c0_121] : memref<16x128xf32, #tpu.memory_space<vmem>>, vector<16x128xf32>
    tpu.vector_store %arg20[%c0_120, %c0_121], %591 {strides = array<i32>} : memref<16x128xf32, #tpu.memory_space<vmem>>, vector<16x128xf32>,
    return
  }
}

</mosaic_0001>

<llo_original>
// kernel: forward.1
$region0: #{forward.1}
  #allocation0 [shape = 'u32[]', space=smem, size = 0x4, offset = 0x4, fixed_abs, tag = 'smem constant byte address 0x4 - core index']
  #allocation1 [shape = 'u32[144,128]{1,0:T(1,128)}', space=vmem, size = 0x12000, scoped, tag = 'internal scratch']
  %s0 = inlined_call_operand.vmem [shape: f32[16,16], index: 0, kind: input, shape index: {}]
  %s1 = inlined_call_operand.vmem [shape: bf16[32,512], index: 1, kind: input, shape index: {}]
  %s2 = inlined_call_operand.hbm [shape: f32[1,512], index: 2, kind: input, shape index: {}]
  %s3 = inlined_call_operand.hbm [shape: bf16[512,256], index: 3, kind: input, shape index: {}]
  %s4 = inlined_call_operand.hbm [shape: bf16[512,256], index: 4, kind: input, shape index: {}]
  %s5 = inlined_call_operand.hbm [shape: bf16[512,256], index: 5, kind: input, shape index: {}]
  %s6 = inlined_call_operand.hbm [shape: f32[1,256], index: 6, kind: input, shape index: {}]
  %s7 = inlined_call_operand.vmem [shape: bf16[256,128], index: 7, kind: input, shape index: {}]
  %s8 = inlined_call_operand.vmem [shape: f32[1,128], index: 8, kind: input, shape index: {}]
  %s9 = inlined_call_operand.hbm [shape: bf16[128,128], index: 9, kind: input, shape index: {}]
  %s10 = inlined_call_operand.hbm [shape: f32[1,128], index: 10, kind: input, shape index: {}]
  %s11 = inlined_call_operand.hbm [shape: bf16[128,128], index: 11, kind: input, shape index: {}]
  %s12 = inlined_call_operand.hbm [shape: f32[1,128], index: 12, kind: input, shape index: {}]
  %s13 = inlined_call_operand.vmem [shape: bf16[128,96], index: 13, kind: input, shape index: {}]
  %s14 = inlined_call_operand.hbm [shape: f32[1,96], index: 14, kind: input, shape index: {}]
  %s15 = inlined_call_operand.hbm [shape: f32[32,96], index: 15, kind: input, shape index: {}]
  %s16 = inlined_call_operand.hbm [shape: f32[1,96], index: 16, kind: input, shape index: {}]
  %s17 = inlined_call_operand.hbm [shape: f32[32,128], index: 17, kind: input, shape index: {}]
  %s18 = inlined_call_operand.hbm [shape: f32[128,128], index: 18, kind: input, shape index: {}]
  %s19 = inlined_call_operand.hbm [shape: f32[1,128], index: 19, kind: input, shape index: {}]
  %s20 = inlined_call_operand.vmem [shape: f32[16,128], index: 20, kind: output, shape index: {}]
  %s21 = sld [smem:[#allocation0]]
  $region150: #{forward.1} parent=0
    _
  %s23 = ssub.s32 1, %s21
  %s24 = scalar_select 0, %s23, %s21
  $region1: #{forward.1} parent=0
    #allocation2 [shape = 'u8[2048]{0}', space=vmem, size = 0x800, scoped, tag = 'input window, operand 2, single buffered']
    #allocation3 [shape = 's32[1]{0}', space=sflag, size = 0x4, scoped, tag = 'scoped memory for forward.1']
    #allocation4 [shape = 'u8[262144]{0}', space=vmem, size = 0x40000, scoped, tag = 'input window, operand 3, single buffered']
    #allocation5 [shape = 's32[1]{0}', space=sflag, size = 0x4, scoped, tag = 'scoped memory for forward.1']
    #allocation6 [shape = 'u8[262144]{0}', space=vmem, size = 0x40000, scoped, tag = 'input window, operand 4, single buffered']
    #allocation7 [shape = 'u8[262144]{0}', space=vmem, size = 0x40000, scoped, tag = 'input window, operand 5, single buffered']
    #allocation8 [shape = 's32[1]{0}', space=sflag, size = 0x4, scoped, tag = 'scoped memory for forward.1']
    #allocation9 [shape = 'u8[1024]{0}', space=vmem, size = 0x400, scoped, tag = 'input window, operand 6, single buffered']
    #allocation10 [shape = 'u8[32768]{0}', space=vmem, size = 0x8000, scoped, tag = 'input window, operand 9, single buffered']
    #allocation11 [shape = 's32[1]{0}', space=sflag, size = 0x4, scoped, tag = 'scoped memory for forward.1']
    #allocation12 [shape = 'u8[512]{0}', space=vmem, size = 0x400, scoped, tag = 'input window, operand 10, single buffered']
    #allocation13 [shape = 'u8[32768]{0}', space=vmem, size = 0x8000, scoped, tag = 'input window, operand 11, single buffered']
    #allocation14 [shape = 's32[1]{0}', space=sflag, size = 0x4, scoped, tag = 'scoped memory for forward.1']
    #allocation15 [shape = 'u8[512]{0}', space=vmem, size = 0x400, scoped, tag = 'input window, operand 12, single buffered']
    #allocation16 [shape = 'u8[512]{0}', space=vmem, size = 0x400, scoped, tag = 'input window, operand 14, single buffered']
    #allocation17 [shape = 's32[1]{0}', space=sflag, size = 0x4, scoped, tag = 'scoped memory for forward.1']
    #allocation18 [shape = 'u8[16384]{0}', space=vmem, size = 0x4000, scoped, tag = 'input window, operand 15, single buffered']
    #allocation19 [shape = 'u8[512]{0}', space=vmem, size = 0x400, scoped, tag = 'input window, operand 16, single buffered']
    #allocation20 [shape = 's32[1]{0}', space=sflag, size = 0x4, scoped, tag = 'scoped memory for forward.1']
    #allocation21 [shape = 'u8[16384]{0}', space=vmem, size = 0x4000, scoped, tag = 'input window, operand 17, single buffered']
    #allocation22 [shape = 'u8[65536]{0}', space=vmem, size = 0x10000, scoped, tag = 'input window, operand 18, single buffered']
    #allocation23 [shape = 's32[1]{0}', space=sflag, size = 0x4, scoped, tag = 'scoped memory for forward.1']
    #allocation24 [shape = 'u8[512]{0}', space=vmem, size = 0x400, scoped, tag = 'input window, operand 19, single buffered']
    %25 = vsyncpa [#allocation3], 0
    %26 = vsyncpa [#allocation5], 0
    %27 = vsyncpa [#allocation8], 0
    %28 = vsyncpa [#allocation11], 0
    %29 = vsyncpa [#allocation14], 0
    %30 = vsyncpa [#allocation17], 0
    %31 = vsyncpa [#allocation20], 0
    %32 = vsyncpa [#allocation23], 0
    // Predicated region
    $region2: #{forward.1} parent=1 // pred_check
      _
    $region3: #{forward.1} parent=1 // pred_check_branch
      %34 = sbr.rel (0) target = $region5
    $region4: #{forward.1} parent=1 // pred_region
      _
    $region5: #{forward.1} parent=1 // pred_fallthru
      _
    // Predicated region
    $region6: #{forward.1} parent=1 // pred_check
      _
    $region7: #{forward.1} parent=1 // pred_check_branch
      %36 = sbr.rel (0) target = $region9
    $region8: #{forward.1} parent=1 // pred_region
      _
    $region9: #{forward.1} parent=1 // pred_fallthru
      _
    // Predicated region
    $region10: #{forward.1} parent=1 // pred_check
      _
    $region11: #{forward.1} parent=1 // pred_check_branch
      %38 = sbr.rel (0) target = $region13
    $region12: #{forward.1} parent=1 // pred_region
      %s40 = ssub.s32 64, 64
      %41 = vsyncadd [#allocation3], %s40
      %s43 = sshll.u32 [#allocation2], 4
      %s44 = int_to_ptr.vmem [resolvable:$true] %s43
      %46 = dma.hbm_to_vmem [thread:$0]  %s2, 64, %s44, [#allocation3]
    $region13: #{forward.1} parent=1 // pred_fallthru
      _
    // Predicated region
    $region14: #{forward.1} parent=1 // pred_check
      _
    $region15: #{forward.1} parent=1 // pred_check_branch
      %48 = sbr.rel (0) target = $region17
    $region16: #{forward.1} parent=1 // pred_region
      %s50 = ssub.s32 8192, 8192
      %51 = vsyncadd [#allocation5], %s50
      %s52 = sshll.u32 [#allocation4], 4
      %s53 = int_to_ptr.vmem [resolvable:$true] %s52
      %58 = dma.hbm_to_vmem [thread:$0]  %s3, 8192, %s53, [#allocation5], 128, 128, 8
    $region17: #{forward.1} parent=1 // pred_fallthru
      _
    // Predicated region
    $region18: #{forward.1} parent=1 // pred_check
      _
    $region19: #{forward.1} parent=1 // pred_check_branch
      %60 = sbr.rel (0) target = $region21
    $region20: #{forward.1} parent=1 // pred_region
      %s62 = ssub.s32 8192, 8192
      %63 = vsyncadd [#allocation5], %s62
      %s64 = sshll.u32 [#allocation6], 4
      %s65 = int_to_ptr.vmem [resolvable:$true] %s64
      %70 = dma.hbm_to_vmem [thread:$0]  %s4, 8192, %s65, [#allocation5], 128, 128, 8
    $region21: #{forward.1} parent=1 // pred_fallthru
      _
    // Predicated region
    $region22: #{forward.1} parent=1 // pred_check
      _
    $region23: #{forward.1} parent=1 // pred_check_branch
      %72 = sbr.rel (0) target = $region25
    $region24: #{forward.1} parent=1 // pred_region
      %s74 = ssub.s32 8192, 8192
      %75 = vsyncadd [#allocation8], %s74
      %s76 = sshll.u32 [#allocation7], 4
      %s77 = int_to_ptr.vmem [resolvable:$true] %s76
      %82 = dma.hbm_to_vmem [thread:$0]  %s5, 8192, %s77, [#allocation8], 128, 128, 8
    $region25: #{forward.1} parent=1 // pred_fallthru
      _
    // Predicated region
    $region26: #{forward.1} parent=1 // pred_check
      _
    $region27: #{forward.1} parent=1 // pred_check_branch
      %84 = sbr.rel (0) target = $region29
    $region28: #{forward.1} parent=1 // pred_region
      %s86 = ssub.s32 32, 32
      %87 = vsyncadd [#allocation8], %s86
      %s89 = sshll.u32 [#allocation9], 4
      %s90 = int_to_ptr.vmem [resolvable:$true] %s89
      %92 = dma.hbm_to_vmem [thread:$0]  %s6, 32, %s90, [#allocation8]
    $region29: #{forward.1} parent=1 // pred_fallthru
      _
    // Predicated region
    $region30: #{forward.1} parent=1 // pred_check
      _
    $region31: #{forward.1} parent=1 // pred_check_branch
      %94 = sbr.rel (0) target = $region33
    $region32: #{forward.1} parent=1 // pred_region
      _
    $region33: #{forward.1} parent=1 // pred_fallthru
      _
    // Predicated region
    $region34: #{forward.1} parent=1 // pred_check
      _
    $region35: #{forward.1} parent=1 // pred_check_branch
      %96 = sbr.rel (0) target = $region37
    $region36: #{forward.1} parent=1 // pred_region
      _
    $region37: #{forward.1} parent=1 // pred_fallthru
      _
    // Predicated region
    $region38: #{forward.1} parent=1 // pred_check
      _
    $region39: #{forward.1} parent=1 // pred_check_branch
      %98 = sbr.rel (0) target = $region41
    $region40: #{forward.1} parent=1 // pred_region
      %s100 = ssub.s32 1024, 1024
      %101 = vsyncadd [#allocation11], %s100
      %s102 = sshll.u32 [#allocation10], 4
      %s103 = int_to_ptr.vmem [resolvable:$true] %s102
      %108 = dma.hbm_to_vmem [thread:$0]  %s9, 1024, %s103, [#allocation11], 64, 64, 4
    $region41: #{forward.1} parent=1 // pred_fallthru
      _
    // Predicated region
    $region42: #{forward.1} parent=1 // pred_check
      _
    $region43: #{forward.1} parent=1 // pred_check_branch
      %110 = sbr.rel (0) target = $region45
    $region44: #{forward.1} parent=1 // pred_region
      %s112 = ssub.s32 16, 16
      %113 = vsyncadd [#allocation11], %s112
      %s115 = sshll.u32 [#allocation12], 4
      %s116 = int_to_ptr.vmem [resolvable:$true] %s115
      %118 = dma.hbm_to_vmem [thread:$0]  %s10, 16, %s116, [#allocation11]
    $region45: #{forward.1} parent=1 // pred_fallthru
      _
    // Predicated region
    $region46: #{forward.1} parent=1 // pred_check
      _
    $region47: #{forward.1} parent=1 // pred_check_branch
      %120 = sbr.rel (0) target = $region49
    $region48: #{forward.1} parent=1 // pred_region
      %s122 = ssub.s32 1024, 1024
      %123 = vsyncadd [#allocation14], %s122
      %s124 = sshll.u32 [#allocation13], 4
      %s125 = int_to_ptr.vmem [resolvable:$true] %s124
      %130 = dma.hbm_to_vmem [thread:$0]  %s11, 1024, %s125, [#allocation14], 64, 64, 4
    $region49: #{forward.1} parent=1 // pred_fallthru
      _
    // Predicated region
    $region50: #{forward.1} parent=1 // pred_check
      _
    $region51: #{forward.1} parent=1 // pred_check_branch
      %132 = sbr.rel (0) target = $region53
    $region52: #{forward.1} parent=1 // pred_region
      %s134 = ssub.s32 16, 16
      %135 = vsyncadd [#allocation14], %s134
      %s137 = sshll.u32 [#allocation15], 4
      %s138 = int_to_ptr.vmem [resolvable:$true] %s137
      %140 = dma.hbm_to_vmem [thread:$0]  %s12, 16, %s138, [#allocation14]
    $region53: #{forward.1} parent=1 // pred_fallthru
      _
    // Predicated region
    $region54: #{forward.1} parent=1 // pred_check
      _
    $region55: #{forward.1} parent=1 // pred_check_branch
      %142 = sbr.rel (0) target = $region57
    $region56: #{forward.1} parent=1 // pred_region
      _
    $region57: #{forward.1} parent=1 // pred_fallthru
      _
    // Predicated region
    $region58: #{forward.1} parent=1 // pred_check
      _
    $region59: #{forward.1} parent=1 // pred_check_branch
      %144 = sbr.rel (0) target = $region61
    $region60: #{forward.1} parent=1 // pred_region
      %s146 = ssub.s32 16, 16
      %147 = vsyncadd [#allocation17], %s146
      %s149 = sshll.u32 [#allocation16], 4
      %s150 = int_to_ptr.vmem [resolvable:$true] %s149
      %152 = dma.hbm_to_vmem [thread:$0]  %s14, 16, %s150, [#allocation17]
    $region61: #{forward.1} parent=1 // pred_fallthru
      _
    // Predicated region
    $region62: #{forward.1} parent=1 // pred_check
      _
    $region63: #{forward.1} parent=1 // pred_check_branch
      %154 = sbr.rel (0) target = $region65
    $region64: #{forward.1} parent=1 // pred_region
      %s156 = ssub.s32 512, 512
      %157 = vsyncadd [#allocation17], %s156
      %s158 = sshll.u32 [#allocation18], 4
      %s159 = int_to_ptr.vmem [resolvable:$true] %s158
      %164 = dma.hbm_to_vmem [thread:$0]  %s15, 512, %s159, [#allocation17], 128, 128, 8
    $region65: #{forward.1} parent=1 // pred_fallthru
      _
    // Predicated region
    $region66: #{forward.1} parent=1 // pred_check
      _
    $region67: #{forward.1} parent=1 // pred_check_branch
      %166 = sbr.rel (0) target = $region69
    $region68: #{forward.1} parent=1 // pred_region
      %s168 = ssub.s32 16, 16
      %169 = vsyncadd [#allocation20], %s168
      %s171 = sshll.u32 [#allocation19], 4
      %s172 = int_to_ptr.vmem [resolvable:$true] %s171
      %174 = dma.hbm_to_vmem [thread:$0]  %s16, 16, %s172, [#allocation20]
    $region69: #{forward.1} parent=1 // pred_fallthru
      _
    // Predicated region
    $region70: #{forward.1} parent=1 // pred_check
      _
    $region71: #{forward.1} parent=1 // pred_check_branch
      %176 = sbr.rel (0) target = $region73
    $region72: #{forward.1} parent=1 // pred_region
      %s178 = ssub.s32 512, 512
      %179 = vsyncadd [#allocation20], %s178
      %s180 = sshll.u32 [#allocation21], 4
      %s181 = int_to_ptr.vmem [resolvable:$true] %s180
      %186 = dma.hbm_to_vmem [thread:$0]  %s17, 512, %s181, [#allocation20], 128, 128, 8
    $region73: #{forward.1} parent=1 // pred_fallthru
      _
    // Predicated region
    $region74: #{forward.1} parent=1 // pred_check
      _
    $region75: #{forward.1} parent=1 // pred_check_branch
      %188 = sbr.rel (0) target = $region77
    $region76: #{forward.1} parent=1 // pred_region
      %s190 = ssub.s32 2048, 2048
      %191 = vsyncadd [#allocation23], %s190
      %s192 = sshll.u32 [#allocation22], 4
      %s193 = int_to_ptr.vmem [resolvable:$true] %s192
      %198 = dma.hbm_to_vmem [thread:$0]  %s18, 2048, %s193, [#allocation23], 128, 128, 8
    $region77: #{forward.1} parent=1 // pred_fallthru
      _
    // Predicated region
    $region78: #{forward.1} parent=1 // pred_check
      _
    $region79: #{forward.1} parent=1 // pred_check_branch
      %200 = sbr.rel (0) target = $region81
    $region80: #{forward.1} parent=1 // pred_region
      %s202 = ssub.s32 16, 16
      %203 = vsyncadd [#allocation23], %s202
      %s205 = sshll.u32 [#allocation24], 4
      %s206 = int_to_ptr.vmem [resolvable:$true] %s205
      %208 = dma.hbm_to_vmem [thread:$0]  %s19, 16, %s206, [#allocation23]
    $region81: #{forward.1} parent=1 // pred_fallthru
      _
    // Predicated region
    $region82: #{forward.1} parent=1 // pred_check
      _
    $region83: #{forward.1} parent=1 // pred_check_branch
      %210 = sbr.rel (0) target = $region85
    $region84: #{forward.1} parent=1 // pred_region
      %211 = dma.done [#allocation3], 64
    $region85: #{forward.1} parent=1 // pred_fallthru
      _
    // Predicated region
    $region86: #{forward.1} parent=1 // pred_check
      _
    $region87: #{forward.1} parent=1 // pred_check_branch
      %213 = sbr.rel (0) target = $region89
    $region88: #{forward.1} parent=1 // pred_region
      %214 = dma.done [#allocation5], 8192
    $region89: #{forward.1} parent=1 // pred_fallthru
      _
    // Predicated region
    $region90: #{forward.1} parent=1 // pred_check
      _
    $region91: #{forward.1} parent=1 // pred_check_branch
      %216 = sbr.rel (0) target = $region93
    $region92: #{forward.1} parent=1 // pred_region
      %217 = dma.done [#allocation5], 8192
    $region93: #{forward.1} parent=1 // pred_fallthru
      _
    // Predicated region
    $region94: #{forward.1} parent=1 // pred_check
      _
    $region95: #{forward.1} parent=1 // pred_check_branch
      %219 = sbr.rel (0) target = $region97
    $region96: #{forward.1} parent=1 // pred_region
      %220 = dma.done [#allocation8], 8192
    $region97: #{forward.1} parent=1 // pred_fallthru
      _
    // Predicated region
    $region98: #{forward.1} parent=1 // pred_check
      _
    $region99: #{forward.1} parent=1 // pred_check_branch
      %222 = sbr.rel (0) target = $region101
    $region100: #{forward.1} parent=1 // pred_region
      %223 = dma.done [#allocation8], 32
    $region101: #{forward.1} parent=1 // pred_fallthru
      _
    // Predicated region
    $region102: #{forward.1} parent=1 // pred_check
      _
    $region103: #{forward.1} parent=1 // pred_check_branch
      %225 = sbr.rel (0) target = $region105
    $region104: #{forward.1} parent=1 // pred_region
      %226 = dma.done [#allocation11], 1024
    $region105: #{forward.1} parent=1 // pred_fallthru
      _
    // Predicated region
    $region106: #{forward.1} parent=1 // pred_check
      _
    $region107: #{forward.1} parent=1 // pred_check_branch
      %228 = sbr.rel (0) target = $region109
    $region108: #{forward.1} parent=1 // pred_region
      %229 = dma.done [#allocation11], 16
    $region109: #{forward.1} parent=1 // pred_fallthru
      _
    // Predicated region
    $region110: #{forward.1} parent=1 // pred_check
      _
    $region111: #{forward.1} parent=1 // pred_check_branch
      %231 = sbr.rel (0) target = $region113
    $region112: #{forward.1} parent=1 // pred_region
      %232 = dma.done [#allocation14], 1024
    $region113: #{forward.1} parent=1 // pred_fallthru
      _
    // Predicated region
    $region114: #{forward.1} parent=1 // pred_check
      _
    $region115: #{forward.1} parent=1 // pred_check_branch
      %234 = sbr.rel (0) target = $region117
    $region116: #{forward.1} parent=1 // pred_region
      %235 = dma.done [#allocation14], 16
    $region117: #{forward.1} parent=1 // pred_fallthru
      _
    // Predicated region
    $region118: #{forward.1} parent=1 // pred_check
      _
    $region119: #{forward.1} parent=1 // pred_check_branch
      %237 = sbr.rel (0) target = $region121
    $region120: #{forward.1} parent=1 // pred_region
      %238 = dma.done [#allocation17], 16
    $region121: #{forward.1} parent=1 // pred_fallthru
      _
    // Predicated region
    $region122: #{forward.1} parent=1 // pred_check
      _
    $region123: #{forward.1} parent=1 // pred_check_branch
      %240 = sbr.rel (0) target = $region125
    $region124: #{forward.1} parent=1 // pred_region
      %241 = dma.done [#allocation17], 512
    $region125: #{forward.1} parent=1 // pred_fallthru
      _
    // Predicated region
    $region126: #{forward.1} parent=1 // pred_check
      _
    $region127: #{forward.1} parent=1 // pred_check_branch
      %243 = sbr.rel (0) target = $region129
    $region128: #{forward.1} parent=1 // pred_region
      %244 = dma.done [#allocation20], 16
    $region129: #{forward.1} parent=1 // pred_fallthru
      _
    // Predicated region
    $region130: #{forward.1} parent=1 // pred_check
      _
    $region131: #{forward.1} parent=1 // pred_check_branch
      %246 = sbr.rel (0) target = $region133
    $region132: #{forward.1} parent=1 // pred_region
      %247 = dma.done [#allocation20], 512
    $region133: #{forward.1} parent=1 // pred_fallthru
      _
    // Predicated region
    $region134: #{forward.1} parent=1 // pred_check
      _
    $region135: #{forward.1} parent=1 // pred_check_branch
      %249 = sbr.rel (0) target = $region137
    $region136: #{forward.1} parent=1 // pred_region
      %250 = dma.done [#allocation23], 2048
    $region137: #{forward.1} parent=1 // pred_fallthru
      _
    // Predicated region
    $region138: #{forward.1} parent=1 // pred_check
      _
    $region139: #{forward.1} parent=1 // pred_check_branch
      %252 = sbr.rel (0) target = $region141
    $region140: #{forward.1} parent=1 // pred_region
      %253 = dma.done [#allocation23], 16
    $region141: #{forward.1} parent=1 // pred_fallthru
      _
    %v255 = vld [vmem:[%s0] sm:$0xff]
    %v256 = vld [vmem:[%s0 + $0x8] sm:$0xff]
    %vm259 = vcmask 1045504
    %v260 = vrot.slane %v255, 2
    %v261 = vrot.slane %v256, 2
    %v262 = vsel %vm259, %v260, %v261
    %v264 = vsel %vm259, %v261, 0.0
    %266 = vrot.lane.b32.xlu0 %v262, 16
    %v267 = vpop.permute.xlu0 %266
    %268 = vrot.lane.b32.xlu0 %v264, 16
    %v269 = vpop.permute.xlu0 %268
    %vm272 = vcmask 130048
    %v273 = vsel %vm272, %v255, %v267
    %v274 = vsel %vm272, %v256, %v269
    %v275 = vpack.c.bf16 %v274, %v273
    %v276 = vld [vmem:[%s1] sm:$0xff]
    %v277 = vld [vmem:[%s1 + $0x8] sm:$0xff]
    %v278 = vld [vmem:[%s1 + $0x10] sm:$0xff]
    %v279 = vld [vmem:[%s1 + $0x18] sm:$0xff]
    %v280 = vld [vmem:[%s1 + $0x20] sm:$0xff]
    %v281 = vld [vmem:[%s1 + $0x28] sm:$0xff]
    %v282 = vld [vmem:[%s1 + $0x30] sm:$0xff]
    %v283 = vld [vmem:[%s1 + $0x38] sm:$0xff]
    %v284 = vld [vmem:[#allocation2] sm:$0xf]
    %v286 = vlaneseq
    %v287 = vshrl.u32 %v286, 7
    %v288 = vsub.s32 0, %v287
    %v289 = vrot.slane %v284, %v288
    %v290 = vlaneseq
    %v291 = vshrl.u32 %v290, 7
    %v292 = vsub.s32 1, %v291
    %v293 = vrot.slane %v284, %v292
    %v294 = vlaneseq
    %v295 = vshrl.u32 %v294, 7
    %v296 = vsub.s32 2, %v295
    %v297 = vrot.slane %v284, %v296
    %v298 = vlaneseq
    %v299 = vshrl.u32 %v298, 7
    %v300 = vsub.s32 3, %v299
    %v301 = vrot.slane %v284, %v300
    %v314 = vunpack.c.l.b16 %v276
    %v315 = vunpack.c.h.b16 %v276
    %v316 = vunpack.c.l.b16 %v277
    %v317 = vunpack.c.h.b16 %v277
    %v318 = vunpack.c.l.b16 %v278
    %v319 = vunpack.c.h.b16 %v278
    %v320 = vunpack.c.l.b16 %v279
    %v321 = vunpack.c.h.b16 %v279
    %v322 = vunpack.c.l.b16 %v280
    %v323 = vunpack.c.h.b16 %v280
    %v324 = vunpack.c.l.b16 %v281
    %v325 = vunpack.c.h.b16 %v281
    %v326 = vunpack.c.l.b16 %v282
    %v327 = vunpack.c.h.b16 %v282
    %v328 = vunpack.c.l.b16 %v283
    %v329 = vunpack.c.h.b16 %v283
    %v330 = vpack.c.b16 %v318, %v314
    %v331 = vpack.c.b16 %v319, %v315
    %v332 = vpack.c.b16 %v320, %v316
    %v333 = vpack.c.b16 %v321, %v317
    %v334 = vpack.c.b16 %v326, %v322
    %v335 = vpack.c.b16 %v327, %v323
    %v336 = vpack.c.b16 %v328, %v324
    %v337 = vpack.c.b16 %v329, %v325
    %vm346 = vcmask 261120
    %v348 = vsel %vm346, %v275, 0
    %350 = vmatprep.subr.bf16.mxu0 %v331
    %351 = vmatpush1.bf16.msra.mxu0 %v330
    %352 = vmatprep.subr.bf16.mxu0 %v335
    %353 = vmatpush1.bf16.msra.mxu0 %v334
    %354 = vmatprep.subr.bf16.mxu0 0
    %355 = vmatpush1.bf16.msra.mxu0 0
    %356 = vmatprep.subr.bf16.mxu0 0
    %357 = vmatpush1.bf16.msra.mxu0 0
    %358 = vmatprep.subr.bf16.mxu0 0
    %359 = vmatpush1.bf16.msra.mxu0 0
    %360 = vmatprep.subr.bf16.mxu0 0
    %361 = vmatpush1.bf16.msra.mxu0 0
    %362 = vmatprep.subr.bf16.mxu0 0
    %363 = vmatpush1.bf16.msra.mxu0 0
    %364 = vmatprep.subr.bf16.mxu0 0
    %365 = vmatpush1.bf16.msra.mxu0 0
    %366 = vmatprep.subr.bf16.mxu0 0
    %367 = vmatpush1.bf16.msra.mxu0 0
    %368 = vmatprep.subr.bf16.mxu0 0
    %369 = vmatpush1.bf16.msra.mxu0 0
    %370 = vmatprep.subr.bf16.mxu0 0
    %371 = vmatpush1.bf16.msra.mxu0 0
    %372 = vmatprep.subr.bf16.mxu0 0
    %373 = vmatpush1.bf16.msra.mxu0 0
    %374 = vmatprep.subr.bf16.mxu0 0
    %375 = vmatpush1.bf16.msra.mxu0 0
    %376 = vmatprep.subr.bf16.mxu0 0
    %377 = vmatpush1.bf16.msra.mxu0 0
    %378 = vmatprep.subr.bf16.mxu0 0
    %379 = vmatpush1.bf16.msra.mxu0 0
    %380 = vmatprep.subr.bf16.mxu0 0
    %381 = vmatpush1.bf16.msra.mxu0 0
    %382 = vmatprep.mubr.bf16.mxu0 0
    %383 = vmatmul.mubr.bf16.gmra.mrb[0].mxu0 %v348
    %v384 = vpop.f32.mrb[0].mxu0
    %v385 = vadd.f32 %v289, %v384
    %v386 = vpop.f32.mrb[0].mxu0
    %v387 = vadd.f32 %v293, %v386
    %v388 = vpop.f32.mrb[0].mxu0
    %v389 = vadd.f32 %v289, %v388
    %v390 = vpop.f32.mrb[0].mxu0
    %v391 = vadd.f32 %v293, %v390
    %392 = vdwg.mxu0
    %393 = vmatprep.subr.bf16.mxu0 %v333
    %394 = vmatpush1.bf16.msra.mxu0 %v332
    %395 = vmatprep.subr.bf16.mxu0 %v337
    %396 = vmatpush1.bf16.msra.mxu0 %v336
    %397 = vmatprep.subr.bf16.mxu0 0
    %398 = vmatpush1.bf16.msra.mxu0 0
    %399 = vmatprep.subr.bf16.mxu0 0
    %400 = vmatpush1.bf16.msra.mxu0 0
    %401 = vmatprep.subr.bf16.mxu0 0
    %402 = vmatpush1.bf16.msra.mxu0 0
    %403 = vmatprep.subr.bf16.mxu0 0
    %404 = vmatpush1.bf16.msra.mxu0 0
    %405 = vmatprep.subr.bf16.mxu0 0
    %406 = vmatpush1.bf16.msra.mxu0 0
    %407 = vmatprep.subr.bf16.mxu0 0
    %408 = vmatpush1.bf16.msra.mxu0 0
    %409 = vmatprep.subr.bf16.mxu0 0
    %410 = vmatpush1.bf16.msra.mxu0 0
    %411 = vmatprep.subr.bf16.mxu0 0
    %412 = vmatpush1.bf16.msra.mxu0 0
    %413 = vmatprep.subr.bf16.mxu0 0
    %414 = vmatpush1.bf16.msra.mxu0 0
    %415 = vmatprep.subr.bf16.mxu0 0
    %416 = vmatpush1.bf16.msra.mxu0 0
    %417 = vmatprep.subr.bf16.mxu0 0
    %418 = vmatpush1.bf16.msra.mxu0 0
    %419 = vmatprep.subr.bf16.mxu0 0
    %420 = vmatpush1.bf16.msra.mxu0 0
    %421 = vmatprep.subr.bf16.mxu0 0
    %422 = vmatpush1.bf16.msra.mxu0 0
    %423 = vmatprep.subr.bf16.mxu0 0
    %424 = vmatpush1.bf16.msra.mxu0 0
    %425 = vmatprep.mubr.bf16.mxu0 0
    %426 = vmatmul.mubr.bf16.gmra.mrb[0].mxu0 %v348
    %v427 = vpop.f32.mrb[0].mxu0
    %v428 = vadd.f32 %v297, %v427
    %v429 = vpop.f32.mrb[0].mxu0
    %v430 = vadd.f32 %v301, %v429
    %v431 = vpop.f32.mrb[0].mxu0
    %v432 = vadd.f32 %v297, %v431
    %v433 = vpop.f32.mrb[0].mxu0
    %v434 = vadd.f32 %v301, %v433
    %435 = vdwg.mxu0
    %v436 = vmax.f32 %v385, 0.0
    %v437 = vmax.f32 %v387, 0.0
    %v438 = vmax.f32 %v428, 0.0
    %v439 = vmax.f32 %v430, 0.0
    %v440 = vmax.f32 %v389, 0.0
    %v441 = vmax.f32 %v391, 0.0
    %v442 = vmax.f32 %v432, 0.0
    %v443 = vmax.f32 %v434, 0.0
    %v452 = vrot.slane %v436, 2
    %v453 = vrot.slane %v440, 2
    %v454 = vsel %vm259, %v452, %v453
    %v455 = vrot.slane %v437, 2
    %v456 = vrot.slane %v441, 2
    %v457 = vsel %vm259, %v455, %v456
    %v458 = vrot.slane %v438, 2
    %v459 = vrot.slane %v442, 2
    %v460 = vsel %vm259, %v458, %v459
    %v461 = vrot.slane %v439, 2
    %v462 = vrot.slane %v443, 2
    %v463 = vsel %vm259, %v461, %v462
    %v472 = vsel %vm259, %v453, 0.0
    %v473 = vsel %vm259, %v456, 0.0
    %v474 = vsel %vm259, %v459, 0.0
    %v475 = vsel %vm259, %v462, 0.0
    %v476 = vmax.f32 %v436, %v454
    %v477 = vmax.f32 %v437, %v457
    %v478 = vmax.f32 %v438, %v460
    %v479 = vmax.f32 %v439, %v463
    %v480 = vmax.f32 %v440, %v472
    %v481 = vmax.f32 %v441, %v473
    %v482 = vmax.f32 %v442, %v474
    %v483 = vmax.f32 %v443, %v475
    %v484 = vpack.c.bf16 %v480, %v476
    %v485 = vpack.c.bf16 %v481, %v477
    %v486 = vpack.c.bf16 %v482, %v478
    %v487 = vpack.c.bf16 %v483, %v479
    %v488 = vld [vmem:[#allocation4] sm:$0xff]
    %v489 = vld [vmem:[#allocation4 + $0x8] sm:$0xff]
    %v490 = vld [vmem:[#allocation4 + $0x10] sm:$0xff]
    %v491 = vld [vmem:[#allocation4 + $0x18] sm:$0xff]
    %v492 = vld [vmem:[#allocation4 + $0x20] sm:$0xff]
    %v493 = vld [vmem:[#allocation4 + $0x28] sm:$0xff]
    %v494 = vld [vmem:[#allocation4 + $0x30] sm:$0xff]
    %v495 = vld [vmem:[#allocation4 + $0x38] sm:$0xff]
    %v496 = vld [vmem:[#allocation4 + $0x40] sm:$0xff]
    %v497 = vld [vmem:[#allocation4 + $0x48] sm:$0xff]
    %v498 = vld [vmem:[#allocation4 + $0x50] sm:$0xff]
    %v499 = vld [vmem:[#allocation4 + $0x58] sm:$0xff]
    %v500 = vld [vmem:[#allocation4 + $0x60] sm:$0xff]
    %v501 = vld [vmem:[#allocation4 + $0x68] sm:$0xff]
    %v502 = vld [vmem:[#allocation4 + $0x70] sm:$0xff]
    %v503 = vld [vmem:[#allocation4 + $0x78] sm:$0xff]
    %v504 = vld [vmem:[#allocation4 + $0x80] sm:$0xff]
    %v505 = vld [vmem:[#allocation4 + $0x88] sm:$0xff]
    %v506 = vld [vmem:[#allocation4 + $0x90] sm:$0xff]
    %v507 = vld [vmem:[#allocation4 + $0x98] sm:$0xff]
    %v508 = vld [vmem:[#allocation4 + $0xa0] sm:$0xff]
    %v509 = vld [vmem:[#allocation4 + $0xa8] sm:$0xff]
    %v510 = vld [vmem:[#allocation4 + $0xb0] sm:$0xff]
    %v511 = vld [vmem:[#allocation4 + $0xb8] sm:$0xff]
    %v512 = vld [vmem:[#allocation4 + $0xc0] sm:$0xff]
    %v513 = vld [vmem:[#allocation4 + $0xc8] sm:$0xff]
    %v514 = vld [vmem:[#allocation4 + $0xd0] sm:$0xff]
    %v515 = vld [vmem:[#allocation4 + $0xd8] sm:$0xff]
    %v516 = vld [vmem:[#allocation4 + $0xe0] sm:$0xff]
    %v517 = vld [vmem:[#allocation4 + $0xe8] sm:$0xff]
    %v518 = vld [vmem:[#allocation4 + $0xf0] sm:$0xff]
    %v519 = vld [vmem:[#allocation4 + $0xf8] sm:$0xff]
    %v520 = vld [vmem:[#allocation4 + $0x100] sm:$0xff]
    %v521 = vld [vmem:[#allocation4 + $0x108] sm:$0xff]
    %v522 = vld [vmem:[#allocation4 + $0x110] sm:$0xff]
    %v523 = vld [vmem:[#allocation4 + $0x118] sm:$0xff]
    %v524 = vld [vmem:[#allocation4 + $0x120] sm:$0xff]
    %v525 = vld [vmem:[#allocation4 + $0x128] sm:$0xff]
    %v526 = vld [vmem:[#allocation4 + $0x130] sm:$0xff]
    %v527 = vld [vmem:[#allocation4 + $0x138] sm:$0xff]
    %v528 = vld [vmem:[#allocation4 + $0x140] sm:$0xff]
    %v529 = vld [vmem:[#allocation4 + $0x148] sm:$0xff]
    %v530 = vld [vmem:[#allocation4 + $0x150] sm:$0xff]
    %v531 = vld [vmem:[#allocation4 + $0x158] sm:$0xff]
    %v532 = vld [vmem:[#allocation4 + $0x160] sm:$0xff]
    %v533 = vld [vmem:[#allocation4 + $0x168] sm:$0xff]
    %v534 = vld [vmem:[#allocation4 + $0x170] sm:$0xff]
    %v535 = vld [vmem:[#allocation4 + $0x178] sm:$0xff]
    %v536 = vld [vmem:[#allocation4 + $0x180] sm:$0xff]
    %v537 = vld [vmem:[#allocation4 + $0x188] sm:$0xff]
    %v538 = vld [vmem:[#allocation4 + $0x190] sm:$0xff]
    %v539 = vld [vmem:[#allocation4 + $0x198] sm:$0xff]
    %v540 = vld [vmem:[#allocation4 + $0x1a0] sm:$0xff]
    %v541 = vld [vmem:[#allocation4 + $0x1a8] sm:$0xff]
    %v542 = vld [vmem:[#allocation4 + $0x1b0] sm:$0xff]
    %v543 = vld [vmem:[#allocation4 + $0x1b8] sm:$0xff]
    %v544 = vld [vmem:[#allocation4 + $0x1c0] sm:$0xff]
    %v545 = vld [vmem:[#allocation4 + $0x1c8] sm:$0xff]
    %v546 = vld [vmem:[#allocation4 + $0x1d0] sm:$0xff]
    %v547 = vld [vmem:[#allocation4 + $0x1d8] sm:$0xff]
    %v548 = vld [vmem:[#allocation4 + $0x1e0] sm:$0xff]
    %v549 = vld [vmem:[#allocation4 + $0x1e8] sm:$0xff]
    %v550 = vld [vmem:[#allocation4 + $0x1f0] sm:$0xff]
    %v551 = vld [vmem:[#allocation4 + $0x1f8] sm:$0xff]
    %v616 = vunpack.c.l.b16 %v488
    %v617 = vunpack.c.h.b16 %v488
    %v618 = vunpack.c.l.b16 %v489
    %v619 = vunpack.c.h.b16 %v489
    %v620 = vunpack.c.l.b16 %v490
    %v621 = vunpack.c.h.b16 %v490
    %v622 = vunpack.c.l.b16 %v491
    %v623 = vunpack.c.h.b16 %v491
    %v624 = vunpack.c.l.b16 %v492
    %v625 = vunpack.c.h.b16 %v492
    %v626 = vunpack.c.l.b16 %v493
    %v627 = vunpack.c.h.b16 %v493
    %v628 = vunpack.c.l.b16 %v494
    %v629 = vunpack.c.h.b16 %v494
    %v630 = vunpack.c.l.b16 %v495
    %v631 = vunpack.c.h.b16 %v495
    %v632 = vunpack.c.l.b16 %v496
    %v633 = vunpack.c.h.b16 %v496
    %v634 = vunpack.c.l.b16 %v497
    %v635 = vunpack.c.h.b16 %v497
    %v636 = vunpack.c.l.b16 %v498
    %v637 = vunpack.c.h.b16 %v498
    %v638 = vunpack.c.l.b16 %v499
    %v639 = vunpack.c.h.b16 %v499
    %v640 = vunpack.c.l.b16 %v500
    %v641 = vunpack.c.h.b16 %v500
    %v642 = vunpack.c.l.b16 %v501
    %v643 = vunpack.c.h.b16 %v501
    %v644 = vunpack.c.l.b16 %v502
    %v645 = vunpack.c.h.b16 %v502
    %v646 = vunpack.c.l.b16 %v503
    %v647 = vunpack.c.h.b16 %v503
    %v648 = vunpack.c.l.b16 %v504
    %v649 = vunpack.c.h.b16 %v504
    %v650 = vunpack.c.l.b16 %v505
    %v651 = vunpack.c.h.b16 %v505
    %v652 = vunpack.c.l.b16 %v506
    %v653 = vunpack.c.h.b16 %v506
    %v654 = vunpack.c.l.b16 %v507
    %v655 = vunpack.c.h.b16 %v507
    %v656 = vunpack.c.l.b16 %v508
    %v657 = vunpack.c.h.b16 %v508
    %v658 = vunpack.c.l.b16 %v509
    %v659 = vunpack.c.h.b16 %v509
    %v660 = vunpack.c.l.b16 %v510
    %v661 = vunpack.c.h.b16 %v510
    %v662 = vunpack.c.l.b16 %v511
    %v663 = vunpack.c.h.b16 %v511
    %v664 = vunpack.c.l.b16 %v512
    %v665 = vunpack.c.h.b16 %v512
    %v666 = vunpack.c.l.b16 %v513
    %v667 = vunpack.c.h.b16 %v513
    %v668 = vunpack.c.l.b16 %v514
    %v669 = vunpack.c.h.b16 %v514
    %v670 = vunpack.c.l.b16 %v515
    %v671 = vunpack.c.h.b16 %v515
    %v672 = vunpack.c.l.b16 %v516
    %v673 = vunpack.c.h.b16 %v516
    %v674 = vunpack.c.l.b16 %v517
    %v675 = vunpack.c.h.b16 %v517
    %v676 = vunpack.c.l.b16 %v518
    %v677 = vunpack.c.h.b16 %v518
    %v678 = vunpack.c.l.b16 %v519
    %v679 = vunpack.c.h.b16 %v519
    %v680 = vunpack.c.l.b16 %v520
    %v681 = vunpack.c.h.b16 %v520
    %v682 = vunpack.c.l.b16 %v521
    %v683 = vunpack.c.h.b16 %v521
    %v684 = vunpack.c.l.b16 %v522
    %v685 = vunpack.c.h.b16 %v522
    %v686 = vunpack.c.l.b16 %v523
    %v687 = vunpack.c.h.b16 %v523
    %v688 = vunpack.c.l.b16 %v524
    %v689 = vunpack.c.h.b16 %v524
    %v690 = vunpack.c.l.b16 %v525
    %v691 = vunpack.c.h.b16 %v525
    %v692 = vunpack.c.l.b16 %v526
    %v693 = vunpack.c.h.b16 %v526
    %v694 = vunpack.c.l.b16 %v527
    %v695 = vunpack.c.h.b16 %v527
    %v696 = vunpack.c.l.b16 %v528
    %v697 = vunpack.c.h.b16 %v528
    %v698 = vunpack.c.l.b16 %v529
    %v699 = vunpack.c.h.b16 %v529
    %v700 = vunpack.c.l.b16 %v530
    %v701 = vunpack.c.h.b16 %v530
    %v702 = vunpack.c.l.b16 %v531
    %v703 = vunpack.c.h.b16 %v531
    %v704 = vunpack.c.l.b16 %v532
    %v705 = vunpack.c.h.b16 %v532
    %v706 = vunpack.c.l.b16 %v533
    %v707 = vunpack.c.h.b16 %v533
    %v708 = vunpack.c.l.b16 %v534
    %v709 = vunpack.c.h.b16 %v534
    %v710 = vunpack.c.l.b16 %v535
    %v711 = vunpack.c.h.b16 %v535
    %v712 = vunpack.c.l.b16 %v536
    %v713 = vunpack.c.h.b16 %v536
    %v714 = vunpack.c.l.b16 %v537
    %v715 = vunpack.c.h.b16 %v537
    %v716 = vunpack.c.l.b16 %v538
    %v717 = vunpack.c.h.b16 %v538
    %v718 = vunpack.c.l.b16 %v539
    %v719 = vunpack.c.h.b16 %v539
    %v720 = vunpack.c.l.b16 %v540
    %v721 = vunpack.c.h.b16 %v540
    %v722 = vunpack.c.l.b16 %v541
    %v723 = vunpack.c.h.b16 %v541
    %v724 = vunpack.c.l.b16 %v542
    %v725 = vunpack.c.h.b16 %v542
    %v726 = vunpack.c.l.b16 %v543
    %v727 = vunpack.c.h.b16 %v543
    %v728 = vunpack.c.l.b16 %v544
    %v729 = vunpack.c.h.b16 %v544
    %v730 = vunpack.c.l.b16 %v545
    %v731 = vunpack.c.h.b16 %v545
    %v732 = vunpack.c.l.b16 %v546
    %v733 = vunpack.c.h.b16 %v546
    %v734 = vunpack.c.l.b16 %v547
    %v735 = vunpack.c.h.b16 %v547
    %v736 = vunpack.c.l.b16 %v548
    %v737 = vunpack.c.h.b16 %v548
    %v738 = vunpack.c.l.b16 %v549
    %v739 = vunpack.c.h.b16 %v549
    %v740 = vunpack.c.l.b16 %v550
    %v741 = vunpack.c.h.b16 %v550
    %v742 = vunpack.c.l.b16 %v551
    %v743 = vunpack.c.h.b16 %v551
    %v744 = vpack.c.b16 %v618, %v616
    %v745 = vpack.c.b16 %v619, %v617
    %v746 = vpack.c.b16 %v622, %v620
    %v747 = vpack.c.b16 %v623, %v621
    %v748 = vpack.c.b16 %v626, %v624
    %v749 = vpack.c.b16 %v627, %v625
    %v750 = vpack.c.b16 %v630, %v628
    %v751 = vpack.c.b16 %v631, %v629
    %v752 = vpack.c.b16 %v634, %v632
    %v753 = vpack.c.b16 %v635, %v633
    %v754 = vpack.c.b16 %v638, %v636
    %v755 = vpack.c.b16 %v639, %v637
    %v756 = vpack.c.b16 %v642, %v640
    %v757 = vpack.c.b16 %v643, %v641
    %v758 = vpack.c.b16 %v646, %v644
    %v759 = vpack.c.b16 %v647, %v645
    %v760 = vpack.c.b16 %v650, %v648
    %v761 = vpack.c.b16 %v651, %v649
    %v762 = vpack.c.b16 %v654, %v652
    %v763 = vpack.c.b16 %v655, %v653
    %v764 = vpack.c.b16 %v658, %v656
    %v765 = vpack.c.b16 %v659, %v657
    %v766 = vpack.c.b16 %v662, %v660
    %v767 = vpack.c.b16 %v663, %v661
    %v768 = vpack.c.b16 %v666, %v664
    %v769 = vpack.c.b16 %v667, %v665
    %v770 = vpack.c.b16 %v670, %v668
    %v771 = vpack.c.b16 %v671, %v669
    %v772 = vpack.c.b16 %v674, %v672
    %v773 = vpack.c.b16 %v675, %v673
    %v774 = vpack.c.b16 %v678, %v676
    %v775 = vpack.c.b16 %v679, %v677
    %v776 = vpack.c.b16 %v682, %v680
    %v777 = vpack.c.b16 %v683, %v681
    %v778 = vpack.c.b16 %v686, %v684
    %v779 = vpack.c.b16 %v687, %v685
    %v780 = vpack.c.b16 %v690, %v688
    %v781 = vpack.c.b16 %v691, %v689
    %v782 = vpack.c.b16 %v694, %v692
    %v783 = vpack.c.b16 %v695, %v693
    %v784 = vpack.c.b16 %v698, %v696
    %v785 = vpack.c.b16 %v699, %v697
    %v786 = vpack.c.b16 %v702, %v700
    %v787 = vpack.c.b16 %v703, %v701
    %v788 = vpack.c.b16 %v706, %v704
    %v789 = vpack.c.b16 %v707, %v705
    %v790 = vpack.c.b16 %v710, %v708
    %v791 = vpack.c.b16 %v711, %v709
    %v792 = vpack.c.b16 %v714, %v712
    %v793 = vpack.c.b16 %v715, %v713
    %v794 = vpack.c.b16 %v718, %v716
    %v795 = vpack.c.b16 %v719, %v717
    %v796 = vpack.c.b16 %v722, %v720
    %v797 = vpack.c.b16 %v723, %v721
    %v798 = vpack.c.b16 %v726, %v724
    %v799 = vpack.c.b16 %v727, %v725
    %v800 = vpack.c.b16 %v730, %v728
    %v801 = vpack.c.b16 %v731, %v729
    %v802 = vpack.c.b16 %v734, %v732
    %v803 = vpack.c.b16 %v735, %v733
    %v804 = vpack.c.b16 %v738, %v736
    %v805 = vpack.c.b16 %v739, %v737
    %v806 = vpack.c.b16 %v742, %v740
    %v807 = vpack.c.b16 %v743, %v741
    %872 = vmatprep.subr.bf16.mxu0 %v745
    %873 = vmatpush1.bf16.msra.mxu0 %v744
    %874 = vmatprep.subr.bf16.mxu0 %v747
    %875 = vmatpush1.bf16.msra.mxu0 %v746
    %876 = vmatprep.subr.bf16.mxu0 %v749
    %877 = vmatpush1.bf16.msra.mxu0 %v748
    %878 = vmatprep.subr.bf16.mxu0 %v751
    %879 = vmatpush1.bf16.msra.mxu0 %v750
    %880 = vmatprep.subr.bf16.mxu0 %v753
    %881 = vmatpush1.bf16.msra.mxu0 %v752
    %882 = vmatprep.subr.bf16.mxu0 %v755
    %883 = vmatpush1.bf16.msra.mxu0 %v754
    %884 = vmatprep.subr.bf16.mxu0 %v757
    %885 = vmatpush1.bf16.msra.mxu0 %v756
    %886 = vmatprep.subr.bf16.mxu0 %v759
    %887 = vmatpush1.bf16.msra.mxu0 %v758
    %888 = vmatprep.subr.bf16.mxu0 %v761
    %889 = vmatpush1.bf16.msra.mxu0 %v760
    %890 = vmatprep.subr.bf16.mxu0 %v763
    %891 = vmatpush1.bf16.msra.mxu0 %v762
    %892 = vmatprep.subr.bf16.mxu0 %v765
    %893 = vmatpush1.bf16.msra.mxu0 %v764
    %894 = vmatprep.subr.bf16.mxu0 %v767
    %895 = vmatpush1.bf16.msra.mxu0 %v766
    %896 = vmatprep.subr.bf16.mxu0 %v769
    %897 = vmatpush1.bf16.msra.mxu0 %v768
    %898 = vmatprep.subr.bf16.mxu0 %v771
    %899 = vmatpush1.bf16.msra.mxu0 %v770
    %900 = vmatprep.subr.bf16.mxu0 %v773
    %901 = vmatpush1.bf16.msra.mxu0 %v772
    %902 = vmatprep.subr.bf16.mxu0 %v775
    %903 = vmatpush1.bf16.msra.mxu0 %v774
    %904 = vmatprep.mubr.bf16.mxu0 %v485
    %905 = vmatmul.mubr.bf16.gmra.mrb[0].mxu0 %v484
    %v906 = vpop.f32.mrb[0].mxu0
    %v907 = vadd.f32 0.0, %v906
    %v908 = vpop.f32.mrb[0].mxu0
    %v909 = vadd.f32 0.0, %v908
    %v910 = vpop.f32.mrb[0].mxu0
    %v911 = vadd.f32 0.0, %v910
    %v912 = vpop.f32.mrb[0].mxu0
    %v913 = vadd.f32 0.0, %v912
    %914 = vdwg.mxu0
    %915 = vmatprep.subr.bf16.mxu0 %v777
    %916 = vmatpush1.bf16.msra.mxu0 %v776
    %917 = vmatprep.subr.bf16.mxu0 %v779
    %918 = vmatpush1.bf16.msra.mxu0 %v778
    %919 = vmatprep.subr.bf16.mxu0 %v781
    %920 = vmatpush1.bf16.msra.mxu0 %v780
    %921 = vmatprep.subr.bf16.mxu0 %v783
    %922 = vmatpush1.bf16.msra.mxu0 %v782
    %923 = vmatprep.subr.bf16.mxu0 %v785
    %924 = vmatpush1.bf16.msra.mxu0 %v784
    %925 = vmatprep.subr.bf16.mxu0 %v787
    %926 = vmatpush1.bf16.msra.mxu0 %v786
    %927 = vmatprep.subr.bf16.mxu0 %v789
    %928 = vmatpush1.bf16.msra.mxu0 %v788
    %929 = vmatprep.subr.bf16.mxu0 %v791
    %930 = vmatpush1.bf16.msra.mxu0 %v790
    %931 = vmatprep.subr.bf16.mxu0 %v793
    %932 = vmatpush1.bf16.msra.mxu0 %v792
    %933 = vmatprep.subr.bf16.mxu0 %v795
    %934 = vmatpush1.bf16.msra.mxu0 %v794
    %935 = vmatprep.subr.bf16.mxu0 %v797
    %936 = vmatpush1.bf16.msra.mxu0 %v796
    %937 = vmatprep.subr.bf16.mxu0 %v799
    %938 = vmatpush1.bf16.msra.mxu0 %v798
    %939 = vmatprep.subr.bf16.mxu0 %v801
    %940 = vmatpush1.bf16.msra.mxu0 %v800
    %941 = vmatprep.subr.bf16.mxu0 %v803
    %942 = vmatpush1.bf16.msra.mxu0 %v802
    %943 = vmatprep.subr.bf16.mxu0 %v805
    %944 = vmatpush1.bf16.msra.mxu0 %v804
    %945 = vmatprep.subr.bf16.mxu0 %v807
    %946 = vmatpush1.bf16.msra.mxu0 %v806
    %947 = vmatprep.mubr.bf16.mxu0 %v487
    %948 = vmatmul.mubr.bf16.gmra.mrb[0].mxu0 %v486
    %v949 = vpop.f32.mrb[0].mxu0
    %v950 = vadd.f32 %v907, %v949
    %v951 = vpop.f32.mrb[0].mxu0
    %v952 = vadd.f32 %v909, %v951
    %v953 = vpop.f32.mrb[0].mxu0
    %v954 = vadd.f32 %v911, %v953
    %v955 = vpop.f32.mrb[0].mxu0
    %v956 = vadd.f32 %v913, %v955
    %957 = vdwg.mxu0
    %v958 = vld [vmem:[#allocation6] sm:$0xff]
    %v959 = vld [vmem:[#allocation6 + $0x8] sm:$0xff]
    %v960 = vld [vmem:[#allocation6 + $0x10] sm:$0xff]
    %v961 = vld [vmem:[#allocation6 + $0x18] sm:$0xff]
    %v962 = vld [vmem:[#allocation6 + $0x20] sm:$0xff]
    %v963 = vld [vmem:[#allocation6 + $0x28] sm:$0xff]
    %v964 = vld [vmem:[#allocation6 + $0x30] sm:$0xff]
    %v965 = vld [vmem:[#allocation6 + $0x38] sm:$0xff]
    %v966 = vld [vmem:[#allocation6 + $0x40] sm:$0xff]
    %v967 = vld [vmem:[#allocation6 + $0x48] sm:$0xff]
    %v968 = vld [vmem:[#allocation6 + $0x50] sm:$0xff]
    %v969 = vld [vmem:[#allocation6 + $0x58] sm:$0xff]
    %v970 = vld [vmem:[#allocation6 + $0x60] sm:$0xff]
    %v971 = vld [vmem:[#allocation6 + $0x68] sm:$0xff]
    %v972 = vld [vmem:[#allocation6 + $0x70] sm:$0xff]
    %v973 = vld [vmem:[#allocation6 + $0x78] sm:$0xff]
    %v974 = vld [vmem:[#allocation6 + $0x80] sm:$0xff]
    %v975 = vld [vmem:[#allocation6 + $0x88] sm:$0xff]
    %v976 = vld [vmem:[#allocation6 + $0x90] sm:$0xff]
    %v977 = vld [vmem:[#allocation6 + $0x98] sm:$0xff]
    %v978 = vld [vmem:[#allocation6 + $0xa0] sm:$0xff]
    %v979 = vld [vmem:[#allocation6 + $0xa8] sm:$0xff]
    %v980 = vld [vmem:[#allocation6 + $0xb0] sm:$0xff]
    %v981 = vld [vmem:[#allocation6 + $0xb8] sm:$0xff]
    %v982 = vld [vmem:[#allocation6 + $0xc0] sm:$0xff]
    %v983 = vld [vmem:[#allocation6 + $0xc8] sm:$0xff]
    %v984 = vld [vmem:[#allocation6 + $0xd0] sm:$0xff]
    %v985 = vld [vmem:[#allocation6 + $0xd8] sm:$0xff]
    %v986 = vld [vmem:[#allocation6 + $0xe0] sm:$0xff]
    %v987 = vld [vmem:[#allocation6 + $0xe8] sm:$0xff]
    %v988 = vld [vmem:[#allocation6 + $0xf0] sm:$0xff]
    %v989 = vld [vmem:[#allocation6 + $0xf8] sm:$0xff]
    %v990 = vld [vmem:[#allocation6 + $0x100] sm:$0xff]
    %v991 = vld [vmem:[#allocation6 + $0x108] sm:$0xff]
    %v992 = vld [vmem:[#allocation6 + $0x110] sm:$0xff]
    %v993 = vld [vmem:[#allocation6 + $0x118] sm:$0xff]
    %v994 = vld [vmem:[#allocation6 + $0x120] sm:$0xff]
    %v995 = vld [vmem:[#allocation6 + $0x128] sm:$0xff]
    %v996 = vld [vmem:[#allocation6 + $0x130] sm:$0xff]
    %v997 = vld [vmem:[#allocation6 + $0x138] sm:$0xff]
    %v998 = vld [vmem:[#allocation6 + $0x140] sm:$0xff]
    %v999 = vld [vmem:[#allocation6 + $0x148] sm:$0xff]
    %v1000 = vld [vmem:[#allocation6 + $0x150] sm:$0xff]
    %v1001 = vld [vmem:[#allocation6 + $0x158] sm:$0xff]
    %v1002 = vld [vmem:[#allocation6 + $0x160] sm:$0xff]
    %v1003 = vld [vmem:[#allocation6 + $0x168] sm:$0xff]
    %v1004 = vld [vmem:[#allocation6 + $0x170] sm:$0xff]
    %v1005 = vld [vmem:[#allocation6 + $0x178] sm:$0xff]
    %v1006 = vld [vmem:[#allocation6 + $0x180] sm:$0xff]
    %v1007 = vld [vmem:[#allocation6 + $0x188] sm:$0xff]
    %v1008 = vld [vmem:[#allocation6 + $0x190] sm:$0xff]
    %v1009 = vld [vmem:[#allocation6 + $0x198] sm:$0xff]
    %v1010 = vld [vmem:[#allocation6 + $0x1a0] sm:$0xff]
    %v1011 = vld [vmem:[#allocation6 + $0x1a8] sm:$0xff]
    %v1012 = vld [vmem:[#allocation6 + $0x1b0] sm:$0xff]
    %v1013 = vld [vmem:[#allocation6 + $0x1b8] sm:$0xff]
    %v1014 = vld [vmem:[#allocation6 + $0x1c0] sm:$0xff]
    %v1015 = vld [vmem:[#allocation6 + $0x1c8] sm:$0xff]
    %v1016 = vld [vmem:[#allocation6 + $0x1d0] sm:$0xff]
    %v1017 = vld [vmem:[#allocation6 + $0x1d8] sm:$0xff]
    %v1018 = vld [vmem:[#allocation6 + $0x1e0] sm:$0xff]
    %v1019 = vld [vmem:[#allocation6 + $0x1e8] sm:$0xff]
    %v1020 = vld [vmem:[#allocation6 + $0x1f0] sm:$0xff]
    %v1021 = vld [vmem:[#allocation6 + $0x1f8] sm:$0xff]
    %v1086 = vunpack.c.l.b16 %v958
    %v1087 = vunpack.c.h.b16 %v958
    %v1088 = vunpack.c.l.b16 %v959
    %v1089 = vunpack.c.h.b16 %v959
    %v1090 = vunpack.c.l.b16 %v960
    %v1091 = vunpack.c.h.b16 %v960
    %v1092 = vunpack.c.l.b16 %v961
    %v1093 = vunpack.c.h.b16 %v961
    %v1094 = vunpack.c.l.b16 %v962
    %v1095 = vunpack.c.h.b16 %v962
    %v1096 = vunpack.c.l.b16 %v963
    %v1097 = vunpack.c.h.b16 %v963
    %v1098 = vunpack.c.l.b16 %v964
    %v1099 = vunpack.c.h.b16 %v964
    %v1100 = vunpack.c.l.b16 %v965
    %v1101 = vunpack.c.h.b16 %v965
    %v1102 = vunpack.c.l.b16 %v966
    %v1103 = vunpack.c.h.b16 %v966
    %v1104 = vunpack.c.l.b16 %v967
    %v1105 = vunpack.c.h.b16 %v967
    %v1106 = vunpack.c.l.b16 %v968
    %v1107 = vunpack.c.h.b16 %v968
    %v1108 = vunpack.c.l.b16 %v969
    %v1109 = vunpack.c.h.b16 %v969
    %v1110 = vunpack.c.l.b16 %v970
    %v1111 = vunpack.c.h.b16 %v970
    %v1112 = vunpack.c.l.b16 %v971
    %v1113 = vunpack.c.h.b16 %v971
    %v1114 = vunpack.c.l.b16 %v972
    %v1115 = vunpack.c.h.b16 %v972
    %v1116 = vunpack.c.l.b16 %v973
    %v1117 = vunpack.c.h.b16 %v973
    %v1118 = vunpack.c.l.b16 %v974
    %v1119 = vunpack.c.h.b16 %v974
    %v1120 = vunpack.c.l.b16 %v975
    %v1121 = vunpack.c.h.b16 %v975
    %v1122 = vunpack.c.l.b16 %v976
    %v1123 = vunpack.c.h.b16 %v976
    %v1124 = vunpack.c.l.b16 %v977
    %v1125 = vunpack.c.h.b16 %v977
    %v1126 = vunpack.c.l.b16 %v978
    %v1127 = vunpack.c.h.b16 %v978
    %v1128 = vunpack.c.l.b16 %v979
    %v1129 = vunpack.c.h.b16 %v979
    %v1130 = vunpack.c.l.b16 %v980
    %v1131 = vunpack.c.h.b16 %v980
    %v1132 = vunpack.c.l.b16 %v981
    %v1133 = vunpack.c.h.b16 %v981
    %v1134 = vunpack.c.l.b16 %v982
    %v1135 = vunpack.c.h.b16 %v982
    %v1136 = vunpack.c.l.b16 %v983
    %v1137 = vunpack.c.h.b16 %v983
    %v1138 = vunpack.c.l.b16 %v984
    %v1139 = vunpack.c.h.b16 %v984
    %v1140 = vunpack.c.l.b16 %v985
    %v1141 = vunpack.c.h.b16 %v985
    %v1142 = vunpack.c.l.b16 %v986
    %v1143 = vunpack.c.h.b16 %v986
    %v1144 = vunpack.c.l.b16 %v987
    %v1145 = vunpack.c.h.b16 %v987
    %v1146 = vunpack.c.l.b16 %v988
    %v1147 = vunpack.c.h.b16 %v988
    %v1148 = vunpack.c.l.b16 %v989
    %v1149 = vunpack.c.h.b16 %v989
    %v1150 = vunpack.c.l.b16 %v990
    %v1151 = vunpack.c.h.b16 %v990
    %v1152 = vunpack.c.l.b16 %v991
    %v1153 = vunpack.c.h.b16 %v991
    %v1154 = vunpack.c.l.b16 %v992
    %v1155 = vunpack.c.h.b16 %v992
    %v1156 = vunpack.c.l.b16 %v993
    %v1157 = vunpack.c.h.b16 %v993
    %v1158 = vunpack.c.l.b16 %v994
    %v1159 = vunpack.c.h.b16 %v994
    %v1160 = vunpack.c.l.b16 %v995
    %v1161 = vunpack.c.h.b16 %v995
    %v1162 = vunpack.c.l.b16 %v996
    %v1163 = vunpack.c.h.b16 %v996
    %v1164 = vunpack.c.l.b16 %v997
    %v1165 = vunpack.c.h.b16 %v997
    %v1166 = vunpack.c.l.b16 %v998
    %v1167 = vunpack.c.h.b16 %v998
    %v1168 = vunpack.c.l.b16 %v999
    %v1169 = vunpack.c.h.b16 %v999
    %v1170 = vunpack.c.l.b16 %v1000
    %v1171 = vunpack.c.h.b16 %v1000
    %v1172 = vunpack.c.l.b16 %v1001
    %v1173 = vunpack.c.h.b16 %v1001
    %v1174 = vunpack.c.l.b16 %v1002
    %v1175 = vunpack.c.h.b16 %v1002
    %v1176 = vunpack.c.l.b16 %v1003
    %v1177 = vunpack.c.h.b16 %v1003
    %v1178 = vunpack.c.l.b16 %v1004
    %v1179 = vunpack.c.h.b16 %v1004
    %v1180 = vunpack.c.l.b16 %v1005
    %v1181 = vunpack.c.h.b16 %v1005
    %v1182 = vunpack.c.l.b16 %v1006
    %v1183 = vunpack.c.h.b16 %v1006
    %v1184 = vunpack.c.l.b16 %v1007
    %v1185 = vunpack.c.h.b16 %v1007
    %v1186 = vunpack.c.l.b16 %v1008
    %v1187 = vunpack.c.h.b16 %v1008
    %v1188 = vunpack.c.l.b16 %v1009
    %v1189 = vunpack.c.h.b16 %v1009
    %v1190 = vunpack.c.l.b16 %v1010
    %v1191 = vunpack.c.h.b16 %v1010
    %v1192 = vunpack.c.l.b16 %v1011
    %v1193 = vunpack.c.h.b16 %v1011
    %v1194 = vunpack.c.l.b16 %v1012
    %v1195 = vunpack.c.h.b16 %v1012
    %v1196 = vunpack.c.l.b16 %v1013
    %v1197 = vunpack.c.h.b16 %v1013
    %v1198 = vunpack.c.l.b16 %v1014
    %v1199 = vunpack.c.h.b16 %v1014
    %v1200 = vunpack.c.l.b16 %v1015
    %v1201 = vunpack.c.h.b16 %v1015
    %v1202 = vunpack.c.l.b16 %v1016
    %v1203 = vunpack.c.h.b16 %v1016
    %v1204 = vunpack.c.l.b16 %v1017
    %v1205 = vunpack.c.h.b16 %v1017
    %v1206 = vunpack.c.l.b16 %v1018
    %v1207 = vunpack.c.h.b16 %v1018
    %v1208 = vunpack.c.l.b16 %v1019
    %v1209 = vunpack.c.h.b16 %v1019
    %v1210 = vunpack.c.l.b16 %v1020
    %v1211 = vunpack.c.h.b16 %v1020
    %v1212 = vunpack.c.l.b16 %v1021
    %v1213 = vunpack.c.h.b16 %v1021
    %v1214 = vpack.c.b16 %v1088, %v1086
    %v1215 = vpack.c.b16 %v1089, %v1087
    %v1216 = vpack.c.b16 %v1092, %v1090
    %v1217 = vpack.c.b16 %v1093, %v1091
    %v1218 = vpack.c.b16 %v1096, %v1094
    %v1219 = vpack.c.b16 %v1097, %v1095
    %v1220 = vpack.c.b16 %v1100, %v1098
    %v1221 = vpack.c.b16 %v1101, %v1099
    %v1222 = vpack.c.b16 %v1104, %v1102
    %v1223 = vpack.c.b16 %v1105, %v1103
    %v1224 = vpack.c.b16 %v1108, %v1106
    %v1225 = vpack.c.b16 %v1109, %v1107
    %v1226 = vpack.c.b16 %v1112, %v1110
    %v1227 = vpack.c.b16 %v1113, %v1111
    %v1228 = vpack.c.b16 %v1116, %v1114
    %v1229 = vpack.c.b16 %v1117, %v1115
    %v1230 = vpack.c.b16 %v1120, %v1118
    %v1231 = vpack.c.b16 %v1121, %v1119
    %v1232 = vpack.c.b16 %v1124, %v1122
    %v1233 = vpack.c.b16 %v1125, %v1123
    %v1234 = vpack.c.b16 %v1128, %v1126
    %v1235 = vpack.c.b16 %v1129, %v1127
    %v1236 = vpack.c.b16 %v1132, %v1130
    %v1237 = vpack.c.b16 %v1133, %v1131
    %v1238 = vpack.c.b16 %v1136, %v1134
    %v1239 = vpack.c.b16 %v1137, %v1135
    %v1240 = vpack.c.b16 %v1140, %v1138
    %v1241 = vpack.c.b16 %v1141, %v1139
    %v1242 = vpack.c.b16 %v1144, %v1142
    %v1243 = vpack.c.b16 %v1145, %v1143
    %v1244 = vpack.c.b16 %v1148, %v1146
    %v1245 = vpack.c.b16 %v1149, %v1147
    %v1246 = vpack.c.b16 %v1152, %v1150
    %v1247 = vpack.c.b16 %v1153, %v1151
    %v1248 = vpack.c.b16 %v1156, %v1154
    %v1249 = vpack.c.b16 %v1157, %v1155
    %v1250 = vpack.c.b16 %v1160, %v1158
    %v1251 = vpack.c.b16 %v1161, %v1159
    %v1252 = vpack.c.b16 %v1164, %v1162
    %v1253 = vpack.c.b16 %v1165, %v1163
    %v1254 = vpack.c.b16 %v1168, %v1166
    %v1255 = vpack.c.b16 %v1169, %v1167
    %v1256 = vpack.c.b16 %v1172, %v1170
    %v1257 = vpack.c.b16 %v1173, %v1171
    %v1258 = vpack.c.b16 %v1176, %v1174
    %v1259 = vpack.c.b16 %v1177, %v1175
    %v1260 = vpack.c.b16 %v1180, %v1178
    %v1261 = vpack.c.b16 %v1181, %v1179
    %v1262 = vpack.c.b16 %v1184, %v1182
    %v1263 = vpack.c.b16 %v1185, %v1183
    %v1264 = vpack.c.b16 %v1188, %v1186
    %v1265 = vpack.c.b16 %v1189, %v1187
    %v1266 = vpack.c.b16 %v1192, %v1190
    %v1267 = vpack.c.b16 %v1193, %v1191
    %v1268 = vpack.c.b16 %v1196, %v1194
    %v1269 = vpack.c.b16 %v1197, %v1195
    %v1270 = vpack.c.b16 %v1200, %v1198
    %v1271 = vpack.c.b16 %v1201, %v1199
    %v1272 = vpack.c.b16 %v1204, %v1202
    %v1273 = vpack.c.b16 %v1205, %v1203
    %v1274 = vpack.c.b16 %v1208, %v1206
    %v1275 = vpack.c.b16 %v1209, %v1207
    %v1276 = vpack.c.b16 %v1212, %v1210
    %v1277 = vpack.c.b16 %v1213, %v1211
    %1342 = vmatprep.subr.bf16.mxu0 %v1215
    %1343 = vmatpush1.bf16.msra.mxu0 %v1214
    %1344 = vmatprep.subr.bf16.mxu0 %v1217
    %1345 = vmatpush1.bf16.msra.mxu0 %v1216
    %1346 = vmatprep.subr.bf16.mxu0 %v1219
    %1347 = vmatpush1.bf16.msra.mxu0 %v1218
    %1348 = vmatprep.subr.bf16.mxu0 %v1221
    %1349 = vmatpush1.bf16.msra.mxu0 %v1220
    %1350 = vmatprep.subr.bf16.mxu0 %v1223
    %1351 = vmatpush1.bf16.msra.mxu0 %v1222
    %1352 = vmatprep.subr.bf16.mxu0 %v1225
    %1353 = vmatpush1.bf16.msra.mxu0 %v1224
    %1354 = vmatprep.subr.bf16.mxu0 %v1227
    %1355 = vmatpush1.bf16.msra.mxu0 %v1226
    %1356 = vmatprep.subr.bf16.mxu0 %v1229
    %1357 = vmatpush1.bf16.msra.mxu0 %v1228
    %1358 = vmatprep.subr.bf16.mxu0 %v1231
    %1359 = vmatpush1.bf16.msra.mxu0 %v1230
    %1360 = vmatprep.subr.bf16.mxu0 %v1233
    %1361 = vmatpush1.bf16.msra.mxu0 %v1232
    %1362 = vmatprep.subr.bf16.mxu0 %v1235
    %1363 = vmatpush1.bf16.msra.mxu0 %v1234
    %1364 = vmatprep.subr.bf16.mxu0 %v1237
    %1365 = vmatpush1.bf16.msra.mxu0 %v1236
    %1366 = vmatprep.subr.bf16.mxu0 %v1239
    %1367 = vmatpush1.bf16.msra.mxu0 %v1238
    %1368 = vmatprep.subr.bf16.mxu0 %v1241
    %1369 = vmatpush1.bf16.msra.mxu0 %v1240
    %1370 = vmatprep.subr.bf16.mxu0 %v1243
    %1371 = vmatpush1.bf16.msra.mxu0 %v1242
    %1372 = vmatprep.subr.bf16.mxu0 %v1245
    %1373 = vmatpush1.bf16.msra.mxu0 %v1244
    %1374 = vmatprep.mubr.bf16.mxu0 %v485
    %1375 = vmatmul.mubr.bf16.gmra.mrb[0].mxu0 %v484
    %v1376 = vpop.f32.mrb[0].mxu0
    %v1377 = vadd.f32 0.0, %v1376
    %v1378 = vpop.f32.mrb[0].mxu0
    %v1379 = vadd.f32 0.0, %v1378
    %v1380 = vpop.f32.mrb[0].mxu0
    %v1381 = vadd.f32 0.0, %v1380
    %v1382 = vpop.f32.mrb[0].mxu0
    %v1383 = vadd.f32 0.0, %v1382
    %1384 = vdwg.mxu0
    %1385 = vmatprep.subr.bf16.mxu0 %v1247
    %1386 = vmatpush1.bf16.msra.mxu0 %v1246
    %1387 = vmatprep.subr.bf16.mxu0 %v1249
    %1388 = vmatpush1.bf16.msra.mxu0 %v1248
    %1389 = vmatprep.subr.bf16.mxu0 %v1251
    %1390 = vmatpush1.bf16.msra.mxu0 %v1250
    %1391 = vmatprep.subr.bf16.mxu0 %v1253
    %1392 = vmatpush1.bf16.msra.mxu0 %v1252
    %1393 = vmatprep.subr.bf16.mxu0 %v1255
    %1394 = vmatpush1.bf16.msra.mxu0 %v1254
    %1395 = vmatprep.subr.bf16.mxu0 %v1257
    %1396 = vmatpush1.bf16.msra.mxu0 %v1256
    %1397 = vmatprep.subr.bf16.mxu0 %v1259
    %1398 = vmatpush1.bf16.msra.mxu0 %v1258
    %1399 = vmatprep.subr.bf16.mxu0 %v1261
    %1400 = vmatpush1.bf16.msra.mxu0 %v1260
    %1401 = vmatprep.subr.bf16.mxu0 %v1263
    %1402 = vmatpush1.bf16.msra.mxu0 %v1262
    %1403 = vmatprep.subr.bf16.mxu0 %v1265
    %1404 = vmatpush1.bf16.msra.mxu0 %v1264
    %1405 = vmatprep.subr.bf16.mxu0 %v1267
    %1406 = vmatpush1.bf16.msra.mxu0 %v1266
    %1407 = vmatprep.subr.bf16.mxu0 %v1269
    %1408 = vmatpush1.bf16.msra.mxu0 %v1268
    %1409 = vmatprep.subr.bf16.mxu0 %v1271
    %1410 = vmatpush1.bf16.msra.mxu0 %v1270
    %1411 = vmatprep.subr.bf16.mxu0 %v1273
    %1412 = vmatpush1.bf16.msra.mxu0 %v1272
    %1413 = vmatprep.subr.bf16.mxu0 %v1275
    %1414 = vmatpush1.bf16.msra.mxu0 %v1274
    %1415 = vmatprep.subr.bf16.mxu0 %v1277
    %1416 = vmatpush1.bf16.msra.mxu0 %v1276
    %1417 = vmatprep.mubr.bf16.mxu0 %v487
    %1418 = vmatmul.mubr.bf16.gmra.mrb[0].mxu0 %v486
    %v1419 = vpop.f32.mrb[0].mxu0
    %v1420 = vadd.f32 %v1377, %v1419
    %v1421 = vpop.f32.mrb[0].mxu0
    %v1422 = vadd.f32 %v1379, %v1421
    %v1423 = vpop.f32.mrb[0].mxu0
    %v1424 = vadd.f32 %v1381, %v1423
    %v1425 = vpop.f32.mrb[0].mxu0
    %v1426 = vadd.f32 %v1383, %v1425
    %1427 = vdwg.mxu0
    %v1428 = vld [vmem:[#allocation7] sm:$0xff]
    %v1429 = vld [vmem:[#allocation7 + $0x8] sm:$0xff]
    %v1430 = vld [vmem:[#allocation7 + $0x10] sm:$0xff]
    %v1431 = vld [vmem:[#allocation7 + $0x18] sm:$0xff]
    %v1432 = vld [vmem:[#allocation7 + $0x20] sm:$0xff]
    %v1433 = vld [vmem:[#allocation7 + $0x28] sm:$0xff]
    %v1434 = vld [vmem:[#allocation7 + $0x30] sm:$0xff]
    %v1435 = vld [vmem:[#allocation7 + $0x38] sm:$0xff]
    %v1436 = vld [vmem:[#allocation7 + $0x40] sm:$0xff]
    %v1437 = vld [vmem:[#allocation7 + $0x48] sm:$0xff]
    %v1438 = vld [vmem:[#allocation7 + $0x50] sm:$0xff]
    %v1439 = vld [vmem:[#allocation7 + $0x58] sm:$0xff]
    %v1440 = vld [vmem:[#allocation7 + $0x60] sm:$0xff]
    %v1441 = vld [vmem:[#allocation7 + $0x68] sm:$0xff]
    %v1442 = vld [vmem:[#allocation7 + $0x70] sm:$0xff]
    %v1443 = vld [vmem:[#allocation7 + $0x78] sm:$0xff]
    %v1444 = vld [vmem:[#allocation7 + $0x80] sm:$0xff]
    %v1445 = vld [vmem:[#allocation7 + $0x88] sm:$0xff]
    %v1446 = vld [vmem:[#allocation7 + $0x90] sm:$0xff]
    %v1447 = vld [vmem:[#allocation7 + $0x98] sm:$0xff]
    %v1448 = vld [vmem:[#allocation7 + $0xa0] sm:$0xff]
    %v1449 = vld [vmem:[#allocation7 + $0xa8] sm:$0xff]
    %v1450 = vld [vmem:[#allocation7 + $0xb0] sm:$0xff]
    %v1451 = vld [vmem:[#allocation7 + $0xb8] sm:$0xff]
    %v1452 = vld [vmem:[#allocation7 + $0xc0] sm:$0xff]
    %v1453 = vld [vmem:[#allocation7 + $0xc8] sm:$0xff]
    %v1454 = vld [vmem:[#allocation7 + $0xd0] sm:$0xff]
    %v1455 = vld [vmem:[#allocation7 + $0xd8] sm:$0xff]
    %v1456 = vld [vmem:[#allocation7 + $0xe0] sm:$0xff]
    %v1457 = vld [vmem:[#allocation7 + $0xe8] sm:$0xff]
    %v1458 = vld [vmem:[#allocation7 + $0xf0] sm:$0xff]
    %v1459 = vld [vmem:[#allocation7 + $0xf8] sm:$0xff]
    %v1460 = vld [vmem:[#allocation7 + $0x100] sm:$0xff]
    %v1461 = vld [vmem:[#allocation7 + $0x108] sm:$0xff]
    %v1462 = vld [vmem:[#allocation7 + $0x110] sm:$0xff]
    %v1463 = vld [vmem:[#allocation7 + $0x118] sm:$0xff]
    %v1464 = vld [vmem:[#allocation7 + $0x120] sm:$0xff]
    %v1465 = vld [vmem:[#allocation7 + $0x128] sm:$0xff]
    %v1466 = vld [vmem:[#allocation7 + $0x130] sm:$0xff]
    %v1467 = vld [vmem:[#allocation7 + $0x138] sm:$0xff]
    %v1468 = vld [vmem:[#allocation7 + $0x140] sm:$0xff]
    %v1469 = vld [vmem:[#allocation7 + $0x148] sm:$0xff]
    %v1470 = vld [vmem:[#allocation7 + $0x150] sm:$0xff]
    %v1471 = vld [vmem:[#allocation7 + $0x158] sm:$0xff]
    %v1472 = vld [vmem:[#allocation7 + $0x160] sm:$0xff]
    %v1473 = vld [vmem:[#allocation7 + $0x168] sm:$0xff]
    %v1474 = vld [vmem:[#allocation7 + $0x170] sm:$0xff]
    %v1475 = vld [vmem:[#allocation7 + $0x178] sm:$0xff]
    %v1476 = vld [vmem:[#allocation7 + $0x180] sm:$0xff]
    %v1477 = vld [vmem:[#allocation7 + $0x188] sm:$0xff]
    %v1478 = vld [vmem:[#allocation7 + $0x190] sm:$0xff]
    %v1479 = vld [vmem:[#allocation7 + $0x198] sm:$0xff]
    %v1480 = vld [vmem:[#allocation7 + $0x1a0] sm:$0xff]
    %v1481 = vld [vmem:[#allocation7 + $0x1a8] sm:$0xff]
    %v1482 = vld [vmem:[#allocation7 + $0x1b0] sm:$0xff]
    %v1483 = vld [vmem:[#allocation7 + $0x1b8] sm:$0xff]
    %v1484 = vld [vmem:[#allocation7 + $0x1c0] sm:$0xff]
    %v1485 = vld [vmem:[#allocation7 + $0x1c8] sm:$0xff]
    %v1486 = vld [vmem:[#allocation7 + $0x1d0] sm:$0xff]
    %v1487 = vld [vmem:[#allocation7 + $0x1d8] sm:$0xff]
    %v1488 = vld [vmem:[#allocation7 + $0x1e0] sm:$0xff]
    %v1489 = vld [vmem:[#allocation7 + $0x1e8] sm:$0xff]
    %v1490 = vld [vmem:[#allocation7 + $0x1f0] sm:$0xff]
    %v1491 = vld [vmem:[#allocation7 + $0x1f8] sm:$0xff]
    %v1556 = vunpack.c.l.b16 %v1428
    %v1557 = vunpack.c.h.b16 %v1428
    %v1558 = vunpack.c.l.b16 %v1429
    %v1559 = vunpack.c.h.b16 %v1429
    %v1560 = vunpack.c.l.b16 %v1430
    %v1561 = vunpack.c.h.b16 %v1430
    %v1562 = vunpack.c.l.b16 %v1431
    %v1563 = vunpack.c.h.b16 %v1431
    %v1564 = vunpack.c.l.b16 %v1432
    %v1565 = vunpack.c.h.b16 %v1432
    %v1566 = vunpack.c.l.b16 %v1433
    %v1567 = vunpack.c.h.b16 %v1433
    %v1568 = vunpack.c.l.b16 %v1434
    %v1569 = vunpack.c.h.b16 %v1434
    %v1570 = vunpack.c.l.b16 %v1435
    %v1571 = vunpack.c.h.b16 %v1435
    %v1572 = vunpack.c.l.b16 %v1436
    %v1573 = vunpack.c.h.b16 %v1436
    %v1574 = vunpack.c.l.b16 %v1437
    %v1575 = vunpack.c.h.b16 %v1437
    %v1576 = vunpack.c.l.b16 %v1438
    %v1577 = vunpack.c.h.b16 %v1438
    %v1578 = vunpack.c.l.b16 %v1439
    %v1579 = vunpack.c.h.b16 %v1439
    %v1580 = vunpack.c.l.b16 %v1440
    %v1581 = vunpack.c.h.b16 %v1440
    %v1582 = vunpack.c.l.b16 %v1441
    %v1583 = vunpack.c.h.b16 %v1441
    %v1584 = vunpack.c.l.b16 %v1442
    %v1585 = vunpack.c.h.b16 %v1442
    %v1586 = vunpack.c.l.b16 %v1443
    %v1587 = vunpack.c.h.b16 %v1443
    %v1588 = vunpack.c.l.b16 %v1444
    %v1589 = vunpack.c.h.b16 %v1444
    %v1590 = vunpack.c.l.b16 %v1445
    %v1591 = vunpack.c.h.b16 %v1445
    %v1592 = vunpack.c.l.b16 %v1446
    %v1593 = vunpack.c.h.b16 %v1446
    %v1594 = vunpack.c.l.b16 %v1447
    %v1595 = vunpack.c.h.b16 %v1447
    %v1596 = vunpack.c.l.b16 %v1448
    %v1597 = vunpack.c.h.b16 %v1448
    %v1598 = vunpack.c.l.b16 %v1449
    %v1599 = vunpack.c.h.b16 %v1449
    %v1600 = vunpack.c.l.b16 %v1450
    %v1601 = vunpack.c.h.b16 %v1450
    %v1602 = vunpack.c.l.b16 %v1451
    %v1603 = vunpack.c.h.b16 %v1451
    %v1604 = vunpack.c.l.b16 %v1452
    %v1605 = vunpack.c.h.b16 %v1452
    %v1606 = vunpack.c.l.b16 %v1453
    %v1607 = vunpack.c.h.b16 %v1453
    %v1608 = vunpack.c.l.b16 %v1454
    %v1609 = vunpack.c.h.b16 %v1454
    %v1610 = vunpack.c.l.b16 %v1455
    %v1611 = vunpack.c.h.b16 %v1455
    %v1612 = vunpack.c.l.b16 %v1456
    %v1613 = vunpack.c.h.b16 %v1456
    %v1614 = vunpack.c.l.b16 %v1457
    %v1615 = vunpack.c.h.b16 %v1457
    %v1616 = vunpack.c.l.b16 %v1458
    %v1617 = vunpack.c.h.b16 %v1458
    %v1618 = vunpack.c.l.b16 %v1459
    %v1619 = vunpack.c.h.b16 %v1459
    %v1620 = vunpack.c.l.b16 %v1460
    %v1621 = vunpack.c.h.b16 %v1460
    %v1622 = vunpack.c.l.b16 %v1461
    %v1623 = vunpack.c.h.b16 %v1461
    %v1624 = vunpack.c.l.b16 %v1462
    %v1625 = vunpack.c.h.b16 %v1462
    %v1626 = vunpack.c.l.b16 %v1463
    %v1627 = vunpack.c.h.b16 %v1463
    %v1628 = vunpack.c.l.b16 %v1464
    %v1629 = vunpack.c.h.b16 %v1464
    %v1630 = vunpack.c.l.b16 %v1465
    %v1631 = vunpack.c.h.b16 %v1465
    %v1632 = vunpack.c.l.b16 %v1466
    %v1633 = vunpack.c.h.b16 %v1466
    %v1634 = vunpack.c.l.b16 %v1467
    %v1635 = vunpack.c.h.b16 %v1467
    %v1636 = vunpack.c.l.b16 %v1468
    %v1637 = vunpack.c.h.b16 %v1468
    %v1638 = vunpack.c.l.b16 %v1469
    %v1639 = vunpack.c.h.b16 %v1469
    %v1640 = vunpack.c.l.b16 %v1470
    %v1641 = vunpack.c.h.b16 %v1470
    %v1642 = vunpack.c.l.b16 %v1471
    %v1643 = vunpack.c.h.b16 %v1471
    %v1644 = vunpack.c.l.b16 %v1472
    %v1645 = vunpack.c.h.b16 %v1472
    %v1646 = vunpack.c.l.b16 %v1473
    %v1647 = vunpack.c.h.b16 %v1473
    %v1648 = vunpack.c.l.b16 %v1474
    %v1649 = vunpack.c.h.b16 %v1474
    %v1650 = vunpack.c.l.b16 %v1475
    %v1651 = vunpack.c.h.b16 %v1475
    %v1652 = vunpack.c.l.b16 %v1476
    %v1653 = vunpack.c.h.b16 %v1476
    %v1654 = vunpack.c.l.b16 %v1477
    %v1655 = vunpack.c.h.b16 %v1477
    %v1656 = vunpack.c.l.b16 %v1478
    %v1657 = vunpack.c.h.b16 %v1478
    %v1658 = vunpack.c.l.b16 %v1479
    %v1659 = vunpack.c.h.b16 %v1479
    %v1660 = vunpack.c.l.b16 %v1480
    %v1661 = vunpack.c.h.b16 %v1480
    %v1662 = vunpack.c.l.b16 %v1481
    %v1663 = vunpack.c.h.b16 %v1481
    %v1664 = vunpack.c.l.b16 %v1482
    %v1665 = vunpack.c.h.b16 %v1482
    %v1666 = vunpack.c.l.b16 %v1483
    %v1667 = vunpack.c.h.b16 %v1483
    %v1668 = vunpack.c.l.b16 %v1484
    %v1669 = vunpack.c.h.b16 %v1484
    %v1670 = vunpack.c.l.b16 %v1485
    %v1671 = vunpack.c.h.b16 %v1485
    %v1672 = vunpack.c.l.b16 %v1486
    %v1673 = vunpack.c.h.b16 %v1486
    %v1674 = vunpack.c.l.b16 %v1487
    %v1675 = vunpack.c.h.b16 %v1487
    %v1676 = vunpack.c.l.b16 %v1488
    %v1677 = vunpack.c.h.b16 %v1488
    %v1678 = vunpack.c.l.b16 %v1489
    %v1679 = vunpack.c.h.b16 %v1489
    %v1680 = vunpack.c.l.b16 %v1490
    %v1681 = vunpack.c.h.b16 %v1490
    %v1682 = vunpack.c.l.b16 %v1491
    %v1683 = vunpack.c.h.b16 %v1491
    %v1684 = vpack.c.b16 %v1558, %v1556
    %v1685 = vpack.c.b16 %v1559, %v1557
    %v1686 = vpack.c.b16 %v1562, %v1560
    %v1687 = vpack.c.b16 %v1563, %v1561
    %v1688 = vpack.c.b16 %v1566, %v1564
    %v1689 = vpack.c.b16 %v1567, %v1565
    %v1690 = vpack.c.b16 %v1570, %v1568
    %v1691 = vpack.c.b16 %v1571, %v1569
    %v1692 = vpack.c.b16 %v1574, %v1572
    %v1693 = vpack.c.b16 %v1575, %v1573
    %v1694 = vpack.c.b16 %v1578, %v1576
    %v1695 = vpack.c.b16 %v1579, %v1577
    %v1696 = vpack.c.b16 %v1582, %v1580
    %v1697 = vpack.c.b16 %v1583, %v1581
    %v1698 = vpack.c.b16 %v1586, %v1584
    %v1699 = vpack.c.b16 %v1587, %v1585
    %v1700 = vpack.c.b16 %v1590, %v1588
    %v1701 = vpack.c.b16 %v1591, %v1589
    %v1702 = vpack.c.b16 %v1594, %v1592
    %v1703 = vpack.c.b16 %v1595, %v1593
    %v1704 = vpack.c.b16 %v1598, %v1596
    %v1705 = vpack.c.b16 %v1599, %v1597
    %v1706 = vpack.c.b16 %v1602, %v1600
    %v1707 = vpack.c.b16 %v1603, %v1601
    %v1708 = vpack.c.b16 %v1606, %v1604
    %v1709 = vpack.c.b16 %v1607, %v1605
    %v1710 = vpack.c.b16 %v1610, %v1608
    %v1711 = vpack.c.b16 %v1611, %v1609
    %v1712 = vpack.c.b16 %v1614, %v1612
    %v1713 = vpack.c.b16 %v1615, %v1613
    %v1714 = vpack.c.b16 %v1618, %v1616
    %v1715 = vpack.c.b16 %v1619, %v1617
    %v1716 = vpack.c.b16 %v1622, %v1620
    %v1717 = vpack.c.b16 %v1623, %v1621
    %v1718 = vpack.c.b16 %v1626, %v1624
    %v1719 = vpack.c.b16 %v1627, %v1625
    %v1720 = vpack.c.b16 %v1630, %v1628
    %v1721 = vpack.c.b16 %v1631, %v1629
    %v1722 = vpack.c.b16 %v1634, %v1632
    %v1723 = vpack.c.b16 %v1635, %v1633
    %v1724 = vpack.c.b16 %v1638, %v1636
    %v1725 = vpack.c.b16 %v1639, %v1637
    %v1726 = vpack.c.b16 %v1642, %v1640
    %v1727 = vpack.c.b16 %v1643, %v1641
    %v1728 = vpack.c.b16 %v1646, %v1644
    %v1729 = vpack.c.b16 %v1647, %v1645
    %v1730 = vpack.c.b16 %v1650, %v1648
    %v1731 = vpack.c.b16 %v1651, %v1649
    %v1732 = vpack.c.b16 %v1654, %v1652
    %v1733 = vpack.c.b16 %v1655, %v1653
    %v1734 = vpack.c.b16 %v1658, %v1656
    %v1735 = vpack.c.b16 %v1659, %v1657
    %v1736 = vpack.c.b16 %v1662, %v1660
    %v1737 = vpack.c.b16 %v1663, %v1661
    %v1738 = vpack.c.b16 %v1666, %v1664
    %v1739 = vpack.c.b16 %v1667, %v1665
    %v1740 = vpack.c.b16 %v1670, %v1668
    %v1741 = vpack.c.b16 %v1671, %v1669
    %v1742 = vpack.c.b16 %v1674, %v1672
    %v1743 = vpack.c.b16 %v1675, %v1673
    %v1744 = vpack.c.b16 %v1678, %v1676
    %v1745 = vpack.c.b16 %v1679, %v1677
    %v1746 = vpack.c.b16 %v1682, %v1680
    %v1747 = vpack.c.b16 %v1683, %v1681
    %1812 = vmatprep.subr.bf16.mxu0 %v1685
    %1813 = vmatpush1.bf16.msra.mxu0 %v1684
    %1814 = vmatprep.subr.bf16.mxu0 %v1687
    %1815 = vmatpush1.bf16.msra.mxu0 %v1686
    %1816 = vmatprep.subr.bf16.mxu0 %v1689
    %1817 = vmatpush1.bf16.msra.mxu0 %v1688
    %1818 = vmatprep.subr.bf16.mxu0 %v1691
    %1819 = vmatpush1.bf16.msra.mxu0 %v1690
    %1820 = vmatprep.subr.bf16.mxu0 %v1693
    %1821 = vmatpush1.bf16.msra.mxu0 %v1692
    %1822 = vmatprep.subr.bf16.mxu0 %v1695
    %1823 = vmatpush1.bf16.msra.mxu0 %v1694
    %1824 = vmatprep.subr.bf16.mxu0 %v1697
    %1825 = vmatpush1.bf16.msra.mxu0 %v1696
    %1826 = vmatprep.subr.bf16.mxu0 %v1699
    %1827 = vmatpush1.bf16.msra.mxu0 %v1698
    %1828 = vmatprep.subr.bf16.mxu0 %v1701
    %1829 = vmatpush1.bf16.msra.mxu0 %v1700
    %1830 = vmatprep.subr.bf16.mxu0 %v1703
    %1831 = vmatpush1.bf16.msra.mxu0 %v1702
    %1832 = vmatprep.subr.bf16.mxu0 %v1705
    %1833 = vmatpush1.bf16.msra.mxu0 %v1704
    %1834 = vmatprep.subr.bf16.mxu0 %v1707
    %1835 = vmatpush1.bf16.msra.mxu0 %v1706
    %1836 = vmatprep.subr.bf16.mxu0 %v1709
    %1837 = vmatpush1.bf16.msra.mxu0 %v1708
    %1838 = vmatprep.subr.bf16.mxu0 %v1711
    %1839 = vmatpush1.bf16.msra.mxu0 %v1710
    %1840 = vmatprep.subr.bf16.mxu0 %v1713
    %1841 = vmatpush1.bf16.msra.mxu0 %v1712
    %1842 = vmatprep.subr.bf16.mxu0 %v1715
    %1843 = vmatpush1.bf16.msra.mxu0 %v1714
    %1844 = vmatprep.mubr.bf16.mxu0 %v485
    %1845 = vmatmul.mubr.bf16.gmra.mrb[0].mxu0 %v484
    %v1846 = vpop.f32.mrb[0].mxu0
    %v1847 = vadd.f32 0.0, %v1846
    %v1848 = vpop.f32.mrb[0].mxu0
    %v1849 = vadd.f32 0.0, %v1848
    %v1850 = vpop.f32.mrb[0].mxu0
    %v1851 = vadd.f32 0.0, %v1850
    %v1852 = vpop.f32.mrb[0].mxu0
    %v1853 = vadd.f32 0.0, %v1852
    %1854 = vdwg.mxu0
    %1855 = vmatprep.subr.bf16.mxu0 %v1717
    %1856 = vmatpush1.bf16.msra.mxu0 %v1716
    %1857 = vmatprep.subr.bf16.mxu0 %v1719
    %1858 = vmatpush1.bf16.msra.mxu0 %v1718
    %1859 = vmatprep.subr.bf16.mxu0 %v1721
    %1860 = vmatpush1.bf16.msra.mxu0 %v1720
    %1861 = vmatprep.subr.bf16.mxu0 %v1723
    %1862 = vmatpush1.bf16.msra.mxu0 %v1722
    %1863 = vmatprep.subr.bf16.mxu0 %v1725
    %1864 = vmatpush1.bf16.msra.mxu0 %v1724
    %1865 = vmatprep.subr.bf16.mxu0 %v1727
    %1866 = vmatpush1.bf16.msra.mxu0 %v1726
    %1867 = vmatprep.subr.bf16.mxu0 %v1729
    %1868 = vmatpush1.bf16.msra.mxu0 %v1728
    %1869 = vmatprep.subr.bf16.mxu0 %v1731
    %1870 = vmatpush1.bf16.msra.mxu0 %v1730
    %1871 = vmatprep.subr.bf16.mxu0 %v1733
    %1872 = vmatpush1.bf16.msra.mxu0 %v1732
    %1873 = vmatprep.subr.bf16.mxu0 %v1735
    %1874 = vmatpush1.bf16.msra.mxu0 %v1734
    %1875 = vmatprep.subr.bf16.mxu0 %v1737
    %1876 = vmatpush1.bf16.msra.mxu0 %v1736
    %1877 = vmatprep.subr.bf16.mxu0 %v1739
    %1878 = vmatpush1.bf16.msra.mxu0 %v1738
    %1879 = vmatprep.subr.bf16.mxu0 %v1741
    %1880 = vmatpush1.bf16.msra.mxu0 %v1740
    %1881 = vmatprep.subr.bf16.mxu0 %v1743
    %1882 = vmatpush1.bf16.msra.mxu0 %v1742
    %1883 = vmatprep.subr.bf16.mxu0 %v1745
    %1884 = vmatpush1.bf16.msra.mxu0 %v1744
    %1885 = vmatprep.subr.bf16.mxu0 %v1747
    %1886 = vmatpush1.bf16.msra.mxu0 %v1746
    %1887 = vmatprep.mubr.bf16.mxu0 %v487
    %1888 = vmatmul.mubr.bf16.gmra.mrb[0].mxu0 %v486
    %v1889 = vpop.f32.mrb[0].mxu0
    %v1890 = vadd.f32 %v1847, %v1889
    %v1891 = vpop.f32.mrb[0].mxu0
    %v1892 = vadd.f32 %v1849, %v1891
    %v1893 = vpop.f32.mrb[0].mxu0
    %v1894 = vadd.f32 %v1851, %v1893
    %v1895 = vpop.f32.mrb[0].mxu0
    %v1896 = vadd.f32 %v1853, %v1895
    %1897 = vdwg.mxu0
    %vm1902 = vcmask 1041408
    %v1903 = vrot.slane %v950, 6
    %v1904 = vrot.slane %v952, 6
    %v1905 = vrot.slane %v954, 6
    %v1906 = vsel %vm1902, %v1903, %v1905
    %v1907 = vrot.slane %v956, 6
    %v1908 = vsel %vm1902, %v1904, %v1907
    %v1913 = vsel %vm1902, 0.0, %v1903
    %v1914 = vsel %vm1902, 0.0, %v1904
    %v1915 = vadd.f32 %v1913, %v1420
    %v1916 = vadd.f32 %v1914, %v1422
    %v1917 = vadd.f32 %v1906, %v1424
    %v1918 = vadd.f32 %v1908, %v1426
    %v1923 = vrot.slane %v1890, 2
    %v1924 = vrot.slane %v1894, 2
    %v1925 = vsel %vm259, %v1923, %v1924
    %v1926 = vrot.slane %v1892, 2
    %v1927 = vrot.slane %v1896, 2
    %v1928 = vsel %vm259, %v1926, %v1927
    %v1933 = vsel %vm259, %v1924, 0.0
    %v1934 = vsel %vm259, %v1927, 0.0
    %v1935 = vadd.f32 %v1915, %v1925
    %v1936 = vadd.f32 %v1916, %v1928
    %v1937 = vadd.f32 %v1917, %v1933
    %v1938 = vadd.f32 %v1918, %v1934
    %v1939 = vld [vmem:[#allocation9] sm:$0x3]
    %v1941 = vlaneseq
    %v1942 = vshrl.u32 %v1941, 7
    %v1943 = vsub.s32 0, %v1942
    %v1944 = vrot.slane %v1939, %v1943
    %v1945 = vlaneseq
    %v1946 = vshrl.u32 %v1945, 7
    %v1947 = vsub.s32 1, %v1946
    %v1948 = vrot.slane %v1939, %v1947
    %v1951 = vadd.f32 %v1935, %v1944
    %v1952 = vadd.f32 %v1936, %v1948
    %v1953 = vadd.f32 %v1937, %v1944
    %v1954 = vadd.f32 %v1938, %v1948
    %v1955 = vmax.f32 %v1951, 0.0
    %v1956 = vmax.f32 %v1952, 0.0
    %v1957 = vmax.f32 %v1953, 0.0
    %v1958 = vmax.f32 %v1954, 0.0
    %v1959 = vpack.c.bf16 %v1957, %v1955
    %v1960 = vpack.c.bf16 %v1958, %v1956
    %v1961 = vld [vmem:[%s7] sm:$0xf]
    %v1962 = vld [vmem:[%s7 + $0x4] sm:$0xf]
    %v1963 = vld [vmem:[%s7 + $0x8] sm:$0xf]
    %v1964 = vld [vmem:[%s7 + $0xc] sm:$0xf]
    %v1965 = vld [vmem:[%s7 + $0x10] sm:$0xf]
    %v1966 = vld [vmem:[%s7 + $0x14] sm:$0xf]
    %v1967 = vld [vmem:[%s7 + $0x18] sm:$0xf]
    %v1968 = vld [vmem:[%s7 + $0x1c] sm:$0xf]
    %v1969 = vld [vmem:[%s7 + $0x20] sm:$0xf]
    %v1970 = vld [vmem:[%s7 + $0x24] sm:$0xf]
    %v1971 = vld [vmem:[%s7 + $0x28] sm:$0xf]
    %v1972 = vld [vmem:[%s7 + $0x2c] sm:$0xf]
    %v1973 = vld [vmem:[%s7 + $0x30] sm:$0xf]
    %v1974 = vld [vmem:[%s7 + $0x34] sm:$0xf]
    %v1975 = vld [vmem:[%s7 + $0x38] sm:$0xf]
    %v1976 = vld [vmem:[%s7 + $0x3c] sm:$0xf]
    %v1977 = vld [vmem:[%s7 + $0x40] sm:$0xf]
    %v1978 = vld [vmem:[%s7 + $0x44] sm:$0xf]
    %v1979 = vld [vmem:[%s7 + $0x48] sm:$0xf]
    %v1980 = vld [vmem:[%s7 + $0x4c] sm:$0xf]
    %v1981 = vld [vmem:[%s7 + $0x50] sm:$0xf]
    %v1982 = vld [vmem:[%s7 + $0x54] sm:$0xf]
    %v1983 = vld [vmem:[%s7 + $0x58] sm:$0xf]
    %v1984 = vld [vmem:[%s7 + $0x5c] sm:$0xf]
    %v1985 = vld [vmem:[%s7 + $0x60] sm:$0xf]
    %v1986 = vld [vmem:[%s7 + $0x64] sm:$0xf]
    %v1987 = vld [vmem:[%s7 + $0x68] sm:$0xf]
    %v1988 = vld [vmem:[%s7 + $0x6c] sm:$0xf]
    %v1989 = vld [vmem:[%s7 + $0x70] sm:$0xf]
    %v1990 = vld [vmem:[%s7 + $0x74] sm:$0xf]
    %v1991 = vld [vmem:[%s7 + $0x78] sm:$0xf]
    %v1992 = vld [vmem:[%s7 + $0x7c] sm:$0xf]
    %v1993 = vld [vmem:[%s8] sm:$0x1]
    %v1995 = vlaneseq
    %v1996 = vshrl.u32 %v1995, 7
    %v1997 = vsub.s32 0, %v1996
    %v1998 = vrot.slane %v1993, %v1997
    %v2032 = vunpack.c.l.b16 %v1961
    %v2033 = vunpack.c.l.b16 %v1962
    %v2034 = vunpack.c.l.b16 %v1963
    %v2035 = vunpack.c.l.b16 %v1964
    %v2036 = vunpack.c.l.b16 %v1965
    %v2037 = vunpack.c.l.b16 %v1966
    %v2038 = vunpack.c.l.b16 %v1967
    %v2039 = vunpack.c.l.b16 %v1968
    %v2040 = vunpack.c.l.b16 %v1969
    %v2041 = vunpack.c.l.b16 %v1970
    %v2042 = vunpack.c.l.b16 %v1971
    %v2043 = vunpack.c.l.b16 %v1972
    %v2044 = vunpack.c.l.b16 %v1973
    %v2045 = vunpack.c.l.b16 %v1974
    %v2046 = vunpack.c.l.b16 %v1975
    %v2047 = vunpack.c.l.b16 %v1976
    %v2048 = vunpack.c.l.b16 %v1977
    %v2049 = vunpack.c.l.b16 %v1978
    %v2050 = vunpack.c.l.b16 %v1979
    %v2051 = vunpack.c.l.b16 %v1980
    %v2052 = vunpack.c.l.b16 %v1981
    %v2053 = vunpack.c.l.b16 %v1982
    %v2054 = vunpack.c.l.b16 %v1983
    %v2055 = vunpack.c.l.b16 %v1984
    %v2056 = vunpack.c.l.b16 %v1985
    %v2057 = vunpack.c.l.b16 %v1986
    %v2058 = vunpack.c.l.b16 %v1987
    %v2059 = vunpack.c.l.b16 %v1988
    %v2060 = vunpack.c.l.b16 %v1989
    %v2061 = vunpack.c.l.b16 %v1990
    %v2062 = vunpack.c.l.b16 %v1991
    %v2063 = vunpack.c.l.b16 %v1992
    %v2064 = vpack.c.b16 %v2033, %v2032
    %v2065 = vpack.c.b16 %v2035, %v2034
    %v2066 = vpack.c.b16 %v2037, %v2036
    %v2067 = vpack.c.b16 %v2039, %v2038
    %v2068 = vpack.c.b16 %v2041, %v2040
    %v2069 = vpack.c.b16 %v2043, %v2042
    %v2070 = vpack.c.b16 %v2045, %v2044
    %v2071 = vpack.c.b16 %v2047, %v2046
    %v2072 = vpack.c.b16 %v2049, %v2048
    %v2073 = vpack.c.b16 %v2051, %v2050
    %v2074 = vpack.c.b16 %v2053, %v2052
    %v2075 = vpack.c.b16 %v2055, %v2054
    %v2076 = vpack.c.b16 %v2057, %v2056
    %v2077 = vpack.c.b16 %v2059, %v2058
    %v2078 = vpack.c.b16 %v2061, %v2060
    %v2079 = vpack.c.b16 %v2063, %v2062
    %2096 = vmatprep.subr.bf16.mxu0 0
    %2097 = vmatpush1.bf16.msra.mxu0 %v2064
    %2098 = vmatprep.subr.bf16.mxu0 0
    %2099 = vmatpush1.bf16.msra.mxu0 %v2065
    %2100 = vmatprep.subr.bf16.mxu0 0
    %2101 = vmatpush1.bf16.msra.mxu0 %v2066
    %2102 = vmatprep.subr.bf16.mxu0 0
    %2103 = vmatpush1.bf16.msra.mxu0 %v2067
    %2104 = vmatprep.subr.bf16.mxu0 0
    %2105 = vmatpush1.bf16.msra.mxu0 %v2068
    %2106 = vmatprep.subr.bf16.mxu0 0
    %2107 = vmatpush1.bf16.msra.mxu0 %v2069
    %2108 = vmatprep.subr.bf16.mxu0 0
    %2109 = vmatpush1.bf16.msra.mxu0 %v2070
    %2110 = vmatprep.subr.bf16.mxu0 0
    %2111 = vmatpush1.bf16.msra.mxu0 %v2071
    %2112 = vmatprep.subr.bf16.mxu0 0
    %2113 = vmatpush1.bf16.msra.mxu0 %v2072
    %2114 = vmatprep.subr.bf16.mxu0 0
    %2115 = vmatpush1.bf16.msra.mxu0 %v2073
    %2116 = vmatprep.subr.bf16.mxu0 0
    %2117 = vmatpush1.bf16.msra.mxu0 %v2074
    %2118 = vmatprep.subr.bf16.mxu0 0
    %2119 = vmatpush1.bf16.msra.mxu0 %v2075
    %2120 = vmatprep.subr.bf16.mxu0 0
    %2121 = vmatpush1.bf16.msra.mxu0 %v2076
    %2122 = vmatprep.subr.bf16.mxu0 0
    %2123 = vmatpush1.bf16.msra.mxu0 %v2077
    %2124 = vmatprep.subr.bf16.mxu0 0
    %2125 = vmatpush1.bf16.msra.mxu0 %v2078
    %2126 = vmatprep.subr.bf16.mxu0 0
    %2127 = vmatpush1.bf16.msra.mxu0 %v2079
    %2128 = vmatprep.mubr.bf16.mxu0 %v1960
    %2129 = vmatmul.mubr.bf16.gmra.mrb[0].mxu0 %v1959
    %v2130 = vpop.f32.mrb[0].mxu0
    %v2131 = vadd.f32 %v1998, %v2130
    %v2132 = vpop.f32.mrb[0].mxu0
    %v2133 = vpop.f32.mrb[0].mxu0
    %v2134 = vadd.f32 %v1998, %v2133
    %v2135 = vpop.f32.mrb[0].mxu0
    %2136 = vdwg.mxu0
    %v2137 = vld [vmem:[#allocation10] sm:$0xf]
    %v2138 = vld [vmem:[#allocation10 + $0x4] sm:$0xf]
    %v2139 = vld [vmem:[#allocation10 + $0x8] sm:$0xf]
    %v2140 = vld [vmem:[#allocation10 + $0xc] sm:$0xf]
    %v2141 = vld [vmem:[#allocation10 + $0x10] sm:$0xf]
    %v2142 = vld [vmem:[#allocation10 + $0x14] sm:$0xf]
    %v2143 = vld [vmem:[#allocation10 + $0x18] sm:$0xf]
    %v2144 = vld [vmem:[#allocation10 + $0x1c] sm:$0xf]
    %v2145 = vld [vmem:[#allocation10 + $0x20] sm:$0xf]
    %v2146 = vld [vmem:[#allocation10 + $0x24] sm:$0xf]
    %v2147 = vld [vmem:[#allocation10 + $0x28] sm:$0xf]
    %v2148 = vld [vmem:[#allocation10 + $0x2c] sm:$0xf]
    %v2149 = vld [vmem:[#allocation10 + $0x30] sm:$0xf]
    %v2150 = vld [vmem:[#allocation10 + $0x34] sm:$0xf]
    %v2151 = vld [vmem:[#allocation10 + $0x38] sm:$0xf]
    %v2152 = vld [vmem:[#allocation10 + $0x3c] sm:$0xf]
    %v2153 = vld [vmem:[#allocation12] sm:$0x1]
    %v2154 = vld [vmem:[#allocation13] sm:$0xf]
    %v2155 = vld [vmem:[#allocation13 + $0x4] sm:$0xf]
    %v2156 = vld [vmem:[#allocation13 + $0x8] sm:$0xf]
    %v2157 = vld [vmem:[#allocation13 + $0xc] sm:$0xf]
    %v2158 = vld [vmem:[#allocation13 + $0x10] sm:$0xf]
    %v2159 = vld [vmem:[#allocation13 + $0x14] sm:$0xf]
    %v2160 = vld [vmem:[#allocation13 + $0x18] sm:$0xf]
    %v2161 = vld [vmem:[#allocation13 + $0x1c] sm:$0xf]
    %v2162 = vld [vmem:[#allocation13 + $0x20] sm:$0xf]
    %v2163 = vld [vmem:[#allocation13 + $0x24] sm:$0xf]
    %v2164 = vld [vmem:[#allocation13 + $0x28] sm:$0xf]
    %v2165 = vld [vmem:[#allocation13 + $0x2c] sm:$0xf]
    %v2166 = vld [vmem:[#allocation13 + $0x30] sm:$0xf]
    %v2167 = vld [vmem:[#allocation13 + $0x34] sm:$0xf]
    %v2168 = vld [vmem:[#allocation13 + $0x38] sm:$0xf]
    %v2169 = vld [vmem:[#allocation13 + $0x3c] sm:$0xf]
    %v2170 = vld [vmem:[#allocation15] sm:$0x1]
    %v2171 = vpack.c.bf16 %v2134, %v2131
    %v2173 = vlaneseq
    %v2174 = vshrl.u32 %v2173, 7
    %v2175 = vsub.s32 0, %v2174
    %v2176 = vrot.slane %v2153, %v2175
    %v2194 = vunpack.c.l.b16 %v2137
    %v2195 = vunpack.c.l.b16 %v2138
    %v2196 = vunpack.c.l.b16 %v2139
    %v2197 = vunpack.c.l.b16 %v2140
    %v2198 = vunpack.c.l.b16 %v2141
    %v2199 = vunpack.c.l.b16 %v2142
    %v2200 = vunpack.c.l.b16 %v2143
    %v2201 = vunpack.c.l.b16 %v2144
    %v2202 = vunpack.c.l.b16 %v2145
    %v2203 = vunpack.c.l.b16 %v2146
    %v2204 = vunpack.c.l.b16 %v2147
    %v2205 = vunpack.c.l.b16 %v2148
    %v2206 = vunpack.c.l.b16 %v2149
    %v2207 = vunpack.c.l.b16 %v2150
    %v2208 = vunpack.c.l.b16 %v2151
    %v2209 = vunpack.c.l.b16 %v2152
    %v2210 = vpack.c.b16 %v2195, %v2194
    %v2211 = vpack.c.b16 %v2197, %v2196
    %v2212 = vpack.c.b16 %v2199, %v2198
    %v2213 = vpack.c.b16 %v2201, %v2200
    %v2214 = vpack.c.b16 %v2203, %v2202
    %v2215 = vpack.c.b16 %v2205, %v2204
    %v2216 = vpack.c.b16 %v2207, %v2206
    %v2217 = vpack.c.b16 %v2209, %v2208
    %2226 = vmatprep.subr.bf16.mxu0 0
    %2227 = vmatpush1.bf16.msra.mxu0 %v2210
    %2228 = vmatprep.subr.bf16.mxu0 0
    %2229 = vmatpush1.bf16.msra.mxu0 %v2211
    %2230 = vmatprep.subr.bf16.mxu0 0
    %2231 = vmatpush1.bf16.msra.mxu0 %v2212
    %2232 = vmatprep.subr.bf16.mxu0 0
    %2233 = vmatpush1.bf16.msra.mxu0 %v2213
    %2234 = vmatprep.subr.bf16.mxu0 0
    %2235 = vmatpush1.bf16.msra.mxu0 %v2214
    %2236 = vmatprep.subr.bf16.mxu0 0
    %2237 = vmatpush1.bf16.msra.mxu0 %v2215
    %2238 = vmatprep.subr.bf16.mxu0 0
    %2239 = vmatpush1.bf16.msra.mxu0 %v2216
    %2240 = vmatprep.subr.bf16.mxu0 0
    %2241 = vmatpush1.bf16.msra.mxu0 %v2217
    %2242 = vmatprep.subr.bf16.mxu0 0
    %2243 = vmatpush1.bf16.msra.mxu0 0
    %2244 = vmatprep.subr.bf16.mxu0 0
    %2245 = vmatpush1.bf16.msra.mxu0 0
    %2246 = vmatprep.subr.bf16.mxu0 0
    %2247 = vmatpush1.bf16.msra.mxu0 0
    %2248 = vmatprep.subr.bf16.mxu0 0
    %2249 = vmatpush1.bf16.msra.mxu0 0
    %2250 = vmatprep.subr.bf16.mxu0 0
    %2251 = vmatpush1.bf16.msra.mxu0 0
    %2252 = vmatprep.subr.bf16.mxu0 0
    %2253 = vmatpush1.bf16.msra.mxu0 0
    %2254 = vmatprep.subr.bf16.mxu0 0
    %2255 = vmatpush1.bf16.msra.mxu0 0
    %2256 = vmatprep.subr.bf16.mxu0 0
    %2257 = vmatpush1.bf16.msra.mxu0 0
    %2258 = vmatprep.mubr.bf16.mxu0 0
    %2259 = vmatmul.mubr.bf16.gmra.mrb[0].mxu0 %v2171
    %v2260 = vpop.f32.mrb[0].mxu0
    %v2261 = vadd.f32 %v2176, %v2260
    %v2262 = vpop.f32.mrb[0].mxu0
    %v2263 = vpop.f32.mrb[0].mxu0
    %v2264 = vadd.f32 %v2176, %v2263
    %v2265 = vpop.f32.mrb[0].mxu0
    %2266 = vdwg.mxu0
    %v2267 = vmax.f32 %v2261, 0.0
    %v2268 = vmax.f32 %v2264, 0.0
    %v2270 = vlaneseq
    %v2271 = vshrl.u32 %v2270, 7
    %v2272 = vsub.s32 0, %v2271
    %v2273 = vrot.slane %v2170, %v2272
    %v2291 = vunpack.c.l.b16 %v2154
    %v2292 = vunpack.c.l.b16 %v2155
    %v2293 = vunpack.c.l.b16 %v2156
    %v2294 = vunpack.c.l.b16 %v2157
    %v2295 = vunpack.c.l.b16 %v2158
    %v2296 = vunpack.c.l.b16 %v2159
    %v2297 = vunpack.c.l.b16 %v2160
    %v2298 = vunpack.c.l.b16 %v2161
    %v2299 = vunpack.c.l.b16 %v2162
    %v2300 = vunpack.c.l.b16 %v2163
    %v2301 = vunpack.c.l.b16 %v2164
    %v2302 = vunpack.c.l.b16 %v2165
    %v2303 = vunpack.c.l.b16 %v2166
    %v2304 = vunpack.c.l.b16 %v2167
    %v2305 = vunpack.c.l.b16 %v2168
    %v2306 = vunpack.c.l.b16 %v2169
    %v2307 = vpack.c.b16 %v2292, %v2291
    %v2308 = vpack.c.b16 %v2294, %v2293
    %v2309 = vpack.c.b16 %v2296, %v2295
    %v2310 = vpack.c.b16 %v2298, %v2297
    %v2311 = vpack.c.b16 %v2300, %v2299
    %v2312 = vpack.c.b16 %v2302, %v2301
    %v2313 = vpack.c.b16 %v2304, %v2303
    %v2314 = vpack.c.b16 %v2306, %v2305
    %2323 = vmatprep.subr.bf16.mxu0 0
    %2324 = vmatpush1.bf16.msra.mxu0 %v2307
    %2325 = vmatprep.subr.bf16.mxu0 0
    %2326 = vmatpush1.bf16.msra.mxu0 %v2308
    %2327 = vmatprep.subr.bf16.mxu0 0
    %2328 = vmatpush1.bf16.msra.mxu0 %v2309
    %2329 = vmatprep.subr.bf16.mxu0 0
    %2330 = vmatpush1.bf16.msra.mxu0 %v2310
    %2331 = vmatprep.subr.bf16.mxu0 0
    %2332 = vmatpush1.bf16.msra.mxu0 %v2311
    %2333 = vmatprep.subr.bf16.mxu0 0
    %2334 = vmatpush1.bf16.msra.mxu0 %v2312
    %2335 = vmatprep.subr.bf16.mxu0 0
    %2336 = vmatpush1.bf16.msra.mxu0 %v2313
    %2337 = vmatprep.subr.bf16.mxu0 0
    %2338 = vmatpush1.bf16.msra.mxu0 %v2314
    %2339 = vmatprep.subr.bf16.mxu0 0
    %2340 = vmatpush1.bf16.msra.mxu0 0
    %2341 = vmatprep.subr.bf16.mxu0 0
    %2342 = vmatpush1.bf16.msra.mxu0 0
    %2343 = vmatprep.subr.bf16.mxu0 0
    %2344 = vmatpush1.bf16.msra.mxu0 0
    %2345 = vmatprep.subr.bf16.mxu0 0
    %2346 = vmatpush1.bf16.msra.mxu0 0
    %2347 = vmatprep.subr.bf16.mxu0 0
    %2348 = vmatpush1.bf16.msra.mxu0 0
    %2349 = vmatprep.subr.bf16.mxu0 0
    %2350 = vmatpush1.bf16.msra.mxu0 0
    %2351 = vmatprep.subr.bf16.mxu0 0
    %2352 = vmatpush1.bf16.msra.mxu0 0
    %2353 = vmatprep.subr.bf16.mxu0 0
    %2354 = vmatpush1.bf16.msra.mxu0 0
    %2355 = vmatprep.mubr.bf16.mxu0 0
    %2356 = vmatmul.mubr.bf16.gmra.mrb[0].mxu0 %v2171
    %v2357 = vpop.f32.mrb[0].mxu0
    %v2358 = vadd.f32 %v2273, %v2357
    %v2359 = vpop.f32.mrb[0].mxu0
    %v2360 = vpop.f32.mrb[0].mxu0
    %v2361 = vadd.f32 %v2273, %v2360
    %v2362 = vpop.f32.mrb[0].mxu0
    %2363 = vdwg.mxu0
    %v2364 = vxor.u32 %v2358, 2147483648
    %v2365 = vxor.u32 %v2361, 2147483648
    %v2366 = vmul.f32 %v2364, 1.442695
    %v2367 = vpow.pop %v2366
    %v2368 = vmul.f32 %v2365, 1.442695
    %v2369 = vpow.pop %v2368
    %v2370 = vadd.f32 %v2367, 1.0
    %v2371 = vadd.f32 %v2369, 1.0
    %v2372 = vrcp.pop %v2370
    %v2373 = vmul.f32 1.0, %v2372
    %v2374 = vrcp.pop %v2371
    %v2375 = vmul.f32 1.0, %v2374
    %v2376 = vmul.f32 %v2267, %v2373
    %v2377 = vmul.f32 %v2268, %v2375
    %v2378 = vsub.f32 1.0, %v2373
    %v2379 = vsub.f32 1.0, %v2375
    %v2380 = vmul.f32 %v2131, %v2378
    %v2381 = vmul.f32 %v2134, %v2379
    %v2382 = vadd.f32 %v2376, %v2380
    %v2383 = vadd.f32 %v2377, %v2381
    %v2384 = vpack.c.bf16 %v2383, %v2382
    %2385 = vmatprep.subr.bf16.mxu0 0
    %2386 = vmatpush1.bf16.msra.mxu0 %v2210
    %2387 = vmatprep.subr.bf16.mxu0 0
    %2388 = vmatpush1.bf16.msra.mxu0 %v2211
    %2389 = vmatprep.subr.bf16.mxu0 0
    %2390 = vmatpush1.bf16.msra.mxu0 %v2212
    %2391 = vmatprep.subr.bf16.mxu0 0
    %2392 = vmatpush1.bf16.msra.mxu0 %v2213
    %2393 = vmatprep.subr.bf16.mxu0 0
    %2394 = vmatpush1.bf16.msra.mxu0 %v2214
    %2395 = vmatprep.subr.bf16.mxu0 0
    %2396 = vmatpush1.bf16.msra.mxu0 %v2215
    %2397 = vmatprep.subr.bf16.mxu0 0
    %2398 = vmatpush1.bf16.msra.mxu0 %v2216
    %2399 = vmatprep.subr.bf16.mxu0 0
    %2400 = vmatpush1.bf16.msra.mxu0 %v2217
    %2401 = vmatprep.subr.bf16.mxu0 0
    %2402 = vmatpush1.bf16.msra.mxu0 0
    %2403 = vmatprep.subr.bf16.mxu0 0
    %2404 = vmatpush1.bf16.msra.mxu0 0
    %2405 = vmatprep.subr.bf16.mxu0 0
    %2406 = vmatpush1.bf16.msra.mxu0 0
    %2407 = vmatprep.subr.bf16.mxu0 0
    %2408 = vmatpush1.bf16.msra.mxu0 0
    %2409 = vmatprep.subr.bf16.mxu0 0
    %2410 = vmatpush1.bf16.msra.mxu0 0
    %2411 = vmatprep.subr.bf16.mxu0 0
    %2412 = vmatpush1.bf16.msra.mxu0 0
    %2413 = vmatprep.subr.bf16.mxu0 0
    %2414 = vmatpush1.bf16.msra.mxu0 0
    %2415 = vmatprep.subr.bf16.mxu0 0
    %2416 = vmatpush1.bf16.msra.mxu0 0
    %2417 = vmatprep.mubr.bf16.mxu0 0
    %2418 = vmatmul.mubr.bf16.gmra.mrb[0].mxu0 %v2384
    %v2419 = vpop.f32.mrb[0].mxu0
    %v2420 = vadd.f32 %v2176, %v2419
    %v2421 = vpop.f32.mrb[0].mxu0
    %v2422 = vpop.f32.mrb[0].mxu0
    %v2423 = vadd.f32 %v2176, %v2422
    %v2424 = vpop.f32.mrb[0].mxu0
    %2425 = vdwg.mxu0
    %v2426 = vmax.f32 %v2420, 0.0
    %v2427 = vmax.f32 %v2423, 0.0
    %2428 = vmatprep.subr.bf16.mxu0 0
    %2429 = vmatpush1.bf16.msra.mxu0 %v2307
    %2430 = vmatprep.subr.bf16.mxu0 0
    %2431 = vmatpush1.bf16.msra.mxu0 %v2308
    %2432 = vmatprep.subr.bf16.mxu0 0
    %2433 = vmatpush1.bf16.msra.mxu0 %v2309
    %2434 = vmatprep.subr.bf16.mxu0 0
    %2435 = vmatpush1.bf16.msra.mxu0 %v2310
    %2436 = vmatprep.subr.bf16.mxu0 0
    %2437 = vmatpush1.bf16.msra.mxu0 %v2311
    %2438 = vmatprep.subr.bf16.mxu0 0
    %2439 = vmatpush1.bf16.msra.mxu0 %v2312
    %2440 = vmatprep.subr.bf16.mxu0 0
    %2441 = vmatpush1.bf16.msra.mxu0 %v2313
    %2442 = vmatprep.subr.bf16.mxu0 0
    %2443 = vmatpush1.bf16.msra.mxu0 %v2314
    %2444 = vmatprep.subr.bf16.mxu0 0
    %2445 = vmatpush1.bf16.msra.mxu0 0
    %2446 = vmatprep.subr.bf16.mxu0 0
    %2447 = vmatpush1.bf16.msra.mxu0 0
    %2448 = vmatprep.subr.bf16.mxu0 0
    %2449 = vmatpush1.bf16.msra.mxu0 0
    %2450 = vmatprep.subr.bf16.mxu0 0
    %2451 = vmatpush1.bf16.msra.mxu0 0
    %2452 = vmatprep.subr.bf16.mxu0 0
    %2453 = vmatpush1.bf16.msra.mxu0 0
    %2454 = vmatprep.subr.bf16.mxu0 0
    %2455 = vmatpush1.bf16.msra.mxu0 0
    %2456 = vmatprep.subr.bf16.mxu0 0
    %2457 = vmatpush1.bf16.msra.mxu0 0
    %2458 = vmatprep.subr.bf16.mxu0 0
    %2459 = vmatpush1.bf16.msra.mxu0 0
    %2460 = vmatprep.mubr.bf16.mxu0 0
    %2461 = vmatmul.mubr.bf16.gmra.mrb[0].mxu0 %v2384
    %v2462 = vpop.f32.mrb[0].mxu0
    %v2463 = vadd.f32 %v2273, %v2462
    %v2464 = vpop.f32.mrb[0].mxu0
    %v2465 = vpop.f32.mrb[0].mxu0
    %v2466 = vadd.f32 %v2273, %v2465
    %v2467 = vpop.f32.mrb[0].mxu0
    %2468 = vdwg.mxu0
    %v2469 = vxor.u32 %v2463, 2147483648
    %v2470 = vxor.u32 %v2466, 2147483648
    %v2471 = vmul.f32 %v2469, 1.442695
    %v2472 = vpow.pop %v2471
    %v2473 = vmul.f32 %v2470, 1.442695
    %v2474 = vpow.pop %v2473
    %v2475 = vadd.f32 %v2472, 1.0
    %v2476 = vadd.f32 %v2474, 1.0
    %v2477 = vrcp.pop %v2475
    %v2478 = vmul.f32 1.0, %v2477
    %v2479 = vrcp.pop %v2476
    %v2480 = vmul.f32 1.0, %v2479
    %v2481 = vmul.f32 %v2426, %v2478
    %v2482 = vmul.f32 %v2427, %v2480
    %v2483 = vsub.f32 1.0, %v2478
    %v2484 = vsub.f32 1.0, %v2480
    %v2485 = vmul.f32 %v2382, %v2483
    %v2486 = vmul.f32 %v2383, %v2484
    %v2487 = vadd.f32 %v2481, %v2485
    %v2488 = vadd.f32 %v2482, %v2486
    %v2489 = vpack.c.bf16 %v2488, %v2487
    %v2490 = vld [vmem:[%s13] sm:$0xf]
    %v2491 = vld [vmem:[%s13 + $0x4] sm:$0xf]
    %v2492 = vld [vmem:[%s13 + $0x8] sm:$0xf]
    %v2493 = vld [vmem:[%s13 + $0xc] sm:$0xf]
    %v2494 = vld [vmem:[%s13 + $0x10] sm:$0xf]
    %v2495 = vld [vmem:[%s13 + $0x14] sm:$0xf]
    %v2496 = vld [vmem:[%s13 + $0x18] sm:$0xf]
    %v2497 = vld [vmem:[%s13 + $0x1c] sm:$0xf]
    %v2498 = vld [vmem:[%s13 + $0x20] sm:$0xf]
    %v2499 = vld [vmem:[%s13 + $0x24] sm:$0xf]
    %v2500 = vld [vmem:[%s13 + $0x28] sm:$0xf]
    %v2501 = vld [vmem:[%s13 + $0x2c] sm:$0xf]
    %v2502 = vld [vmem:[%s13 + $0x30] sm:$0xf]
    %v2503 = vld [vmem:[%s13 + $0x34] sm:$0xf]
    %v2504 = vld [vmem:[%s13 + $0x38] sm:$0xf]
    %v2505 = vld [vmem:[%s13 + $0x3c] sm:$0xf]
    %v2506 = vld [vmem:[#allocation16] sm:$0x1]
    %v2508 = vlaneseq
    %v2509 = vshrl.u32 %v2508, 7
    %v2510 = vsub.s32 0, %v2509
    %v2511 = vrot.slane %v2506, %v2510
    %v2529 = vunpack.c.l.b16 %v2490
    %v2530 = vunpack.c.l.b16 %v2491
    %v2531 = vunpack.c.l.b16 %v2492
    %v2532 = vunpack.c.l.b16 %v2493
    %v2533 = vunpack.c.l.b16 %v2494
    %v2534 = vunpack.c.l.b16 %v2495
    %v2535 = vunpack.c.l.b16 %v2496
    %v2536 = vunpack.c.l.b16 %v2497
    %v2537 = vunpack.c.l.b16 %v2498
    %v2538 = vunpack.c.l.b16 %v2499
    %v2539 = vunpack.c.l.b16 %v2500
    %v2540 = vunpack.c.l.b16 %v2501
    %v2541 = vunpack.c.l.b16 %v2502
    %v2542 = vunpack.c.l.b16 %v2503
    %v2543 = vunpack.c.l.b16 %v2504
    %v2544 = vunpack.c.l.b16 %v2505
    %v2545 = vpack.c.b16 %v2530, %v2529
    %v2546 = vpack.c.b16 %v2532, %v2531
    %v2547 = vpack.c.b16 %v2534, %v2533
    %v2548 = vpack.c.b16 %v2536, %v2535
    %v2549 = vpack.c.b16 %v2538, %v2537
    %v2550 = vpack.c.b16 %v2540, %v2539
    %v2551 = vpack.c.b16 %v2542, %v2541
    %v2552 = vpack.c.b16 %v2544, %v2543
    %2561 = vmatprep.subr.bf16.mxu0 0
    %2562 = vmatpush1.bf16.msra.mxu0 %v2545
    %2563 = vmatprep.subr.bf16.mxu0 0
    %2564 = vmatpush1.bf16.msra.mxu0 %v2546
    %2565 = vmatprep.subr.bf16.mxu0 0
    %2566 = vmatpush1.bf16.msra.mxu0 %v2547
    %2567 = vmatprep.subr.bf16.mxu0 0
    %2568 = vmatpush1.bf16.msra.mxu0 %v2548
    %2569 = vmatprep.subr.bf16.mxu0 0
    %2570 = vmatpush1.bf16.msra.mxu0 %v2549
    %2571 = vmatprep.subr.bf16.mxu0 0
    %2572 = vmatpush1.bf16.msra.mxu0 %v2550
    %2573 = vmatprep.subr.bf16.mxu0 0
    %2574 = vmatpush1.bf16.msra.mxu0 %v2551
    %2575 = vmatprep.subr.bf16.mxu0 0
    %2576 = vmatpush1.bf16.msra.mxu0 %v2552
    %2577 = vmatprep.subr.bf16.mxu0 0
    %2578 = vmatpush1.bf16.msra.mxu0 0
    %2579 = vmatprep.subr.bf16.mxu0 0
    %2580 = vmatpush1.bf16.msra.mxu0 0
    %2581 = vmatprep.subr.bf16.mxu0 0
    %2582 = vmatpush1.bf16.msra.mxu0 0
    %2583 = vmatprep.subr.bf16.mxu0 0
    %2584 = vmatpush1.bf16.msra.mxu0 0
    %2585 = vmatprep.subr.bf16.mxu0 0
    %2586 = vmatpush1.bf16.msra.mxu0 0
    %2587 = vmatprep.subr.bf16.mxu0 0
    %2588 = vmatpush1.bf16.msra.mxu0 0
    %2589 = vmatprep.subr.bf16.mxu0 0
    %2590 = vmatpush1.bf16.msra.mxu0 0
    %2591 = vmatprep.subr.bf16.mxu0 0
    %2592 = vmatpush1.bf16.msra.mxu0 0
    %2593 = vmatprep.mubr.bf16.mxu0 0
    %2594 = vmatmul.mubr.bf16.gmra.mrb[0].mxu0 %v2489
    %v2595 = vpop.f32.mrb[0].mxu0
    %v2596 = vadd.f32 %v2511, %v2595
    %v2597 = vpop.f32.mrb[0].mxu0
    %v2598 = vpop.f32.mrb[0].mxu0
    %v2599 = vadd.f32 %v2511, %v2598
    %v2600 = vpop.f32.mrb[0].mxu0
    %2601 = vdwg.mxu0
    %v2602 = vld [vmem:[#allocation18] sm:$0xff]
    %v2603 = vld [vmem:[#allocation18 + $0x8] sm:$0xff]
    %v2604 = vld [vmem:[#allocation18 + $0x10] sm:$0xff]
    %v2605 = vld [vmem:[#allocation18 + $0x18] sm:$0xff]
    %v2606 = vld [vmem:[#allocation19] sm:$0x1]
    %v2608 = vlaneseq
    %v2609 = vshrl.u32 %v2608, 7
    %v2610 = vsub.s32 0, %v2609
    %v2611 = vrot.slane %v2606, %v2610
    %v2614 = vsel %vm346, 0.0, 0
    %2616 = vmatprep.subr.mxu0 0.0
    %2617 = vmatpush1.msra.mxu0 %v2602
    %2618 = vmatprep.subr.mxu0 0.0
    %2619 = vmatpush1.msra.mxu0 %v2603
    %2620 = vmatprep.subr.mxu0 0.0
    %2621 = vmatpush1.msra.mxu0 %v2604
    %2622 = vmatprep.subr.mxu0 0.0
    %2623 = vmatpush1.msra.mxu0 %v2605
    %2624 = vmatprep.subr.mxu0 0.0
    %2625 = vmatpush1.msra.mxu0 0.0
    %2626 = vmatprep.subr.mxu0 0.0
    %2627 = vmatpush1.msra.mxu0 0.0
    %2628 = vmatprep.subr.mxu0 0.0
    %2629 = vmatpush1.msra.mxu0 0.0
    %2630 = vmatprep.subr.mxu0 0.0
    %2631 = vmatpush1.msra.mxu0 0.0
    %2632 = vmatprep.subr.mxu0 0.0
    %2633 = vmatpush1.msra.mxu0 0.0
    %2634 = vmatprep.subr.mxu0 0.0
    %2635 = vmatpush1.msra.mxu0 0.0
    %2636 = vmatprep.subr.mxu0 0.0
    %2637 = vmatpush1.msra.mxu0 0.0
    %2638 = vmatprep.subr.mxu0 0.0
    %2639 = vmatpush1.msra.mxu0 0.0
    %2640 = vmatprep.subr.mxu0 0.0
    %2641 = vmatpush1.msra.mxu0 0.0
    %2642 = vmatprep.subr.mxu0 0.0
    %2643 = vmatpush1.msra.mxu0 0.0
    %2644 = vmatprep.subr.mxu0 0.0
    %2645 = vmatpush1.msra.mxu0 0.0
    %2646 = vmatprep.subr.mxu0 0.0
    %2647 = vmatpush1.msra.mxu0 0.0
    %2648 = vmatprep.subr.mxu0 0.0
    %2649 = vmatpush1.msra.mxu0 0.0
    %2650 = vmatprep.subr.mxu0 0.0
    %2651 = vmatpush1.msra.mxu0 0.0
    %2652 = vmatprep.subr.mxu0 0.0
    %2653 = vmatpush1.msra.mxu0 0.0
    %2654 = vmatprep.subr.mxu0 0.0
    %2655 = vmatpush1.msra.mxu0 0.0
    %2656 = vmatprep.subr.mxu0 0.0
    %2657 = vmatpush1.msra.mxu0 0.0
    %2658 = vmatprep.subr.mxu0 0.0
    %2659 = vmatpush1.msra.mxu0 0.0
    %2660 = vmatprep.subr.mxu0 0.0
    %2661 = vmatpush1.msra.mxu0 0.0
    %2662 = vmatprep.subr.mxu0 0.0
    %2663 = vmatpush1.msra.mxu0 0.0
    %2664 = vmatprep.subr.mxu0 0.0
    %2665 = vmatpush1.msra.mxu0 0.0
    %2666 = vmatprep.subr.mxu0 0.0
    %2667 = vmatpush1.msra.mxu0 0.0
    %2668 = vmatprep.subr.mxu0 0.0
    %2669 = vmatpush1.msra.mxu0 0.0
    %2670 = vmatprep.subr.mxu0 0.0
    %2671 = vmatpush1.msra.mxu0 0.0
    %2672 = vmatprep.subr.mxu0 0.0
    %2673 = vmatpush1.msra.mxu0 0.0
    %2674 = vmatprep.subr.mxu0 0.0
    %2675 = vmatpush1.msra.mxu0 0.0
    %2676 = vmatprep.subr.mxu0 0.0
    %2677 = vmatpush1.msra.mxu0 0.0
    %2678 = vmatprep.subr.mxu0 0.0
    %2679 = vmatpush1.msra.mxu0 0.0
    %2680 = vmatprep.mubr.f32.mxu0 0.0
    %2681 = vmatmul.mubr.f32.gmra.mrb[0].mxu0 %v2614
    %v2682 = vpop.f32.mrb[0].mxu0
    %v2683 = vadd.f32 %v2611, %v2682
    %v2684 = vpop.f32.mrb[0].mxu0
    %2685 = vdwg.mxu0
    %v2686 = vadd.f32 %v2596, %v2683
    %v2687 = vxor.u32 %v2686, 2147483648
    %v2688 = vmul.f32 %v2687, 1.442695
    %v2689 = vpow.pop %v2688
    %v2690 = vadd.f32 %v2689, 1.0
    %v2691 = vrcp.pop %v2690
    %v2692 = vmul.f32 1.0, %v2691
    %2694 = vrot.lane.b32.xlu0 %v2683, 96
    %v2695 = vpop.permute.xlu0 %2694
    %v2697 = vmul.f32 %v2692, %v2695
    %2699 = vrot.lane.b32.xlu0 %v2697, 32
    %v2700 = vpop.permute.xlu0 %2699
    %v2702 = vadd.f32 %v2596, %v2700
    %v2703 = vtanh.pop %v2702
    %v2704 = vsub.f32 1.0, %v2692
    %2706 = vrot.lane.b32.xlu0 %v2703, 112
    %v2707 = vpop.permute.xlu0 %2706
    %v2709 = vmul.f32 %v2704, %v2707
    %v2710 = vmul.f32 %v2692, 0.0
    %v2711 = vadd.f32 %v2709, %v2710
    %v2712 = vrot.slane %v2683, 2
    %v2714 = vadd.f32 %v2599, %v2712
    %v2715 = vxor.u32 %v2714, 2147483648
    %v2716 = vmul.f32 %v2715, 1.442695
    %v2717 = vpow.pop %v2716
    %v2718 = vadd.f32 %v2717, 1.0
    %v2719 = vrcp.pop %v2718
    %v2720 = vmul.f32 1.0, %v2719
    %2721 = vrot.lane.b32.xlu0 %v2712, 96
    %v2722 = vpop.permute.xlu0 %2721
    %v2724 = vmul.f32 %v2720, %v2722
    %2726 = vrot.lane.b32.xlu0 %v2724, 32
    %v2727 = vpop.permute.xlu0 %2726
    %v2729 = vadd.f32 %v2599, %v2727
    %v2730 = vtanh.pop %v2729
    %v2731 = vsub.f32 1.0, %v2720
    %2733 = vrot.lane.b32.xlu0 %v2730, 112
    %v2734 = vpop.permute.xlu0 %2733
    %v2736 = vmul.f32 %v2731, %v2734
    %v2737 = vmul.f32 %v2720, 0.0
    %v2738 = vadd.f32 %v2736, %v2737
    %2740 = vrot.lane.b32.xlu0 %v2711, 112
    %v2741 = vpop.permute.xlu0 %2740
    %v2744 = vrot.slane %v2738, 6
    %2745 = vrot.lane.b32.xlu0 %v2744, 80
    %v2746 = vpop.permute.xlu0 %2745
    %v2748 = vsel %vm272, %v2741, %v2746
    %v2750 = vsel %vm346, %v2748, 0
    %2752 = vmatprep.subr.mxu0 0.0
    %2753 = vmatpush1.msra.mxu0 %v2602
    %2754 = vmatprep.subr.mxu0 0.0
    %2755 = vmatpush1.msra.mxu0 %v2603
    %2756 = vmatprep.subr.mxu0 0.0
    %2757 = vmatpush1.msra.mxu0 %v2604
    %2758 = vmatprep.subr.mxu0 0.0
    %2759 = vmatpush1.msra.mxu0 %v2605
    %2760 = vmatprep.subr.mxu0 0.0
    %2761 = vmatpush1.msra.mxu0 0.0
    %2762 = vmatprep.subr.mxu0 0.0
    %2763 = vmatpush1.msra.mxu0 0.0
    %2764 = vmatprep.subr.mxu0 0.0
    %2765 = vmatpush1.msra.mxu0 0.0
    %2766 = vmatprep.subr.mxu0 0.0
    %2767 = vmatpush1.msra.mxu0 0.0
    %2768 = vmatprep.subr.mxu0 0.0
    %2769 = vmatpush1.msra.mxu0 0.0
    %2770 = vmatprep.subr.mxu0 0.0
    %2771 = vmatpush1.msra.mxu0 0.0
    %2772 = vmatprep.subr.mxu0 0.0
    %2773 = vmatpush1.msra.mxu0 0.0
    %2774 = vmatprep.subr.mxu0 0.0
    %2775 = vmatpush1.msra.mxu0 0.0
    %2776 = vmatprep.subr.mxu0 0.0
    %2777 = vmatpush1.msra.mxu0 0.0
    %2778 = vmatprep.subr.mxu0 0.0
    %2779 = vmatpush1.msra.mxu0 0.0
    %2780 = vmatprep.subr.mxu0 0.0
    %2781 = vmatpush1.msra.mxu0 0.0
    %2782 = vmatprep.subr.mxu0 0.0
    %2783 = vmatpush1.msra.mxu0 0.0
    %2784 = vmatprep.subr.mxu0 0.0
    %2785 = vmatpush1.msra.mxu0 0.0
    %2786 = vmatprep.subr.mxu0 0.0
    %2787 = vmatpush1.msra.mxu0 0.0
    %2788 = vmatprep.subr.mxu0 0.0
    %2789 = vmatpush1.msra.mxu0 0.0
    %2790 = vmatprep.subr.mxu0 0.0
    %2791 = vmatpush1.msra.mxu0 0.0
    %2792 = vmatprep.subr.mxu0 0.0
    %2793 = vmatpush1.msra.mxu0 0.0
    %2794 = vmatprep.subr.mxu0 0.0
    %2795 = vmatpush1.msra.mxu0 0.0
    %2796 = vmatprep.subr.mxu0 0.0
    %2797 = vmatpush1.msra.mxu0 0.0
    %2798 = vmatprep.subr.mxu0 0.0
    %2799 = vmatpush1.msra.mxu0 0.0
    %2800 = vmatprep.subr.mxu0 0.0
    %2801 = vmatpush1.msra.mxu0 0.0
    %2802 = vmatprep.subr.mxu0 0.0
    %2803 = vmatpush1.msra.mxu0 0.0
    %2804 = vmatprep.subr.mxu0 0.0
    %2805 = vmatpush1.msra.mxu0 0.0
    %2806 = vmatprep.subr.mxu0 0.0
    %2807 = vmatpush1.msra.mxu0 0.0
    %2808 = vmatprep.subr.mxu0 0.0
    %2809 = vmatpush1.msra.mxu0 0.0
    %2810 = vmatprep.subr.mxu0 0.0
    %2811 = vmatpush1.msra.mxu0 0.0
    %2812 = vmatprep.subr.mxu0 0.0
    %2813 = vmatpush1.msra.mxu0 0.0
    %2814 = vmatprep.subr.mxu0 0.0
    %2815 = vmatpush1.msra.mxu0 0.0
    %2816 = vmatprep.mubr.f32.mxu0 0.0
    %2817 = vmatmul.mubr.f32.gmra.mrb[0].mxu0 %v2750
    %v2818 = vpop.f32.mrb[0].mxu0
    %v2819 = vadd.f32 %v2611, %v2818
    %v2820 = vpop.f32.mrb[0].mxu0
    %2821 = vdwg.mxu0
    %v2823 = vrot.slane %v2819, 6
    %v2825 = vadd.f32 %v2596, %v2823
    %v2826 = vxor.u32 %v2825, 2147483648
    %v2827 = vmul.f32 %v2826, 1.442695
    %v2828 = vpow.pop %v2827
    %v2829 = vadd.f32 %v2828, 1.0
    %v2830 = vrcp.pop %v2829
    %v2831 = vmul.f32 1.0, %v2830
    %2832 = vrot.lane.b32.xlu0 %v2823, 96
    %v2833 = vpop.permute.xlu0 %2832
    %v2835 = vmul.f32 %v2831, %v2833
    %2837 = vrot.lane.b32.xlu0 %v2835, 32
    %v2838 = vpop.permute.xlu0 %2837
    %v2840 = vadd.f32 %v2596, %v2838
    %v2841 = vtanh.pop %v2840
    %v2842 = vsub.f32 1.0, %v2831
    %2844 = vrot.lane.b32.xlu0 %v2841, 112
    %v2845 = vpop.permute.xlu0 %2844
    %v2847 = vmul.f32 %v2842, %v2845
    %v2848 = vrot.slane %v2711, 6
    %v2850 = vmul.f32 %v2831, %v2848
    %v2851 = vadd.f32 %v2847, %v2850
    %v2852 = vrot.slane %v2819, 4
    %v2854 = vadd.f32 %v2599, %v2852
    %v2855 = vxor.u32 %v2854, 2147483648
    %v2856 = vmul.f32 %v2855, 1.442695
    %v2857 = vpow.pop %v2856
    %v2858 = vadd.f32 %v2857, 1.0
    %v2859 = vrcp.pop %v2858
    %v2860 = vmul.f32 1.0, %v2859
    %2861 = vrot.lane.b32.xlu0 %v2852, 96
    %v2862 = vpop.permute.xlu0 %2861
    %v2864 = vmul.f32 %v2860, %v2862
    %2866 = vrot.lane.b32.xlu0 %v2864, 32
    %v2867 = vpop.permute.xlu0 %2866
    %v2869 = vadd.f32 %v2599, %v2867
    %v2870 = vtanh.pop %v2869
    %v2871 = vsub.f32 1.0, %v2860
    %2873 = vrot.lane.b32.xlu0 %v2870, 112
    %v2874 = vpop.permute.xlu0 %2873
    %v2876 = vmul.f32 %v2871, %v2874
    %v2877 = vrot.slane %v2738, 2
    %v2879 = vmul.f32 %v2860, %v2877
    %v2880 = vadd.f32 %v2876, %v2879
    %2882 = vrot.lane.b32.xlu0 %v2851, 112
    %v2883 = vpop.permute.xlu0 %2882
    %v2886 = vrot.slane %v2880, 2
    %2887 = vrot.lane.b32.xlu0 %v2886, 80
    %v2888 = vpop.permute.xlu0 %2887
    %v2890 = vsel %vm272, %v2883, %v2888
    %v2892 = vrot.slane %v2890, 2
    %v2893 = vsel %vm346, %v2892, 0
    %2895 = vmatprep.subr.mxu0 0.0
    %2896 = vmatpush1.msra.mxu0 %v2602
    %2897 = vmatprep.subr.mxu0 0.0
    %2898 = vmatpush1.msra.mxu0 %v2603
    %2899 = vmatprep.subr.mxu0 0.0
    %2900 = vmatpush1.msra.mxu0 %v2604
    %2901 = vmatprep.subr.mxu0 0.0
    %2902 = vmatpush1.msra.mxu0 %v2605
    %2903 = vmatprep.subr.mxu0 0.0
    %2904 = vmatpush1.msra.mxu0 0.0
    %2905 = vmatprep.subr.mxu0 0.0
    %2906 = vmatpush1.msra.mxu0 0.0
    %2907 = vmatprep.subr.mxu0 0.0
    %2908 = vmatpush1.msra.mxu0 0.0
    %2909 = vmatprep.subr.mxu0 0.0
    %2910 = vmatpush1.msra.mxu0 0.0
    %2911 = vmatprep.subr.mxu0 0.0
    %2912 = vmatpush1.msra.mxu0 0.0
    %2913 = vmatprep.subr.mxu0 0.0
    %2914 = vmatpush1.msra.mxu0 0.0
    %2915 = vmatprep.subr.mxu0 0.0
    %2916 = vmatpush1.msra.mxu0 0.0
    %2917 = vmatprep.subr.mxu0 0.0
    %2918 = vmatpush1.msra.mxu0 0.0
    %2919 = vmatprep.subr.mxu0 0.0
    %2920 = vmatpush1.msra.mxu0 0.0
    %2921 = vmatprep.subr.mxu0 0.0
    %2922 = vmatpush1.msra.mxu0 0.0
    %2923 = vmatprep.subr.mxu0 0.0
    %2924 = vmatpush1.msra.mxu0 0.0
    %2925 = vmatprep.subr.mxu0 0.0
    %2926 = vmatpush1.msra.mxu0 0.0
    %2927 = vmatprep.subr.mxu0 0.0
    %2928 = vmatpush1.msra.mxu0 0.0
    %2929 = vmatprep.subr.mxu0 0.0
    %2930 = vmatpush1.msra.mxu0 0.0
    %2931 = vmatprep.subr.mxu0 0.0
    %2932 = vmatpush1.msra.mxu0 0.0
    %2933 = vmatprep.subr.mxu0 0.0
    %2934 = vmatpush1.msra.mxu0 0.0
    %2935 = vmatprep.subr.mxu0 0.0
    %2936 = vmatpush1.msra.mxu0 0.0
    %2937 = vmatprep.subr.mxu0 0.0
    %2938 = vmatpush1.msra.mxu0 0.0
    %2939 = vmatprep.subr.mxu0 0.0
    %2940 = vmatpush1.msra.mxu0 0.0
    %2941 = vmatprep.subr.mxu0 0.0
    %2942 = vmatpush1.msra.mxu0 0.0
    %2943 = vmatprep.subr.mxu0 0.0
    %2944 = vmatpush1.msra.mxu0 0.0
    %2945 = vmatprep.subr.mxu0 0.0
    %2946 = vmatpush1.msra.mxu0 0.0
    %2947 = vmatprep.subr.mxu0 0.0
    %2948 = vmatpush1.msra.mxu0 0.0
    %2949 = vmatprep.subr.mxu0 0.0
    %2950 = vmatpush1.msra.mxu0 0.0
    %2951 = vmatprep.subr.mxu0 0.0
    %2952 = vmatpush1.msra.mxu0 0.0
    %2953 = vmatprep.subr.mxu0 0.0
    %2954 = vmatpush1.msra.mxu0 0.0
    %2955 = vmatprep.subr.mxu0 0.0
    %2956 = vmatpush1.msra.mxu0 0.0
    %2957 = vmatprep.subr.mxu0 0.0
    %2958 = vmatpush1.msra.mxu0 0.0
    %2959 = vmatprep.mubr.f32.mxu0 0.0
    %2960 = vmatmul.mubr.f32.gmra.mrb[0].mxu0 %v2893
    %v2961 = vpop.f32.mrb[0].mxu0
    %v2962 = vadd.f32 %v2611, %v2961
    %v2963 = vpop.f32.mrb[0].mxu0
    %2964 = vdwg.mxu0
    %v2966 = vrot.slane %v2962, 4
    %v2968 = vadd.f32 %v2596, %v2966
    %v2969 = vxor.u32 %v2968, 2147483648
    %v2970 = vmul.f32 %v2969, 1.442695
    %v2971 = vpow.pop %v2970
    %v2972 = vadd.f32 %v2971, 1.0
    %v2973 = vrcp.pop %v2972
    %v2974 = vmul.f32 1.0, %v2973
    %2975 = vrot.lane.b32.xlu0 %v2966, 96
    %v2976 = vpop.permute.xlu0 %2975
    %v2978 = vmul.f32 %v2974, %v2976
    %2980 = vrot.lane.b32.xlu0 %v2978, 32
    %v2981 = vpop.permute.xlu0 %2980
    %v2983 = vadd.f32 %v2596, %v2981
    %v2984 = vtanh.pop %v2983
    %v2985 = vsub.f32 1.0, %v2974
    %2987 = vrot.lane.b32.xlu0 %v2984, 112
    %v2988 = vpop.permute.xlu0 %2987
    %v2990 = vmul.f32 %v2985, %v2988
    %v2991 = vrot.slane %v2851, 6
    %v2993 = vmul.f32 %v2974, %v2991
    %v2994 = vadd.f32 %v2990, %v2993
    %v2995 = vrot.slane %v2962, 6
    %v2997 = vadd.f32 %v2599, %v2995
    %v2998 = vxor.u32 %v2997, 2147483648
    %v2999 = vmul.f32 %v2998, 1.442695
    %v3000 = vpow.pop %v2999
    %v3001 = vadd.f32 %v3000, 1.0
    %v3002 = vrcp.pop %v3001
    %v3003 = vmul.f32 1.0, %v3002
    %3004 = vrot.lane.b32.xlu0 %v2995, 96
    %v3005 = vpop.permute.xlu0 %3004
    %v3007 = vmul.f32 %v3003, %v3005
    %3009 = vrot.lane.b32.xlu0 %v3007, 32
    %v3010 = vpop.permute.xlu0 %3009
    %v3012 = vadd.f32 %v2599, %v3010
    %v3013 = vtanh.pop %v3012
    %v3014 = vsub.f32 1.0, %v3003
    %3016 = vrot.lane.b32.xlu0 %v3013, 112
    %v3017 = vpop.permute.xlu0 %3016
    %v3019 = vmul.f32 %v3014, %v3017
    %v3021 = vmul.f32 %v3003, %v2886
    %v3022 = vadd.f32 %v3019, %v3021
    %3024 = vrot.lane.b32.xlu0 %v2994, 112
    %v3025 = vpop.permute.xlu0 %3024
    %v3028 = vrot.slane %v3022, 6
    %3029 = vrot.lane.b32.xlu0 %v3028, 80
    %v3030 = vpop.permute.xlu0 %3029
    %v3032 = vsel %vm272, %v3025, %v3030
    %v3034 = vrot.slane %v3032, 4
    %v3035 = vsel %vm346, %v3034, 0
    %3037 = vmatprep.subr.mxu0 0.0
    %3038 = vmatpush1.msra.mxu0 %v2602
    %3039 = vmatprep.subr.mxu0 0.0
    %3040 = vmatpush1.msra.mxu0 %v2603
    %3041 = vmatprep.subr.mxu0 0.0
    %3042 = vmatpush1.msra.mxu0 %v2604
    %3043 = vmatprep.subr.mxu0 0.0
    %3044 = vmatpush1.msra.mxu0 %v2605
    %3045 = vmatprep.subr.mxu0 0.0
    %3046 = vmatpush1.msra.mxu0 0.0
    %3047 = vmatprep.subr.mxu0 0.0
    %3048 = vmatpush1.msra.mxu0 0.0
    %3049 = vmatprep.subr.mxu0 0.0
    %3050 = vmatpush1.msra.mxu0 0.0
    %3051 = vmatprep.subr.mxu0 0.0
    %3052 = vmatpush1.msra.mxu0 0.0
    %3053 = vmatprep.subr.mxu0 0.0
    %3054 = vmatpush1.msra.mxu0 0.0
    %3055 = vmatprep.subr.mxu0 0.0
    %3056 = vmatpush1.msra.mxu0 0.0
    %3057 = vmatprep.subr.mxu0 0.0
    %3058 = vmatpush1.msra.mxu0 0.0
    %3059 = vmatprep.subr.mxu0 0.0
    %3060 = vmatpush1.msra.mxu0 0.0
    %3061 = vmatprep.subr.mxu0 0.0
    %3062 = vmatpush1.msra.mxu0 0.0
    %3063 = vmatprep.subr.mxu0 0.0
    %3064 = vmatpush1.msra.mxu0 0.0
    %3065 = vmatprep.subr.mxu0 0.0
    %3066 = vmatpush1.msra.mxu0 0.0
    %3067 = vmatprep.subr.mxu0 0.0
    %3068 = vmatpush1.msra.mxu0 0.0
    %3069 = vmatprep.subr.mxu0 0.0
    %3070 = vmatpush1.msra.mxu0 0.0
    %3071 = vmatprep.subr.mxu0 0.0
    %3072 = vmatpush1.msra.mxu0 0.0
    %3073 = vmatprep.subr.mxu0 0.0
    %3074 = vmatpush1.msra.mxu0 0.0
    %3075 = vmatprep.subr.mxu0 0.0
    %3076 = vmatpush1.msra.mxu0 0.0
    %3077 = vmatprep.subr.mxu0 0.0
    %3078 = vmatpush1.msra.mxu0 0.0
    %3079 = vmatprep.subr.mxu0 0.0
    %3080 = vmatpush1.msra.mxu0 0.0
    %3081 = vmatprep.subr.mxu0 0.0
    %3082 = vmatpush1.msra.mxu0 0.0
    %3083 = vmatprep.subr.mxu0 0.0
    %3084 = vmatpush1.msra.mxu0 0.0
    %3085 = vmatprep.subr.mxu0 0.0
    %3086 = vmatpush1.msra.mxu0 0.0
    %3087 = vmatprep.subr.mxu0 0.0
    %3088 = vmatpush1.msra.mxu0 0.0
    %3089 = vmatprep.subr.mxu0 0.0
    %3090 = vmatpush1.msra.mxu0 0.0
    %3091 = vmatprep.subr.mxu0 0.0
    %3092 = vmatpush1.msra.mxu0 0.0
    %3093 = vmatprep.subr.mxu0 0.0
    %3094 = vmatpush1.msra.mxu0 0.0
    %3095 = vmatprep.subr.mxu0 0.0
    %3096 = vmatpush1.msra.mxu0 0.0
    %3097 = vmatprep.subr.mxu0 0.0
    %3098 = vmatpush1.msra.mxu0 0.0
    %3099 = vmatprep.subr.mxu0 0.0
    %3100 = vmatpush1.msra.mxu0 0.0
    %3101 = vmatprep.mubr.f32.mxu0 0.0
    %3102 = vmatmul.mubr.f32.gmra.mrb[0].mxu0 %v3035
    %v3103 = vpop.f32.mrb[0].mxu0
    %v3104 = vadd.f32 %v2611, %v3103
    %v3105 = vpop.f32.mrb[0].mxu0
    %3106 = vdwg.mxu0
    %v3108 = vrot.slane %v3104, 2
    %v3110 = vadd.f32 %v2596, %v3108
    %v3111 = vxor.u32 %v3110, 2147483648
    %v3112 = vmul.f32 %v3111, 1.442695
    %v3113 = vpow.pop %v3112
    %v3114 = vadd.f32 %v3113, 1.0
    %v3115 = vrcp.pop %v3114
    %v3116 = vmul.f32 1.0, %v3115
    %3117 = vrot.lane.b32.xlu0 %v3108, 96
    %v3118 = vpop.permute.xlu0 %3117
    %v3120 = vmul.f32 %v3116, %v3118
    %3122 = vrot.lane.b32.xlu0 %v3120, 32
    %v3123 = vpop.permute.xlu0 %3122
    %v3125 = vadd.f32 %v2596, %v3123
    %v3126 = vtanh.pop %v3125
    %v3127 = vsub.f32 1.0, %v3116
    %3129 = vrot.lane.b32.xlu0 %v3126, 112
    %v3130 = vpop.permute.xlu0 %3129
    %v3132 = vmul.f32 %v3127, %v3130
    %v3133 = vrot.slane %v2994, 6
    %v3135 = vmul.f32 %v3116, %v3133
    %v3136 = vadd.f32 %v3132, %v3135
    %v3137 = vadd.f32 %v2599, %v3104
    %v3138 = vxor.u32 %v3137, 2147483648
    %v3139 = vmul.f32 %v3138, 1.442695
    %v3140 = vpow.pop %v3139
    %v3141 = vadd.f32 %v3140, 1.0
    %v3142 = vrcp.pop %v3141
    %v3143 = vmul.f32 1.0, %v3142
    %3144 = vrot.lane.b32.xlu0 %v3104, 96
    %v3145 = vpop.permute.xlu0 %3144
    %v3147 = vmul.f32 %v3143, %v3145
    %3149 = vrot.lane.b32.xlu0 %v3147, 32
    %v3150 = vpop.permute.xlu0 %3149
    %v3152 = vadd.f32 %v2599, %v3150
    %v3153 = vtanh.pop %v3152
    %v3154 = vsub.f32 1.0, %v3143
    %3156 = vrot.lane.b32.xlu0 %v3153, 112
    %v3157 = vpop.permute.xlu0 %3156
    %v3159 = vmul.f32 %v3154, %v3157
    %v3160 = vrot.slane %v3022, 2
    %v3162 = vmul.f32 %v3143, %v3160
    %v3163 = vadd.f32 %v3159, %v3162
    %3165 = vrot.lane.b32.xlu0 %v3136, 112
    %v3166 = vpop.permute.xlu0 %3165
    %v3169 = vrot.slane %v3163, 2
    %3170 = vrot.lane.b32.xlu0 %v3169, 80
    %v3171 = vpop.permute.xlu0 %3170
    %v3173 = vsel %vm272, %v3166, %v3171
    %v3175 = vrot.slane %v3173, 6
    %v3176 = vsel %vm346, %v3175, 0
    %3178 = vmatprep.subr.mxu0 0.0
    %3179 = vmatpush1.msra.mxu0 %v2602
    %3180 = vmatprep.subr.mxu0 0.0
    %3181 = vmatpush1.msra.mxu0 %v2603
    %3182 = vmatprep.subr.mxu0 0.0
    %3183 = vmatpush1.msra.mxu0 %v2604
    %3184 = vmatprep.subr.mxu0 0.0
    %3185 = vmatpush1.msra.mxu0 %v2605
    %3186 = vmatprep.subr.mxu0 0.0
    %3187 = vmatpush1.msra.mxu0 0.0
    %3188 = vmatprep.subr.mxu0 0.0
    %3189 = vmatpush1.msra.mxu0 0.0
    %3190 = vmatprep.subr.mxu0 0.0
    %3191 = vmatpush1.msra.mxu0 0.0
    %3192 = vmatprep.subr.mxu0 0.0
    %3193 = vmatpush1.msra.mxu0 0.0
    %3194 = vmatprep.subr.mxu0 0.0
    %3195 = vmatpush1.msra.mxu0 0.0
    %3196 = vmatprep.subr.mxu0 0.0
    %3197 = vmatpush1.msra.mxu0 0.0
    %3198 = vmatprep.subr.mxu0 0.0
    %3199 = vmatpush1.msra.mxu0 0.0
    %3200 = vmatprep.subr.mxu0 0.0
    %3201 = vmatpush1.msra.mxu0 0.0
    %3202 = vmatprep.subr.mxu0 0.0
    %3203 = vmatpush1.msra.mxu0 0.0
    %3204 = vmatprep.subr.mxu0 0.0
    %3205 = vmatpush1.msra.mxu0 0.0
    %3206 = vmatprep.subr.mxu0 0.0
    %3207 = vmatpush1.msra.mxu0 0.0
    %3208 = vmatprep.subr.mxu0 0.0
    %3209 = vmatpush1.msra.mxu0 0.0
    %3210 = vmatprep.subr.mxu0 0.0
    %3211 = vmatpush1.msra.mxu0 0.0
    %3212 = vmatprep.subr.mxu0 0.0
    %3213 = vmatpush1.msra.mxu0 0.0
    %3214 = vmatprep.subr.mxu0 0.0
    %3215 = vmatpush1.msra.mxu0 0.0
    %3216 = vmatprep.subr.mxu0 0.0
    %3217 = vmatpush1.msra.mxu0 0.0
    %3218 = vmatprep.subr.mxu0 0.0
    %3219 = vmatpush1.msra.mxu0 0.0
    %3220 = vmatprep.subr.mxu0 0.0
    %3221 = vmatpush1.msra.mxu0 0.0
    %3222 = vmatprep.subr.mxu0 0.0
    %3223 = vmatpush1.msra.mxu0 0.0
    %3224 = vmatprep.subr.mxu0 0.0
    %3225 = vmatpush1.msra.mxu0 0.0
    %3226 = vmatprep.subr.mxu0 0.0
    %3227 = vmatpush1.msra.mxu0 0.0
    %3228 = vmatprep.subr.mxu0 0.0
    %3229 = vmatpush1.msra.mxu0 0.0
    %3230 = vmatprep.subr.mxu0 0.0
    %3231 = vmatpush1.msra.mxu0 0.0
    %3232 = vmatprep.subr.mxu0 0.0
    %3233 = vmatpush1.msra.mxu0 0.0
    %3234 = vmatprep.subr.mxu0 0.0
    %3235 = vmatpush1.msra.mxu0 0.0
    %3236 = vmatprep.subr.mxu0 0.0
    %3237 = vmatpush1.msra.mxu0 0.0
    %3238 = vmatprep.subr.mxu0 0.0
    %3239 = vmatpush1.msra.mxu0 0.0
    %3240 = vmatprep.subr.mxu0 0.0
    %3241 = vmatpush1.msra.mxu0 0.0
    %3242 = vmatprep.mubr.f32.mxu0 0.0
    %3243 = vmatmul.mubr.f32.gmra.mrb[0].mxu0 %v3176
    %v3244 = vpop.f32.mrb[0].mxu0
    %v3245 = vadd.f32 %v2611, %v3244
    %v3246 = vpop.f32.mrb[0].mxu0
    %3247 = vdwg.mxu0
    %v3248 = vadd.f32 %v2599, %v3245
    %v3249 = vxor.u32 %v3248, 2147483648
    %v3250 = vmul.f32 %v3249, 1.442695
    %v3251 = vpow.pop %v3250
    %v3252 = vadd.f32 %v3251, 1.0
    %v3253 = vrcp.pop %v3252
    %v3254 = vmul.f32 1.0, %v3253
    %3256 = vrot.lane.b32.xlu0 %v3245, 96
    %v3257 = vpop.permute.xlu0 %3256
    %v3259 = vmul.f32 %v3254, %v3257
    %3261 = vrot.lane.b32.xlu0 %v3259, 32
    %v3262 = vpop.permute.xlu0 %3261
    %v3264 = vadd.f32 %v2599, %v3262
    %v3265 = vtanh.pop %v3264
    %v3266 = vsub.f32 1.0, %v3254
    %3268 = vrot.lane.b32.xlu0 %v3265, 112
    %v3269 = vpop.permute.xlu0 %3268
    %v3271 = vmul.f32 %v3266, %v3269
    %v3272 = vrot.slane %v3136, 6
    %v3274 = vmul.f32 %v3254, %v3272
    %v3275 = vadd.f32 %v3271, %v3274
    %v3276 = vrot.slane %v3245, 2
    %v3278 = vadd.f32 %v2596, %v3276
    %v3279 = vxor.u32 %v3278, 2147483648
    %v3280 = vmul.f32 %v3279, 1.442695
    %v3281 = vpow.pop %v3280
    %v3282 = vadd.f32 %v3281, 1.0
    %v3283 = vrcp.pop %v3282
    %v3284 = vmul.f32 1.0, %v3283
    %3285 = vrot.lane.b32.xlu0 %v3276, 96
    %v3286 = vpop.permute.xlu0 %3285
    %v3288 = vmul.f32 %v3284, %v3286
    %3290 = vrot.lane.b32.xlu0 %v3288, 32
    %v3291 = vpop.permute.xlu0 %3290
    %v3293 = vadd.f32 %v2596, %v3291
    %v3294 = vtanh.pop %v3293
    %v3295 = vsub.f32 1.0, %v3284
    %3297 = vrot.lane.b32.xlu0 %v3294, 112
    %v3298 = vpop.permute.xlu0 %3297
    %v3300 = vmul.f32 %v3295, %v3298
    %v3302 = vmul.f32 %v3284, %v3169
    %v3303 = vadd.f32 %v3300, %v3302
    %3305 = vrot.lane.b32.xlu0 %v3275, 112
    %v3306 = vpop.permute.xlu0 %3305
    %v3309 = vrot.slane %v3303, 6
    %3310 = vrot.lane.b32.xlu0 %v3309, 80
    %v3311 = vpop.permute.xlu0 %3310
    %v3313 = vsel %vm272, %v3306, %v3311
    %v3315 = vsel %vm346, %v3313, 0
    %3317 = vmatprep.subr.mxu0 0.0
    %3318 = vmatpush1.msra.mxu0 %v2602
    %3319 = vmatprep.subr.mxu0 0.0
    %3320 = vmatpush1.msra.mxu0 %v2603
    %3321 = vmatprep.subr.mxu0 0.0
    %3322 = vmatpush1.msra.mxu0 %v2604
    %3323 = vmatprep.subr.mxu0 0.0
    %3324 = vmatpush1.msra.mxu0 %v2605
    %3325 = vmatprep.subr.mxu0 0.0
    %3326 = vmatpush1.msra.mxu0 0.0
    %3327 = vmatprep.subr.mxu0 0.0
    %3328 = vmatpush1.msra.mxu0 0.0
    %3329 = vmatprep.subr.mxu0 0.0
    %3330 = vmatpush1.msra.mxu0 0.0
    %3331 = vmatprep.subr.mxu0 0.0
    %3332 = vmatpush1.msra.mxu0 0.0
    %3333 = vmatprep.subr.mxu0 0.0
    %3334 = vmatpush1.msra.mxu0 0.0
    %3335 = vmatprep.subr.mxu0 0.0
    %3336 = vmatpush1.msra.mxu0 0.0
    %3337 = vmatprep.subr.mxu0 0.0
    %3338 = vmatpush1.msra.mxu0 0.0
    %3339 = vmatprep.subr.mxu0 0.0
    %3340 = vmatpush1.msra.mxu0 0.0
    %3341 = vmatprep.subr.mxu0 0.0
    %3342 = vmatpush1.msra.mxu0 0.0
    %3343 = vmatprep.subr.mxu0 0.0
    %3344 = vmatpush1.msra.mxu0 0.0
    %3345 = vmatprep.subr.mxu0 0.0
    %3346 = vmatpush1.msra.mxu0 0.0
    %3347 = vmatprep.subr.mxu0 0.0
    %3348 = vmatpush1.msra.mxu0 0.0
    %3349 = vmatprep.subr.mxu0 0.0
    %3350 = vmatpush1.msra.mxu0 0.0
    %3351 = vmatprep.subr.mxu0 0.0
    %3352 = vmatpush1.msra.mxu0 0.0
    %3353 = vmatprep.subr.mxu0 0.0
    %3354 = vmatpush1.msra.mxu0 0.0
    %3355 = vmatprep.subr.mxu0 0.0
    %3356 = vmatpush1.msra.mxu0 0.0
    %3357 = vmatprep.subr.mxu0 0.0
    %3358 = vmatpush1.msra.mxu0 0.0
    %3359 = vmatprep.subr.mxu0 0.0
    %3360 = vmatpush1.msra.mxu0 0.0
    %3361 = vmatprep.subr.mxu0 0.0
    %3362 = vmatpush1.msra.mxu0 0.0
    %3363 = vmatprep.subr.mxu0 0.0
    %3364 = vmatpush1.msra.mxu0 0.0
    %3365 = vmatprep.subr.mxu0 0.0
    %3366 = vmatpush1.msra.mxu0 0.0
    %3367 = vmatprep.subr.mxu0 0.0
    %3368 = vmatpush1.msra.mxu0 0.0
    %3369 = vmatprep.subr.mxu0 0.0
    %3370 = vmatpush1.msra.mxu0 0.0
    %3371 = vmatprep.subr.mxu0 0.0
    %3372 = vmatpush1.msra.mxu0 0.0
    %3373 = vmatprep.subr.mxu0 0.0
    %3374 = vmatpush1.msra.mxu0 0.0
    %3375 = vmatprep.subr.mxu0 0.0
    %3376 = vmatpush1.msra.mxu0 0.0
    %3377 = vmatprep.subr.mxu0 0.0
    %3378 = vmatpush1.msra.mxu0 0.0
    %3379 = vmatprep.subr.mxu0 0.0
    %3380 = vmatpush1.msra.mxu0 0.0
    %3381 = vmatprep.mubr.f32.mxu0 0.0
    %3382 = vmatmul.mubr.f32.gmra.mrb[0].mxu0 %v3315
    %v3383 = vpop.f32.mrb[0].mxu0
    %v3384 = vadd.f32 %v2611, %v3383
    %v3385 = vpop.f32.mrb[0].mxu0
    %3386 = vdwg.mxu0
    %v3388 = vrot.slane %v3384, 6
    %v3390 = vadd.f32 %v2599, %v3388
    %v3391 = vxor.u32 %v3390, 2147483648
    %v3392 = vmul.f32 %v3391, 1.442695
    %v3393 = vpow.pop %v3392
    %v3394 = vadd.f32 %v3393, 1.0
    %v3395 = vrcp.pop %v3394
    %v3396 = vmul.f32 1.0, %v3395
    %3397 = vrot.lane.b32.xlu0 %v3388, 96
    %v3398 = vpop.permute.xlu0 %3397
    %v3400 = vmul.f32 %v3396, %v3398
    %3402 = vrot.lane.b32.xlu0 %v3400, 32
    %v3403 = vpop.permute.xlu0 %3402
    %v3405 = vadd.f32 %v2599, %v3403
    %v3406 = vtanh.pop %v3405
    %v3407 = vsub.f32 1.0, %v3396
    %3409 = vrot.lane.b32.xlu0 %v3406, 112
    %v3410 = vpop.permute.xlu0 %3409
    %v3412 = vmul.f32 %v3407, %v3410
    %v3413 = vrot.slane %v3275, 6
    %v3415 = vmul.f32 %v3396, %v3413
    %v3416 = vadd.f32 %v3412, %v3415
    %v3417 = vrot.slane %v3384, 4
    %v3419 = vadd.f32 %v2596, %v3417
    %v3420 = vxor.u32 %v3419, 2147483648
    %v3421 = vmul.f32 %v3420, 1.442695
    %v3422 = vpow.pop %v3421
    %v3423 = vadd.f32 %v3422, 1.0
    %v3424 = vrcp.pop %v3423
    %v3425 = vmul.f32 1.0, %v3424
    %3426 = vrot.lane.b32.xlu0 %v3417, 96
    %v3427 = vpop.permute.xlu0 %3426
    %v3429 = vmul.f32 %v3425, %v3427
    %3431 = vrot.lane.b32.xlu0 %v3429, 32
    %v3432 = vpop.permute.xlu0 %3431
    %v3434 = vadd.f32 %v2596, %v3432
    %v3435 = vtanh.pop %v3434
    %v3436 = vsub.f32 1.0, %v3425
    %3438 = vrot.lane.b32.xlu0 %v3435, 112
    %v3439 = vpop.permute.xlu0 %3438
    %v3441 = vmul.f32 %v3436, %v3439
    %v3442 = vrot.slane %v3303, 2
    %v3444 = vmul.f32 %v3425, %v3442
    %v3445 = vadd.f32 %v3441, %v3444
    %3447 = vrot.lane.b32.xlu0 %v3416, 112
    %v3448 = vpop.permute.xlu0 %3447
    %v3451 = vrot.slane %v3445, 2
    %3452 = vrot.lane.b32.xlu0 %v3451, 80
    %v3453 = vpop.permute.xlu0 %3452
    %v3455 = vsel %vm272, %v3448, %v3453
    %v3457 = vrot.slane %v3455, 2
    %v3458 = vsel %vm346, %v3457, 0
    %3460 = vmatprep.subr.mxu0 0.0
    %3461 = vmatpush1.msra.mxu0 %v2602
    %3462 = vmatprep.subr.mxu0 0.0
    %3463 = vmatpush1.msra.mxu0 %v2603
    %3464 = vmatprep.subr.mxu0 0.0
    %3465 = vmatpush1.msra.mxu0 %v2604
    %3466 = vmatprep.subr.mxu0 0.0
    %3467 = vmatpush1.msra.mxu0 %v2605
    %3468 = vmatprep.subr.mxu0 0.0
    %3469 = vmatpush1.msra.mxu0 0.0
    %3470 = vmatprep.subr.mxu0 0.0
    %3471 = vmatpush1.msra.mxu0 0.0
    %3472 = vmatprep.subr.mxu0 0.0
    %3473 = vmatpush1.msra.mxu0 0.0
    %3474 = vmatprep.subr.mxu0 0.0
    %3475 = vmatpush1.msra.mxu0 0.0
    %3476 = vmatprep.subr.mxu0 0.0
    %3477 = vmatpush1.msra.mxu0 0.0
    %3478 = vmatprep.subr.mxu0 0.0
    %3479 = vmatpush1.msra.mxu0 0.0
    %3480 = vmatprep.subr.mxu0 0.0
    %3481 = vmatpush1.msra.mxu0 0.0
    %3482 = vmatprep.subr.mxu0 0.0
    %3483 = vmatpush1.msra.mxu0 0.0
    %3484 = vmatprep.subr.mxu0 0.0
    %3485 = vmatpush1.msra.mxu0 0.0
    %3486 = vmatprep.subr.mxu0 0.0
    %3487 = vmatpush1.msra.mxu0 0.0
    %3488 = vmatprep.subr.mxu0 0.0
    %3489 = vmatpush1.msra.mxu0 0.0
    %3490 = vmatprep.subr.mxu0 0.0
    %3491 = vmatpush1.msra.mxu0 0.0
    %3492 = vmatprep.subr.mxu0 0.0
    %3493 = vmatpush1.msra.mxu0 0.0
    %3494 = vmatprep.subr.mxu0 0.0
    %3495 = vmatpush1.msra.mxu0 0.0
    %3496 = vmatprep.subr.mxu0 0.0
    %3497 = vmatpush1.msra.mxu0 0.0
    %3498 = vmatprep.subr.mxu0 0.0
    %3499 = vmatpush1.msra.mxu0 0.0
    %3500 = vmatprep.subr.mxu0 0.0
    %3501 = vmatpush1.msra.mxu0 0.0
    %3502 = vmatprep.subr.mxu0 0.0
    %3503 = vmatpush1.msra.mxu0 0.0
    %3504 = vmatprep.subr.mxu0 0.0
    %3505 = vmatpush1.msra.mxu0 0.0
    %3506 = vmatprep.subr.mxu0 0.0
    %3507 = vmatpush1.msra.mxu0 0.0
    %3508 = vmatprep.subr.mxu0 0.0
    %3509 = vmatpush1.msra.mxu0 0.0
    %3510 = vmatprep.subr.mxu0 0.0
    %3511 = vmatpush1.msra.mxu0 0.0
    %3512 = vmatprep.subr.mxu0 0.0
    %3513 = vmatpush1.msra.mxu0 0.0
    %3514 = vmatprep.subr.mxu0 0.0
    %3515 = vmatpush1.msra.mxu0 0.0
    %3516 = vmatprep.subr.mxu0 0.0
    %3517 = vmatpush1.msra.mxu0 0.0
    %3518 = vmatprep.subr.mxu0 0.0
    %3519 = vmatpush1.msra.mxu0 0.0
    %3520 = vmatprep.subr.mxu0 0.0
    %3521 = vmatpush1.msra.mxu0 0.0
    %3522 = vmatprep.subr.mxu0 0.0
    %3523 = vmatpush1.msra.mxu0 0.0
    %3524 = vmatprep.mubr.f32.mxu0 0.0
    %3525 = vmatmul.mubr.f32.gmra.mrb[0].mxu0 %v3458
    %v3526 = vpop.f32.mrb[0].mxu0
    %v3527 = vadd.f32 %v2611, %v3526
    %v3528 = vpop.f32.mrb[0].mxu0
    %3529 = vdwg.mxu0
    %v3531 = vrot.slane %v3527, 4
    %v3533 = vadd.f32 %v2599, %v3531
    %v3534 = vxor.u32 %v3533, 2147483648
    %v3535 = vmul.f32 %v3534, 1.442695
    %v3536 = vpow.pop %v3535
    %v3537 = vadd.f32 %v3536, 1.0
    %v3538 = vrcp.pop %v3537
    %v3539 = vmul.f32 1.0, %v3538
    %3540 = vrot.lane.b32.xlu0 %v3531, 96
    %v3541 = vpop.permute.xlu0 %3540
    %v3543 = vmul.f32 %v3539, %v3541
    %3545 = vrot.lane.b32.xlu0 %v3543, 32
    %v3546 = vpop.permute.xlu0 %3545
    %v3548 = vadd.f32 %v2599, %v3546
    %v3549 = vtanh.pop %v3548
    %v3550 = vsub.f32 1.0, %v3539
    %3552 = vrot.lane.b32.xlu0 %v3549, 112
    %v3553 = vpop.permute.xlu0 %3552
    %v3555 = vmul.f32 %v3550, %v3553
    %v3556 = vrot.slane %v3416, 6
    %v3558 = vmul.f32 %v3539, %v3556
    %v3559 = vadd.f32 %v3555, %v3558
    %v3560 = vrot.slane %v3527, 6
    %v3562 = vadd.f32 %v2596, %v3560
    %v3563 = vxor.u32 %v3562, 2147483648
    %v3564 = vmul.f32 %v3563, 1.442695
    %v3565 = vpow.pop %v3564
    %v3566 = vadd.f32 %v3565, 1.0
    %v3567 = vrcp.pop %v3566
    %v3568 = vmul.f32 1.0, %v3567
    %3569 = vrot.lane.b32.xlu0 %v3560, 96
    %v3570 = vpop.permute.xlu0 %3569
    %v3572 = vmul.f32 %v3568, %v3570
    %3574 = vrot.lane.b32.xlu0 %v3572, 32
    %v3575 = vpop.permute.xlu0 %3574
    %v3577 = vadd.f32 %v2596, %v3575
    %v3578 = vtanh.pop %v3577
    %v3579 = vsub.f32 1.0, %v3568
    %3581 = vrot.lane.b32.xlu0 %v3578, 112
    %v3582 = vpop.permute.xlu0 %3581
    %v3584 = vmul.f32 %v3579, %v3582
    %v3586 = vmul.f32 %v3568, %v3451
    %v3587 = vadd.f32 %v3584, %v3586
    %3589 = vrot.lane.b32.xlu0 %v3559, 112
    %v3590 = vpop.permute.xlu0 %3589
    %v3593 = vrot.slane %v3587, 6
    %3594 = vrot.lane.b32.xlu0 %v3593, 80
    %v3595 = vpop.permute.xlu0 %3594
    %v3597 = vsel %vm272, %v3590, %v3595
    %v3599 = vrot.slane %v3597, 4
    %v3600 = vsel %vm346, %v3599, 0
    %3602 = vmatprep.subr.mxu0 0.0
    %3603 = vmatpush1.msra.mxu0 %v2602
    %3604 = vmatprep.subr.mxu0 0.0
    %3605 = vmatpush1.msra.mxu0 %v2603
    %3606 = vmatprep.subr.mxu0 0.0
    %3607 = vmatpush1.msra.mxu0 %v2604
    %3608 = vmatprep.subr.mxu0 0.0
    %3609 = vmatpush1.msra.mxu0 %v2605
    %3610 = vmatprep.subr.mxu0 0.0
    %3611 = vmatpush1.msra.mxu0 0.0
    %3612 = vmatprep.subr.mxu0 0.0
    %3613 = vmatpush1.msra.mxu0 0.0
    %3614 = vmatprep.subr.mxu0 0.0
    %3615 = vmatpush1.msra.mxu0 0.0
    %3616 = vmatprep.subr.mxu0 0.0
    %3617 = vmatpush1.msra.mxu0 0.0
    %3618 = vmatprep.subr.mxu0 0.0
    %3619 = vmatpush1.msra.mxu0 0.0
    %3620 = vmatprep.subr.mxu0 0.0
    %3621 = vmatpush1.msra.mxu0 0.0
    %3622 = vmatprep.subr.mxu0 0.0
    %3623 = vmatpush1.msra.mxu0 0.0
    %3624 = vmatprep.subr.mxu0 0.0
    %3625 = vmatpush1.msra.mxu0 0.0
    %3626 = vmatprep.subr.mxu0 0.0
    %3627 = vmatpush1.msra.mxu0 0.0
    %3628 = vmatprep.subr.mxu0 0.0
    %3629 = vmatpush1.msra.mxu0 0.0
    %3630 = vmatprep.subr.mxu0 0.0
    %3631 = vmatpush1.msra.mxu0 0.0
    %3632 = vmatprep.subr.mxu0 0.0
    %3633 = vmatpush1.msra.mxu0 0.0
    %3634 = vmatprep.subr.mxu0 0.0
    %3635 = vmatpush1.msra.mxu0 0.0
    %3636 = vmatprep.subr.mxu0 0.0
    %3637 = vmatpush1.msra.mxu0 0.0
    %3638 = vmatprep.subr.mxu0 0.0
    %3639 = vmatpush1.msra.mxu0 0.0
    %3640 = vmatprep.subr.mxu0 0.0
    %3641 = vmatpush1.msra.mxu0 0.0
    %3642 = vmatprep.subr.mxu0 0.0
    %3643 = vmatpush1.msra.mxu0 0.0
    %3644 = vmatprep.subr.mxu0 0.0
    %3645 = vmatpush1.msra.mxu0 0.0
    %3646 = vmatprep.subr.mxu0 0.0
    %3647 = vmatpush1.msra.mxu0 0.0
    %3648 = vmatprep.subr.mxu0 0.0
    %3649 = vmatpush1.msra.mxu0 0.0
    %3650 = vmatprep.subr.mxu0 0.0
    %3651 = vmatpush1.msra.mxu0 0.0
    %3652 = vmatprep.subr.mxu0 0.0
    %3653 = vmatpush1.msra.mxu0 0.0
    %3654 = vmatprep.subr.mxu0 0.0
    %3655 = vmatpush1.msra.mxu0 0.0
    %3656 = vmatprep.subr.mxu0 0.0
    %3657 = vmatpush1.msra.mxu0 0.0
    %3658 = vmatprep.subr.mxu0 0.0
    %3659 = vmatpush1.msra.mxu0 0.0
    %3660 = vmatprep.subr.mxu0 0.0
    %3661 = vmatpush1.msra.mxu0 0.0
    %3662 = vmatprep.subr.mxu0 0.0
    %3663 = vmatpush1.msra.mxu0 0.0
    %3664 = vmatprep.subr.mxu0 0.0
    %3665 = vmatpush1.msra.mxu0 0.0
    %3666 = vmatprep.mubr.f32.mxu0 0.0
    %3667 = vmatmul.mubr.f32.gmra.mrb[0].mxu0 %v3600
    %v3668 = vpop.f32.mrb[0].mxu0
    %v3669 = vadd.f32 %v2611, %v3668
    %v3670 = vpop.f32.mrb[0].mxu0
    %3671 = vdwg.mxu0
    %v3673 = vrot.slane %v3669, 2
    %v3675 = vadd.f32 %v2599, %v3673
    %v3676 = vxor.u32 %v3675, 2147483648
    %v3677 = vmul.f32 %v3676, 1.442695
    %v3678 = vpow.pop %v3677
    %v3679 = vadd.f32 %v3678, 1.0
    %v3680 = vrcp.pop %v3679
    %v3681 = vmul.f32 1.0, %v3680
    %3682 = vrot.lane.b32.xlu0 %v3673, 96
    %v3683 = vpop.permute.xlu0 %3682
    %v3685 = vmul.f32 %v3681, %v3683
    %3687 = vrot.lane.b32.xlu0 %v3685, 32
    %v3688 = vpop.permute.xlu0 %3687
    %v3690 = vadd.f32 %v2599, %v3688
    %v3691 = vtanh.pop %v3690
    %v3692 = vsub.f32 1.0, %v3681
    %3694 = vrot.lane.b32.xlu0 %v3691, 112
    %v3695 = vpop.permute.xlu0 %3694
    %v3697 = vmul.f32 %v3692, %v3695
    %v3698 = vrot.slane %v3559, 6
    %v3700 = vmul.f32 %v3681, %v3698
    %v3701 = vadd.f32 %v3697, %v3700
    %v3702 = vadd.f32 %v2596, %v3669
    %v3703 = vxor.u32 %v3702, 2147483648
    %v3704 = vmul.f32 %v3703, 1.442695
    %v3705 = vpow.pop %v3704
    %v3706 = vadd.f32 %v3705, 1.0
    %v3707 = vrcp.pop %v3706
    %v3708 = vmul.f32 1.0, %v3707
    %3709 = vrot.lane.b32.xlu0 %v3669, 96
    %v3710 = vpop.permute.xlu0 %3709
    %v3712 = vmul.f32 %v3708, %v3710
    %3714 = vrot.lane.b32.xlu0 %v3712, 32
    %v3715 = vpop.permute.xlu0 %3714
    %v3717 = vadd.f32 %v2596, %v3715
    %v3718 = vtanh.pop %v3717
    %v3719 = vsub.f32 1.0, %v3708
    %3721 = vrot.lane.b32.xlu0 %v3718, 112
    %v3722 = vpop.permute.xlu0 %3721
    %v3724 = vmul.f32 %v3719, %v3722
    %v3725 = vrot.slane %v3587, 2
    %v3727 = vmul.f32 %v3708, %v3725
    %v3728 = vadd.f32 %v3724, %v3727
    %3730 = vrot.lane.b32.xlu0 %v3728, 80
    %v3731 = vpop.permute.xlu0 %3730
    %v3733 = vsel %vm272, %v2741, %v3731
    %3734 = vrot.lane.b32.xlu0 %v3587, 80
    %v3735 = vpop.permute.xlu0 %3734
    %v3737 = vsel %vm272, %v2883, %v3735
    %3738 = vrot.lane.b32.xlu0 %v3445, 80
    %v3739 = vpop.permute.xlu0 %3738
    %v3741 = vsel %vm272, %v3025, %v3739
    %3742 = vrot.lane.b32.xlu0 %v3303, 80
    %v3743 = vpop.permute.xlu0 %3742
    %v3745 = vsel %vm272, %v3166, %v3743
    %3746 = vrot.lane.b32.xlu0 %v3163, 80
    %v3747 = vpop.permute.xlu0 %3746
    %v3749 = vsel %vm272, %v3306, %v3747
    %3750 = vrot.lane.b32.xlu0 %v3022, 80
    %v3751 = vpop.permute.xlu0 %3750
    %v3753 = vsel %vm272, %v3448, %v3751
    %3754 = vrot.lane.b32.xlu0 %v2880, 80
    %v3755 = vpop.permute.xlu0 %3754
    %v3757 = vsel %vm272, %v3590, %v3755
    %3759 = vrot.lane.b32.xlu0 %v3701, 112
    %v3760 = vpop.permute.xlu0 %3759
    %3762 = vrot.lane.b32.xlu0 %v2738, 80
    %v3763 = vpop.permute.xlu0 %3762
    %v3765 = vsel %vm272, %v3760, %v3763
    %v3766 = vsel %vm1902, %v3733, %v3737
    %vm3767 = vcmask 1043456
    %v3768 = vsel %vm3767, %v3766, %v3741
    %v3769 = vsel %vm259, %v3768, %v3745
    %v3770 = vsel %vm1902, %v3749, %v3753
    %v3771 = vsel %vm3767, %v3770, %v3757
    %v3772 = vsel %vm259, %v3771, %v3765
    %v3773 = vld [vmem:[#allocation21] sm:$0xff]
    %v3774 = vld [vmem:[#allocation21 + $0x8] sm:$0xff]
    %v3775 = vld [vmem:[#allocation21 + $0x10] sm:$0xff]
    %v3776 = vld [vmem:[#allocation21 + $0x18] sm:$0xff]
    %v3777 = vld [vmem:[#allocation22] sm:$0xff]
    %v3778 = vld [vmem:[#allocation22 + $0x8] sm:$0xff]
    %v3779 = vld [vmem:[#allocation22 + $0x10] sm:$0xff]
    %v3780 = vld [vmem:[#allocation22 + $0x18] sm:$0xff]
    %v3781 = vld [vmem:[#allocation22 + $0x20] sm:$0xff]
    %v3782 = vld [vmem:[#allocation22 + $0x28] sm:$0xff]
    %v3783 = vld [vmem:[#allocation22 + $0x30] sm:$0xff]
    %v3784 = vld [vmem:[#allocation22 + $0x38] sm:$0xff]
    %v3785 = vld [vmem:[#allocation22 + $0x40] sm:$0xff]
    %v3786 = vld [vmem:[#allocation22 + $0x48] sm:$0xff]
    %v3787 = vld [vmem:[#allocation22 + $0x50] sm:$0xff]
    %v3788 = vld [vmem:[#allocation22 + $0x58] sm:$0xff]
    %v3789 = vld [vmem:[#allocation22 + $0x60] sm:$0xff]
    %v3790 = vld [vmem:[#allocation22 + $0x68] sm:$0xff]
    %v3791 = vld [vmem:[#allocation22 + $0x70] sm:$0xff]
    %v3792 = vld [vmem:[#allocation22 + $0x78] sm:$0xff]
    %3793 = vmatprep.subr.mxu0 0.0
    %3794 = vmatpush1.msra.mxu0 %v3777
    %3795 = vmatprep.subr.mxu0 0.0
    %3796 = vmatpush1.msra.mxu0 %v3778
    %3797 = vmatprep.subr.mxu0 0.0
    %3798 = vmatpush1.msra.mxu0 %v3779
    %3799 = vmatprep.subr.mxu0 0.0
    %3800 = vmatpush1.msra.mxu0 %v3780
    %3801 = vmatprep.subr.mxu0 0.0
    %3802 = vmatpush1.msra.mxu0 %v3781
    %3803 = vmatprep.subr.mxu0 0.0
    %3804 = vmatpush1.msra.mxu0 %v3782
    %3805 = vmatprep.subr.mxu0 0.0
    %3806 = vmatpush1.msra.mxu0 %v3783
    %3807 = vmatprep.subr.mxu0 0.0
    %3808 = vmatpush1.msra.mxu0 %v3784
    %3809 = vmatprep.subr.mxu0 0.0
    %3810 = vmatpush1.msra.mxu0 %v3785
    %3811 = vmatprep.subr.mxu0 0.0
    %3812 = vmatpush1.msra.mxu0 %v3786
    %3813 = vmatprep.subr.mxu0 0.0
    %3814 = vmatpush1.msra.mxu0 %v3787
    %3815 = vmatprep.subr.mxu0 0.0
    %3816 = vmatpush1.msra.mxu0 %v3788
    %3817 = vmatprep.subr.mxu0 0.0
    %3818 = vmatpush1.msra.mxu0 %v3789
    %3819 = vmatprep.subr.mxu0 0.0
    %3820 = vmatpush1.msra.mxu0 %v3790
    %3821 = vmatprep.subr.mxu0 0.0
    %3822 = vmatpush1.msra.mxu0 %v3791
    %3823 = vmatprep.subr.mxu0 0.0
    %3824 = vmatpush1.msra.mxu0 %v3792
    %3825 = vmatprep.subr.mxu0 0.0
    %3826 = vmatpush1.msra.mxu0 0.0
    %3827 = vmatprep.subr.mxu0 0.0
    %3828 = vmatpush1.msra.mxu0 0.0
    %3829 = vmatprep.subr.mxu0 0.0
    %3830 = vmatpush1.msra.mxu0 0.0
    %3831 = vmatprep.subr.mxu0 0.0
    %3832 = vmatpush1.msra.mxu0 0.0
    %3833 = vmatprep.subr.mxu0 0.0
    %3834 = vmatpush1.msra.mxu0 0.0
    %3835 = vmatprep.subr.mxu0 0.0
    %3836 = vmatpush1.msra.mxu0 0.0
    %3837 = vmatprep.subr.mxu0 0.0
    %3838 = vmatpush1.msra.mxu0 0.0
    %3839 = vmatprep.subr.mxu0 0.0
    %3840 = vmatpush1.msra.mxu0 0.0
    %3841 = vmatprep.subr.mxu0 0.0
    %3842 = vmatpush1.msra.mxu0 0.0
    %3843 = vmatprep.subr.mxu0 0.0
    %3844 = vmatpush1.msra.mxu0 0.0
    %3845 = vmatprep.subr.mxu0 0.0
    %3846 = vmatpush1.msra.mxu0 0.0
    %3847 = vmatprep.subr.mxu0 0.0
    %3848 = vmatpush1.msra.mxu0 0.0
    %3849 = vmatprep.subr.mxu0 0.0
    %3850 = vmatpush1.msra.mxu0 0.0
    %3851 = vmatprep.subr.mxu0 0.0
    %3852 = vmatpush1.msra.mxu0 0.0
    %3853 = vmatprep.subr.mxu0 0.0
    %3854 = vmatpush1.msra.mxu0 0.0
    %3855 = vmatprep.subr.mxu0 0.0
    %3856 = vmatpush1.msra.mxu0 0.0
    %3857 = vmatprep.mubr.f32.mxu0 0.0
    %3858 = vmatmul.mubr.f32.gmra.mrb[0].mxu0 %v2487
    %v3859 = vpop.f32.mrb[0].mxu0
    %v3860 = vadd.f32 0.0, %v3859
    %v3861 = vpop.f32.mrb[0].mxu0
    %3862 = vmatprep.mubr.f32.mxu0 0.0
    %3863 = vmatmul.mubr.f32.gmra.mrb[0].mxu0 %v2488
    %v3864 = vpop.f32.mrb[0].mxu0
    %v3865 = vadd.f32 0.0, %v3864
    %v3866 = vpop.f32.mrb[0].mxu0
    %3867 = vdwg.mxu0
    %v3869 = vsel %vm346, %v3769, 0
    %v3872 = vsel %vm346, %v3772, 0
    %3874 = vmatprep.subr.mxu0 0.0
    %3875 = vmatpush1.msra.mxu0 %v3773
    %3876 = vmatprep.subr.mxu0 0.0
    %3877 = vmatpush1.msra.mxu0 %v3774
    %3878 = vmatprep.subr.mxu0 0.0
    %3879 = vmatpush1.msra.mxu0 %v3775
    %3880 = vmatprep.subr.mxu0 0.0
    %3881 = vmatpush1.msra.mxu0 %v3776
    %3882 = vmatprep.subr.mxu0 0.0
    %3883 = vmatpush1.msra.mxu0 0.0
    %3884 = vmatprep.subr.mxu0 0.0
    %3885 = vmatpush1.msra.mxu0 0.0
    %3886 = vmatprep.subr.mxu0 0.0
    %3887 = vmatpush1.msra.mxu0 0.0
    %3888 = vmatprep.subr.mxu0 0.0
    %3889 = vmatpush1.msra.mxu0 0.0
    %3890 = vmatprep.subr.mxu0 0.0
    %3891 = vmatpush1.msra.mxu0 0.0
    %3892 = vmatprep.subr.mxu0 0.0
    %3893 = vmatpush1.msra.mxu0 0.0
    %3894 = vmatprep.subr.mxu0 0.0
    %3895 = vmatpush1.msra.mxu0 0.0
    %3896 = vmatprep.subr.mxu0 0.0
    %3897 = vmatpush1.msra.mxu0 0.0
    %3898 = vmatprep.subr.mxu0 0.0
    %3899 = vmatpush1.msra.mxu0 0.0
    %3900 = vmatprep.subr.mxu0 0.0
    %3901 = vmatpush1.msra.mxu0 0.0
    %3902 = vmatprep.subr.mxu0 0.0
    %3903 = vmatpush1.msra.mxu0 0.0
    %3904 = vmatprep.subr.mxu0 0.0
    %3905 = vmatpush1.msra.mxu0 0.0
    %3906 = vmatprep.subr.mxu0 0.0
    %3907 = vmatpush1.msra.mxu0 0.0
    %3908 = vmatprep.subr.mxu0 0.0
    %3909 = vmatpush1.msra.mxu0 0.0
    %3910 = vmatprep.subr.mxu0 0.0
    %3911 = vmatpush1.msra.mxu0 0.0
    %3912 = vmatprep.subr.mxu0 0.0
    %3913 = vmatpush1.msra.mxu0 0.0
    %3914 = vmatprep.subr.mxu0 0.0
    %3915 = vmatpush1.msra.mxu0 0.0
    %3916 = vmatprep.subr.mxu0 0.0
    %3917 = vmatpush1.msra.mxu0 0.0
    %3918 = vmatprep.subr.mxu0 0.0
    %3919 = vmatpush1.msra.mxu0 0.0
    %3920 = vmatprep.subr.mxu0 0.0
    %3921 = vmatpush1.msra.mxu0 0.0
    %3922 = vmatprep.subr.mxu0 0.0
    %3923 = vmatpush1.msra.mxu0 0.0
    %3924 = vmatprep.subr.mxu0 0.0
    %3925 = vmatpush1.msra.mxu0 0.0
    %3926 = vmatprep.subr.mxu0 0.0
    %3927 = vmatpush1.msra.mxu0 0.0
    %3928 = vmatprep.subr.mxu0 0.0
    %3929 = vmatpush1.msra.mxu0 0.0
    %3930 = vmatprep.subr.mxu0 0.0
    %3931 = vmatpush1.msra.mxu0 0.0
    %3932 = vmatprep.subr.mxu0 0.0
    %3933 = vmatpush1.msra.mxu0 0.0
    %3934 = vmatprep.subr.mxu0 0.0
    %3935 = vmatpush1.msra.mxu0 0.0
    %3936 = vmatprep.subr.mxu0 0.0
    %3937 = vmatpush1.msra.mxu0 0.0
    %3938 = vmatprep.mubr.f32.mxu0 0.0
    %3939 = vmatmul.mubr.f32.gmra.mrb[0].mxu0 %v3869
    %v3940 = vpop.f32.mrb[0].mxu0
    %v3941 = vadd.f32 %v3860, %v3940
    %v3942 = vpop.f32.mrb[0].mxu0
    %3943 = vmatprep.mubr.f32.mxu0 0.0
    %3944 = vmatmul.mubr.f32.gmra.mrb[0].mxu0 %v3872
    %v3945 = vpop.f32.mrb[0].mxu0
    %v3946 = vadd.f32 %v3865, %v3945
    %v3947 = vpop.f32.mrb[0].mxu0
    %3948 = vdwg.mxu0
    %v3949 = vld [vmem:[#allocation24] sm:$0x1]
    %v3951 = vlaneseq
    %v3952 = vshrl.u32 %v3951, 7
    %v3953 = vsub.s32 0, %v3952
    %v3954 = vrot.slane %v3949, %v3953
    %v3956 = vadd.f32 %v3941, %v3954
    %v3957 = vadd.f32 %v3946, %v3954
    %3958 = vst [vmem:[%s20] sm:$0xff] %v3956
    %3959 = vst [vmem:[%s20 + $0x8] sm:$0xff] %v3957
    // Predicated region
    $region142: #{forward.1} parent=1 // pred_check
      _
    $region143: #{forward.1} parent=1 // pred_check_branch
      %3961 = sbr.rel (0) target = $region145
    $region144: #{forward.1} parent=1 // pred_region
      _
    $region145: #{forward.1} parent=1 // pred_fallthru
      _
    // Predicated region
    $region146: #{forward.1} parent=1 // pred_check
      _
    $region147: #{forward.1} parent=1 // pred_check_branch
      %3963 = sbr.rel (0) target = $region149
    $region148: #{forward.1} parent=1 // pred_region
      _
    $region149: #{forward.1} parent=1 // pred_fallthru
      _
    %3964 = vsyncpa [#allocation3], 1
    %3965 = vsyncpa [#allocation5], 1
    %3966 = vsyncpa [#allocation8], 1
    %3967 = vsyncpa [#allocation11], 1
    %3968 = vsyncpa [#allocation14], 1
    %3969 = vsyncpa [#allocation17], 1
    %3970 = vsyncpa [#allocation20], 1
    %3971 = vsyncpa [#allocation23], 1

</llo_original>
